<compile_context>
chip_gen: v7x
topology: tpu7x:2x2x1
jax: 0.10.0
libtpu: 0.0.40
codegen_flags: <defaults>
</compile_context>

<pallas_src>
import numpy as np
import jax
import jax.numpy as jnp
from jax import lax
from jax.experimental import pallas as pl
from jax.experimental.pallas import tpu as pltpu


def _round_up(x, m):
    return ((x + m - 1) // m) * m


def lstm_last_linear_kernel(x_ref, wih_ref, whh_hbm, b_ref, wl_ref, bl_ref,
                            out_ref, whh_vmem, whh_sem):
    """Single-layer LSTM over the full sequence + linear on the final hidden state.

    x_ref    : (T, B, D_in)  time-major input, f32, VMEM
    wih_ref  : (D_in, 4*Hp)  input->gates weights (transposed, gate-padded), f32, VMEM
    whh_hbm  : (Hp, 4*Hp)    hidden->gates weights (transposed, gate-padded), f32, HBM (pl.ANY)
    b_ref    : (1, 4*Hp)     combined bias b_ih + b_hh (gate-padded with zeros), f32, VMEM
    wl_ref   : (D_out, Hp)   linear weight (padded cols), f32, VMEM
    bl_ref   : (1, D_out)    linear bias, f32, VMEM
    out_ref  : (B, D_out)    output, VMEM
    whh_vmem : (Hp, 4*Hp)    VMEM landing buffer for Whh (manual DMA)
    whh_sem  : DMA semaphore for the Whh copy
    Gate order follows PyTorch: [i, f, g, o]; Hp is H padded to a multiple of 128.
    NOTE: correctness of the padding relies on the padded bias columns being
    exactly zero (see pack_params); then padded lanes of c/h stay exactly 0.
    """
    T, B, D_in = x_ref.shape
    Hp = whh_vmem.shape[0]
    G = 4 * Hp
    D_out = wl_ref.shape[0]

    # ---- Kick off the Whh HBM->VMEM transfer, overlap with the prologue ----
    whh_copy = pltpu.make_async_copy(whh_hbm, whh_vmem, whh_sem)
    whh_copy.start()

    # Prologue work that does not depend on Whh (hides part of the DMA).
    wih = wih_ref[...]          # (D_in, 4Hp)
    b = b_ref[...]              # (1, 4Hp)
    if D_in == 1:
        gx = None               # per-step VPU broadcast, computed inline below
    else:
        # Hoist the input projection off the serial chain (D_in > 1 only).
        x2 = x_ref[...].reshape(T * B, D_in)
        gx = (jnp.dot(x2, wih, preferred_element_type=jnp.float32)
              + b).reshape(T, B, G)

    whh_copy.wait()
    whh = whh_vmem[...]         # (Hp, 4Hp) f32

    # ---- Recurrence: fully unrolled (T static & small) ----------------------
    def sigmoid(z):
        # exp -> EUP, approx reciprocal -> EUP (vrcp): keeps the serial chain
        # off the VPU divide path.
        return pl.reciprocal(1.0 + jnp.exp(-z), approx=True)

    h = jnp.zeros((B, Hp), jnp.float32)
    c = jnp.zeros((B, Hp), jnp.float32)
    for t in range(T):
        if D_in == 1:
            # (B,1) * (1,G) broadcast multiply + bias: pure VPU, hides under MXU.
            gx_t = x_ref[t] * wih + b
        else:
            gx_t = gx[t]
        gates = gx_t + jnp.dot(h, whh, preferred_element_type=jnp.float32)
        # Lane-aligned gate slices (Hp is a multiple of 128).
        i_g = sigmoid(gates[:, 0 * Hp:1 * Hp])
        f_g = sigmoid(gates[:, 1 * Hp:2 * Hp])
        g_g = jnp.tanh(gates[:, 2 * Hp:3 * Hp])
        o_g = sigmoid(gates[:, 3 * Hp:4 * Hp])
        c = f_g * c + i_g * g_g
        h = o_g * jnp.tanh(c)

    # ---- Final linear on h_T -------------------------------------------------
    if D_out == 1:
        # (Hp,1) MXU matmul wastes a push/pop for B outputs: VPU mul + XLU reduce.
        out_ref[...] = (jnp.sum(h * wl_ref[...], axis=-1, keepdims=True)
                        + bl_ref[...])
    else:
        out_ref[...] = lax.dot_general(
            h, wl_ref[...], (((1,), (1,)), ((), ())),
            preferred_element_type=jnp.float32) + bl_ref[...]


def pack_params(params, lane=128):
    """One-time weight repacking (PyTorch layout -> kernel layout). Call once."""
    w_ih, w_hh, b_ih, b_hh, w_lin, b_lin = params
    H4, _ = w_ih.shape
    H = H4 // 4
    D_out = w_lin.shape[0]
    Hp = _round_up(H, lane)

    def pad_gate_cols(w):
        # w: (4H, K) in PyTorch gate order -> (K, 4Hp) transposed, each gate
        # block zero-padded H -> Hp along the lane (output) axis.
        parts = []
        for k in range(4):
            blk = w[k * H:(k + 1) * H, :].T.astype(jnp.float32)   # (K, H)
            parts.append(jnp.pad(blk, ((0, 0), (0, Hp - H))))
        return jnp.concatenate(parts, axis=1)                      # (K, 4Hp)

    wih_p = pad_gate_cols(w_ih)                                    # (D_in, 4Hp)
    whh_p = jnp.pad(pad_gate_cols(w_hh), ((0, Hp - H), (0, 0)))    # (Hp, 4Hp) f32
    # Padded bias columns MUST be zero for the padding-invariance argument.
    b_p = jnp.pad((b_ih + b_hh).astype(jnp.float32).reshape(4, H),
                  ((0, 0), (0, Hp - H))).reshape(1, 4 * Hp)        # (1, 4Hp)
    wl_p = jnp.pad(w_lin.astype(jnp.float32), ((0, 0), (0, Hp - H)))  # (D_out, Hp)
    bl_p = b_lin.astype(jnp.float32).reshape(1, D_out)             # (1, D_out)
    return (wih_p, whh_p, b_p, wl_p, bl_p)


@jax.jit
def net_forward(x, packed):
    """x: (B, T, D_in) batch_first, like the PyTorch module. packed: pack_params(...)"""
    wih_p, whh_p, b_p, wl_p, bl_p = packed
    B, T, D_in = x.shape
    Hp = whh_p.shape[0]
    D_out = wl_p.shape[0]

    x_tm = jnp.transpose(x, (1, 0, 2)).astype(jnp.float32)         # (T, B, D_in)

    vmem = pl.BlockSpec(memory_space=pltpu.MemorySpace.VMEM)
    hbm = pl.BlockSpec(memory_space=pl.ANY)                        # Whh: manual DMA

    cost = pl.CostEstimate(
        flops=(2 * T * B * Hp * 4 * Hp            # h @ Whh per step
               + 2 * T * B * D_in * 4 * Hp        # input projection
               + 12 * T * B * Hp                  # gate elementwise
               + 2 * B * Hp * D_out),             # final linear
        transcendentals=5 * T * B * Hp,           # 3 sigmoid + 2 tanh per step
        bytes_accessed=4 * (Hp * 4 * Hp + T * B * D_in + D_in * 4 * Hp
                            + 4 * Hp + D_out * Hp + D_out + B * D_out),
    )

    return pl.pallas_call(
        lstm_last_linear_kernel,
        out_shape=jax.ShapeDtypeStruct((B, D_out), jnp.float32),
        in_specs=[vmem, vmem, hbm, vmem, vmem, vmem],
        out_specs=vmem,
        scratch_shapes=[pltpu.VMEM((Hp, 4 * Hp), jnp.float32),
                        pltpu.SemaphoreType.DMA(())],
        cost_estimate=cost,
    )(x_tm, wih_p, whh_p, b_p, wl_p, bl_p)


def net_forward_ref(x, params):
    """Pure-JAX f32 reference matching PyTorch LSTM + Linear semantics."""
    w_ih, w_hh, b_ih, b_hh, w_lin, b_lin = params
    H = w_hh.shape[1]
    B, T, _ = x.shape
    h = jnp.zeros((B, H), jnp.float32)
    c = jnp.zeros((B, H), jnp.float32)
    for t in range(T):
        gates = x[:, t, :] @ w_ih.T + b_ih + h @ w_hh.T + b_hh
        i_g, f_g, g_g, o_g = jnp.split(gates, 4, axis=1)
        i_g = jax.nn.sigmoid(i_g)
        f_g = jax.nn.sigmoid(f_g)
        g_g = jnp.tanh(g_g)
        o_g = jax.nn.sigmoid(o_g)
        c = f_g * c + i_g * g_g
        h = o_g * jnp.tanh(c)
    return h @ w_lin.T + b_lin


if __name__ == "__main__":
    # Shapes consistent with the module: D_in = D_out = 1, H = 200 (exercises
    # the H -> 256 padding path).
    B, T, D_IN, HID, D_OUT = 8, 8, 1, 200, 1

    key = jax.random.PRNGKey(0)
    ks = jax.random.split(key, 7)
    bound = 1.0 / np.sqrt(HID)  # PyTorch default uniform init bound

    w_ih = jax.random.uniform(ks[0], (4 * HID, D_IN), jnp.float32, -bound, bound)
    w_hh = jax.random.uniform(ks[1], (4 * HID, HID), jnp.float32, -bound, bound)
    b_ih = jax.random.uniform(ks[2], (4 * HID,), jnp.float32, -bound, bound)
    b_hh = jax.random.uniform(ks[3], (4 * HID,), jnp.float32, -bound, bound)
    w_lin = jax.random.uniform(ks[4], (D_OUT, HID), jnp.float32, -bound, bound)
    b_lin = jax.random.uniform(ks[5], (D_OUT,), jnp.float32, -bound, bound)
    params = (w_ih, w_hh, b_ih, b_hh, w_lin, b_lin)

    x = jax.random.normal(ks[6], (B, T, D_IN), jnp.float32)

    # Pack weights ONCE (hoisted out of the per-call path).
    packed = jax.block_until_ready(pack_params(params))

    out = jax.block_until_ready(net_forward(x, packed))
    ref = jax.block_until_ready(net_forward_ref(x, params))

    assert out.shape == (B, D_OUT), out.shape
    # Whh is f32 now; the only approximation left is the EUP approx reciprocal
    # in the gate sigmoids, so the tolerance is tightened vs. the previous 2e-2.
    if not np.allclose(np.asarray(out), np.asarray(ref), rtol=1e-2, atol=1e-2):
        raise AssertionError("Pallas LSTM output does not match JAX reference")
    print("KERNEL_OK")
</pallas_src>

<mosaic_0001>
module attributes {stable_mosaic.version = 11 : i64} {
  func.func @lstm_last_linear_kernel(%arg0: memref<8x8x1xf32, #tpu.memory_space<vmem>>, %arg1: memref<1x1024xf32, #tpu.memory_space<vmem>>, %arg2: memref<256x1024xf32, #tpu.memory_space<any>>, %arg3: memref<1x1024xf32, #tpu.memory_space<vmem>>, %arg4: memref<1x256xf32, #tpu.memory_space<vmem>>, %arg5: memref<1x1xf32, #tpu.memory_space<vmem>>, %arg6: memref<8x1xf32, #tpu.memory_space<vmem>>, %arg7: memref<256x1024xf32, #tpu.memory_space<vmem>>, %arg8: memref<!tpu.dma_semaphore, #tpu.memory_space<semaphore_mem>>) attributes {dimension_semantics = [], scalar_prefetch = 0 : i64, scratch_operands = 2 : i64, tpu.core_type = #tpu.core_type<tc>} {
    tpu.enqueue_dma source(%arg2 : memref<256x1024xf32, #tpu.memory_space<any>>) target(%arg7 : memref<256x1024xf32, #tpu.memory_space<vmem>>) target_semaphore(%arg8 : memref<!tpu.dma_semaphore, #tpu.memory_space<semaphore_mem>>)
    %c0 = arith.constant 0 : index
    %c0_0 = arith.constant 0 : index
    %0 = vector.load %arg1[%c0, %c0_0] : memref<1x1024xf32, #tpu.memory_space<vmem>>, vector<1x1024xf32>
    %c0_1 = arith.constant 0 : index
    %c0_2 = arith.constant 0 : index
    %1 = vector.load %arg3[%c0_1, %c0_2] : memref<1x1024xf32, #tpu.memory_space<vmem>>, vector<1x1024xf32>
    tpu.wait_dma2 semaphore(%arg8 : memref<!tpu.dma_semaphore, #tpu.memory_space<semaphore_mem>>) src(%arg2 : memref<256x1024xf32, #tpu.memory_space<any>>) dst(%arg7 : memref<256x1024xf32, #tpu.memory_space<vmem>>)
    %c0_3 = arith.constant 0 : index
    %c0_4 = arith.constant 0 : index
    %2 = vector.load %arg7[%c0_3, %c0_4] : memref<256x1024xf32, #tpu.memory_space<vmem>>, vector<256x1024xf32>
    %cst = arith.constant 0.000000e+00 : f32
    %3 = vector.broadcast %cst : f32 to vector<8x256xf32>
    %cst_5 = arith.constant 0.000000e+00 : f32
    %4 = vector.broadcast %cst_5 : f32 to vector<8x256xf32>
    %c0_6 = arith.constant 0 : index
    %c0_7 = arith.constant 0 : index
    %c0_8 = arith.constant 0 : index
    %5 = vector.load %arg0[%c0_6, %c0_7, %c0_8] : memref<8x8x1xf32, #tpu.memory_space<vmem>>, vector<1x8x1xf32>
    %6 = vector.shape_cast %5 : vector<1x8x1xf32> to vector<8x1xf32>
    %7 = vector.broadcast %6 : vector<8x1xf32> to vector<8x1024xf32>
    %8 = vector.broadcast %0 : vector<1x1024xf32> to vector<8x1024xf32>
    %9 = arith.mulf %7, %8 : vector<8x1024xf32>
    %10 = vector.broadcast %1 : vector<1x1024xf32> to vector<8x1024xf32>
    %11 = arith.addf %9, %10 : vector<8x1024xf32>
    %cst_9 = arith.constant dense<0.000000e+00> : vector<8x1024xf32>
    %12 = tpu.matmul %3, %2, %cst_9 {dimension_numbers = #tpu.dot_dimension_numbers<[1], [0], [0], [1], [0, 0, 1, 1], [], []>} : vector<8x256xf32>, vector<256x1024xf32>, vector<8x1024xf32> -> vector<8x1024xf32>
    %13 = arith.addf %11, %12 : vector<8x1024xf32>
    %14 = vector.extract_strided_slice %13 {offsets = [0, 0], sizes = [8, 256], strides = [1, 1]} : vector<8x1024xf32> to vector<8x256xf32>
    %cst_10 = arith.constant 0.000000e+00 : f32
    %15 = vector.broadcast %cst_10 : f32 to vector<8x256xf32>
    %16 = arith.subf %15, %14 : vector<8x256xf32>
    %17 = math.exp %16 : vector<8x256xf32>
    %cst_11 = arith.constant 1.000000e+00 : f32
    %18 = vector.broadcast %cst_11 : f32 to vector<8x256xf32>
    %19 = arith.addf %18, %17 : vector<8x256xf32>
    %20 = tpu.reciprocal %19 {approx = true} : vector<8x256xf32> -> vector<8x256xf32>
    %21 = vector.extract_strided_slice %13 {offsets = [0, 256], sizes = [8, 256], strides = [1, 1]} : vector<8x1024xf32> to vector<8x256xf32>
    %cst_12 = arith.constant 0.000000e+00 : f32
    %22 = vector.broadcast %cst_12 : f32 to vector<8x256xf32>
    %23 = arith.subf %22, %21 : vector<8x256xf32>
    %24 = math.exp %23 : vector<8x256xf32>
    %cst_13 = arith.constant 1.000000e+00 : f32
    %25 = vector.broadcast %cst_13 : f32 to vector<8x256xf32>
    %26 = arith.addf %25, %24 : vector<8x256xf32>
    %27 = tpu.reciprocal %26 {approx = true} : vector<8x256xf32> -> vector<8x256xf32>
    %28 = vector.extract_strided_slice %13 {offsets = [0, 512], sizes = [8, 256], strides = [1, 1]} : vector<8x1024xf32> to vector<8x256xf32>
    %29 = math.tanh %28 : vector<8x256xf32>
    %30 = vector.extract_strided_slice %13 {offsets = [0, 768], sizes = [8, 256], strides = [1, 1]} : vector<8x1024xf32> to vector<8x256xf32>
    %cst_14 = arith.constant 0.000000e+00 : f32
    %31 = vector.broadcast %cst_14 : f32 to vector<8x256xf32>
    %32 = arith.subf %31, %30 : vector<8x256xf32>
    %33 = math.exp %32 : vector<8x256xf32>
    %cst_15 = arith.constant 1.000000e+00 : f32
    %34 = vector.broadcast %cst_15 : f32 to vector<8x256xf32>
    %35 = arith.addf %34, %33 : vector<8x256xf32>
    %36 = tpu.reciprocal %35 {approx = true} : vector<8x256xf32> -> vector<8x256xf32>
    %37 = arith.mulf %27, %4 : vector<8x256xf32>
    %38 = arith.mulf %20, %29 : vector<8x256xf32>
    %39 = arith.addf %37, %38 : vector<8x256xf32>
    %40 = math.tanh %39 : vector<8x256xf32>
    %41 = arith.mulf %36, %40 : vector<8x256xf32>
    %c1 = arith.constant 1 : index
    %c0_16 = arith.constant 0 : index
    %c0_17 = arith.constant 0 : index
    %42 = vector.load %arg0[%c1, %c0_16, %c0_17] : memref<8x8x1xf32, #tpu.memory_space<vmem>>, vector<1x8x1xf32>
    %43 = vector.shape_cast %42 : vector<1x8x1xf32> to vector<8x1xf32>
    %44 = vector.broadcast %43 : vector<8x1xf32> to vector<8x1024xf32>
    %45 = vector.broadcast %0 : vector<1x1024xf32> to vector<8x1024xf32>
    %46 = arith.mulf %44, %45 : vector<8x1024xf32>
    %47 = vector.broadcast %1 : vector<1x1024xf32> to vector<8x1024xf32>
    %48 = arith.addf %46, %47 : vector<8x1024xf32>
    %cst_18 = arith.constant dense<0.000000e+00> : vector<8x1024xf32>
    %49 = tpu.matmul %41, %2, %cst_18 {dimension_numbers = #tpu.dot_dimension_numbers<[1], [0], [0], [1], [0, 0, 1, 1], [], []>} : vector<8x256xf32>, vector<256x1024xf32>, vector<8x1024xf32> -> vector<8x1024xf32>
    %50 = arith.addf %48, %49 : vector<8x1024xf32>
    %51 = vector.extract_strided_slice %50 {offsets = [0, 0], sizes = [8, 256], strides = [1, 1]} : vector<8x1024xf32> to vector<8x256xf32>
    %cst_19 = arith.constant 0.000000e+00 : f32
    %52 = vector.broadcast %cst_19 : f32 to vector<8x256xf32>
    %53 = arith.subf %52, %51 : vector<8x256xf32>
    %54 = math.exp %53 : vector<8x256xf32>
    %cst_20 = arith.constant 1.000000e+00 : f32
    %55 = vector.broadcast %cst_20 : f32 to vector<8x256xf32>
    %56 = arith.addf %55, %54 : vector<8x256xf32>
    %57 = tpu.reciprocal %56 {approx = true} : vector<8x256xf32> -> vector<8x256xf32>
    %58 = vector.extract_strided_slice %50 {offsets = [0, 256], sizes = [8, 256], strides = [1, 1]} : vector<8x1024xf32> to vector<8x256xf32>
    %cst_21 = arith.constant 0.000000e+00 : f32
    %59 = vector.broadcast %cst_21 : f32 to vector<8x256xf32>
    %60 = arith.subf %59, %58 : vector<8x256xf32>
    %61 = math.exp %60 : vector<8x256xf32>
    %cst_22 = arith.constant 1.000000e+00 : f32
    %62 = vector.broadcast %cst_22 : f32 to vector<8x256xf32>
    %63 = arith.addf %62, %61 : vector<8x256xf32>
    %64 = tpu.reciprocal %63 {approx = true} : vector<8x256xf32> -> vector<8x256xf32>
    %65 = vector.extract_strided_slice %50 {offsets = [0, 512], sizes = [8, 256], strides = [1, 1]} : vector<8x1024xf32> to vector<8x256xf32>
    %66 = math.tanh %65 : vector<8x256xf32>
    %67 = vector.extract_strided_slice %50 {offsets = [0, 768], sizes = [8, 256], strides = [1, 1]} : vector<8x1024xf32> to vector<8x256xf32>
    %cst_23 = arith.constant 0.000000e+00 : f32
    %68 = vector.broadcast %cst_23 : f32 to vector<8x256xf32>
    %69 = arith.subf %68, %67 : vector<8x256xf32>
    %70 = math.exp %69 : vector<8x256xf32>
    %cst_24 = arith.constant 1.000000e+00 : f32
    %71 = vector.broadcast %cst_24 : f32 to vector<8x256xf32>
    %72 = arith.addf %71, %70 : vector<8x256xf32>
    %73 = tpu.reciprocal %72 {approx = true} : vector<8x256xf32> -> vector<8x256xf32>
    %74 = arith.mulf %64, %39 : vector<8x256xf32>
    %75 = arith.mulf %57, %66 : vector<8x256xf32>
    %76 = arith.addf %74, %75 : vector<8x256xf32>
    %77 = math.tanh %76 : vector<8x256xf32>
    %78 = arith.mulf %73, %77 : vector<8x256xf32>
    %c2 = arith.constant 2 : index
    %c0_25 = arith.constant 0 : index
    %c0_26 = arith.constant 0 : index
    %79 = vector.load %arg0[%c2, %c0_25, %c0_26] : memref<8x8x1xf32, #tpu.memory_space<vmem>>, vector<1x8x1xf32>
    %80 = vector.shape_cast %79 : vector<1x8x1xf32> to vector<8x1xf32>
    %81 = vector.broadcast %80 : vector<8x1xf32> to vector<8x1024xf32>
    %82 = vector.broadcast %0 : vector<1x1024xf32> to vector<8x1024xf32>
    %83 = arith.mulf %81, %82 : vector<8x1024xf32>
    %84 = vector.broadcast %1 : vector<1x1024xf32> to vector<8x1024xf32>
    %85 = arith.addf %83, %84 : vector<8x1024xf32>
    %cst_27 = arith.constant dense<0.000000e+00> : vector<8x1024xf32>
    %86 = tpu.matmul %78, %2, %cst_27 {dimension_numbers = #tpu.dot_dimension_numbers<[1], [0], [0], [1], [0, 0, 1, 1], [], []>} : vector<8x256xf32>, vector<256x1024xf32>, vector<8x1024xf32> -> vector<8x1024xf32>
    %87 = arith.addf %85, %86 : vector<8x1024xf32>
    %88 = vector.extract_strided_slice %87 {offsets = [0, 0], sizes = [8, 256], strides = [1, 1]} : vector<8x1024xf32> to vector<8x256xf32>
    %cst_28 = arith.constant 0.000000e+00 : f32
    %89 = vector.broadcast %cst_28 : f32 to vector<8x256xf32>
    %90 = arith.subf %89, %88 : vector<8x256xf32>
    %91 = math.exp %90 : vector<8x256xf32>
    %cst_29 = arith.constant 1.000000e+00 : f32
    %92 = vector.broadcast %cst_29 : f32 to vector<8x256xf32>
    %93 = arith.addf %92, %91 : vector<8x256xf32>
    %94 = tpu.reciprocal %93 {approx = true} : vector<8x256xf32> -> vector<8x256xf32>
    %95 = vector.extract_strided_slice %87 {offsets = [0, 256], sizes = [8, 256], strides = [1, 1]} : vector<8x1024xf32> to vector<8x256xf32>
    %cst_30 = arith.constant 0.000000e+00 : f32
    %96 = vector.broadcast %cst_30 : f32 to vector<8x256xf32>
    %97 = arith.subf %96, %95 : vector<8x256xf32>
    %98 = math.exp %97 : vector<8x256xf32>
    %cst_31 = arith.constant 1.000000e+00 : f32
    %99 = vector.broadcast %cst_31 : f32 to vector<8x256xf32>
    %100 = arith.addf %99, %98 : vector<8x256xf32>
    %101 = tpu.reciprocal %100 {approx = true} : vector<8x256xf32> -> vector<8x256xf32>
    %102 = vector.extract_strided_slice %87 {offsets = [0, 512], sizes = [8, 256], strides = [1, 1]} : vector<8x1024xf32> to vector<8x256xf32>
    %103 = math.tanh %102 : vector<8x256xf32>
    %104 = vector.extract_strided_slice %87 {offsets = [0, 768], sizes = [8, 256], strides = [1, 1]} : vector<8x1024xf32> to vector<8x256xf32>
    %cst_32 = arith.constant 0.000000e+00 : f32
    %105 = vector.broadcast %cst_32 : f32 to vector<8x256xf32>
    %106 = arith.subf %105, %104 : vector<8x256xf32>
    %107 = math.exp %106 : vector<8x256xf32>
    %cst_33 = arith.constant 1.000000e+00 : f32
    %108 = vector.broadcast %cst_33 : f32 to vector<8x256xf32>
    %109 = arith.addf %108, %107 : vector<8x256xf32>
    %110 = tpu.reciprocal %109 {approx = true} : vector<8x256xf32> -> vector<8x256xf32>
    %111 = arith.mulf %101, %76 : vector<8x256xf32>
    %112 = arith.mulf %94, %103 : vector<8x256xf32>
    %113 = arith.addf %111, %112 : vector<8x256xf32>
    %114 = math.tanh %113 : vector<8x256xf32>
    %115 = arith.mulf %110, %114 : vector<8x256xf32>
    %c3 = arith.constant 3 : index
    %c0_34 = arith.constant 0 : index
    %c0_35 = arith.constant 0 : index
    %116 = vector.load %arg0[%c3, %c0_34, %c0_35] : memref<8x8x1xf32, #tpu.memory_space<vmem>>, vector<1x8x1xf32>
    %117 = vector.shape_cast %116 : vector<1x8x1xf32> to vector<8x1xf32>
    %118 = vector.broadcast %117 : vector<8x1xf32> to vector<8x1024xf32>
    %119 = vector.broadcast %0 : vector<1x1024xf32> to vector<8x1024xf32>
    %120 = arith.mulf %118, %119 : vector<8x1024xf32>
    %121 = vector.broadcast %1 : vector<1x1024xf32> to vector<8x1024xf32>
    %122 = arith.addf %120, %121 : vector<8x1024xf32>
    %cst_36 = arith.constant dense<0.000000e+00> : vector<8x1024xf32>
    %123 = tpu.matmul %115, %2, %cst_36 {dimension_numbers = #tpu.dot_dimension_numbers<[1], [0], [0], [1], [0, 0, 1, 1], [], []>} : vector<8x256xf32>, vector<256x1024xf32>, vector<8x1024xf32> -> vector<8x1024xf32>
    %124 = arith.addf %122, %123 : vector<8x1024xf32>
    %125 = vector.extract_strided_slice %124 {offsets = [0, 0], sizes = [8, 256], strides = [1, 1]} : vector<8x1024xf32> to vector<8x256xf32>
    %cst_37 = arith.constant 0.000000e+00 : f32
    %126 = vector.broadcast %cst_37 : f32 to vector<8x256xf32>
    %127 = arith.subf %126, %125 : vector<8x256xf32>
    %128 = math.exp %127 : vector<8x256xf32>
    %cst_38 = arith.constant 1.000000e+00 : f32
    %129 = vector.broadcast %cst_38 : f32 to vector<8x256xf32>
    %130 = arith.addf %129, %128 : vector<8x256xf32>
    %131 = tpu.reciprocal %130 {approx = true} : vector<8x256xf32> -> vector<8x256xf32>
    %132 = vector.extract_strided_slice %124 {offsets = [0, 256], sizes = [8, 256], strides = [1, 1]} : vector<8x1024xf32> to vector<8x256xf32>
    %cst_39 = arith.constant 0.000000e+00 : f32
    %133 = vector.broadcast %cst_39 : f32 to vector<8x256xf32>
    %134 = arith.subf %133, %132 : vector<8x256xf32>
    %135 = math.exp %134 : vector<8x256xf32>
    %cst_40 = arith.constant 1.000000e+00 : f32
    %136 = vector.broadcast %cst_40 : f32 to vector<8x256xf32>
    %137 = arith.addf %136, %135 : vector<8x256xf32>
    %138 = tpu.reciprocal %137 {approx = true} : vector<8x256xf32> -> vector<8x256xf32>
    %139 = vector.extract_strided_slice %124 {offsets = [0, 512], sizes = [8, 256], strides = [1, 1]} : vector<8x1024xf32> to vector<8x256xf32>
    %140 = math.tanh %139 : vector<8x256xf32>
    %141 = vector.extract_strided_slice %124 {offsets = [0, 768], sizes = [8, 256], strides = [1, 1]} : vector<8x1024xf32> to vector<8x256xf32>
    %cst_41 = arith.constant 0.000000e+00 : f32
    %142 = vector.broadcast %cst_41 : f32 to vector<8x256xf32>
    %143 = arith.subf %142, %141 : vector<8x256xf32>
    %144 = math.exp %143 : vector<8x256xf32>
    %cst_42 = arith.constant 1.000000e+00 : f32
    %145 = vector.broadcast %cst_42 : f32 to vector<8x256xf32>
    %146 = arith.addf %145, %144 : vector<8x256xf32>
    %147 = tpu.reciprocal %146 {approx = true} : vector<8x256xf32> -> vector<8x256xf32>
    %148 = arith.mulf %138, %113 : vector<8x256xf32>
    %149 = arith.mulf %131, %140 : vector<8x256xf32>
    %150 = arith.addf %148, %149 : vector<8x256xf32>
    %151 = math.tanh %150 : vector<8x256xf32>
    %152 = arith.mulf %147, %151 : vector<8x256xf32>
    %c4 = arith.constant 4 : index
    %c0_43 = arith.constant 0 : index
    %c0_44 = arith.constant 0 : index
    %153 = vector.load %arg0[%c4, %c0_43, %c0_44] : memref<8x8x1xf32, #tpu.memory_space<vmem>>, vector<1x8x1xf32>
    %154 = vector.shape_cast %153 : vector<1x8x1xf32> to vector<8x1xf32>
    %155 = vector.broadcast %154 : vector<8x1xf32> to vector<8x1024xf32>
    %156 = vector.broadcast %0 : vector<1x1024xf32> to vector<8x1024xf32>
    %157 = arith.mulf %155, %156 : vector<8x1024xf32>
    %158 = vector.broadcast %1 : vector<1x1024xf32> to vector<8x1024xf32>
    %159 = arith.addf %157, %158 : vector<8x1024xf32>
    %cst_45 = arith.constant dense<0.000000e+00> : vector<8x1024xf32>
    %160 = tpu.matmul %152, %2, %cst_45 {dimension_numbers = #tpu.dot_dimension_numbers<[1], [0], [0], [1], [0, 0, 1, 1], [], []>} : vector<8x256xf32>, vector<256x1024xf32>, vector<8x1024xf32> -> vector<8x1024xf32>
    %161 = arith.addf %159, %160 : vector<8x1024xf32>
    %162 = vector.extract_strided_slice %161 {offsets = [0, 0], sizes = [8, 256], strides = [1, 1]} : vector<8x1024xf32> to vector<8x256xf32>
    %cst_46 = arith.constant 0.000000e+00 : f32
    %163 = vector.broadcast %cst_46 : f32 to vector<8x256xf32>
    %164 = arith.subf %163, %162 : vector<8x256xf32>
    %165 = math.exp %164 : vector<8x256xf32>
    %cst_47 = arith.constant 1.000000e+00 : f32
    %166 = vector.broadcast %cst_47 : f32 to vector<8x256xf32>
    %167 = arith.addf %166, %165 : vector<8x256xf32>
    %168 = tpu.reciprocal %167 {approx = true} : vector<8x256xf32> -> vector<8x256xf32>
    %169 = vector.extract_strided_slice %161 {offsets = [0, 256], sizes = [8, 256], strides = [1, 1]} : vector<8x1024xf32> to vector<8x256xf32>
    %cst_48 = arith.constant 0.000000e+00 : f32
    %170 = vector.broadcast %cst_48 : f32 to vector<8x256xf32>
    %171 = arith.subf %170, %169 : vector<8x256xf32>
    %172 = math.exp %171 : vector<8x256xf32>
    %cst_49 = arith.constant 1.000000e+00 : f32
    %173 = vector.broadcast %cst_49 : f32 to vector<8x256xf32>
    %174 = arith.addf %173, %172 : vector<8x256xf32>
    %175 = tpu.reciprocal %174 {approx = true} : vector<8x256xf32> -> vector<8x256xf32>
    %176 = vector.extract_strided_slice %161 {offsets = [0, 512], sizes = [8, 256], strides = [1, 1]} : vector<8x1024xf32> to vector<8x256xf32>
    %177 = math.tanh %176 : vector<8x256xf32>
    %178 = vector.extract_strided_slice %161 {offsets = [0, 768], sizes = [8, 256], strides = [1, 1]} : vector<8x1024xf32> to vector<8x256xf32>
    %cst_50 = arith.constant 0.000000e+00 : f32
    %179 = vector.broadcast %cst_50 : f32 to vector<8x256xf32>
    %180 = arith.subf %179, %178 : vector<8x256xf32>
    %181 = math.exp %180 : vector<8x256xf32>
    %cst_51 = arith.constant 1.000000e+00 : f32
    %182 = vector.broadcast %cst_51 : f32 to vector<8x256xf32>
    %183 = arith.addf %182, %181 : vector<8x256xf32>
    %184 = tpu.reciprocal %183 {approx = true} : vector<8x256xf32> -> vector<8x256xf32>
    %185 = arith.mulf %175, %150 : vector<8x256xf32>
    %186 = arith.mulf %168, %177 : vector<8x256xf32>
    %187 = arith.addf %185, %186 : vector<8x256xf32>
    %188 = math.tanh %187 : vector<8x256xf32>
    %189 = arith.mulf %184, %188 : vector<8x256xf32>
    %c5 = arith.constant 5 : index
    %c0_52 = arith.constant 0 : index
    %c0_53 = arith.constant 0 : index
    %190 = vector.load %arg0[%c5, %c0_52, %c0_53] : memref<8x8x1xf32, #tpu.memory_space<vmem>>, vector<1x8x1xf32>
    %191 = vector.shape_cast %190 : vector<1x8x1xf32> to vector<8x1xf32>
    %192 = vector.broadcast %191 : vector<8x1xf32> to vector<8x1024xf32>
    %193 = vector.broadcast %0 : vector<1x1024xf32> to vector<8x1024xf32>
    %194 = arith.mulf %192, %193 : vector<8x1024xf32>
    %195 = vector.broadcast %1 : vector<1x1024xf32> to vector<8x1024xf32>
    %196 = arith.addf %194, %195 : vector<8x1024xf32>
    %cst_54 = arith.constant dense<0.000000e+00> : vector<8x1024xf32>
    %197 = tpu.matmul %189, %2, %cst_54 {dimension_numbers = #tpu.dot_dimension_numbers<[1], [0], [0], [1], [0, 0, 1, 1], [], []>} : vector<8x256xf32>, vector<256x1024xf32>, vector<8x1024xf32> -> vector<8x1024xf32>
    %198 = arith.addf %196, %197 : vector<8x1024xf32>
    %199 = vector.extract_strided_slice %198 {offsets = [0, 0], sizes = [8, 256], strides = [1, 1]} : vector<8x1024xf32> to vector<8x256xf32>
    %cst_55 = arith.constant 0.000000e+00 : f32
    %200 = vector.broadcast %cst_55 : f32 to vector<8x256xf32>
    %201 = arith.subf %200, %199 : vector<8x256xf32>
    %202 = math.exp %201 : vector<8x256xf32>
    %cst_56 = arith.constant 1.000000e+00 : f32
    %203 = vector.broadcast %cst_56 : f32 to vector<8x256xf32>
    %204 = arith.addf %203, %202 : vector<8x256xf32>
    %205 = tpu.reciprocal %204 {approx = true} : vector<8x256xf32> -> vector<8x256xf32>
    %206 = vector.extract_strided_slice %198 {offsets = [0, 256], sizes = [8, 256], strides = [1, 1]} : vector<8x1024xf32> to vector<8x256xf32>
    %cst_57 = arith.constant 0.000000e+00 : f32
    %207 = vector.broadcast %cst_57 : f32 to vector<8x256xf32>
    %208 = arith.subf %207, %206 : vector<8x256xf32>
    %209 = math.exp %208 : vector<8x256xf32>
    %cst_58 = arith.constant 1.000000e+00 : f32
    %210 = vector.broadcast %cst_58 : f32 to vector<8x256xf32>
    %211 = arith.addf %210, %209 : vector<8x256xf32>
    %212 = tpu.reciprocal %211 {approx = true} : vector<8x256xf32> -> vector<8x256xf32>
    %213 = vector.extract_strided_slice %198 {offsets = [0, 512], sizes = [8, 256], strides = [1, 1]} : vector<8x1024xf32> to vector<8x256xf32>
    %214 = math.tanh %213 : vector<8x256xf32>
    %215 = vector.extract_strided_slice %198 {offsets = [0, 768], sizes = [8, 256], strides = [1, 1]} : vector<8x1024xf32> to vector<8x256xf32>
    %cst_59 = arith.constant 0.000000e+00 : f32
    %216 = vector.broadcast %cst_59 : f32 to vector<8x256xf32>
    %217 = arith.subf %216, %215 : vector<8x256xf32>
    %218 = math.exp %217 : vector<8x256xf32>
    %cst_60 = arith.constant 1.000000e+00 : f32
    %219 = vector.broadcast %cst_60 : f32 to vector<8x256xf32>
    %220 = arith.addf %219, %218 : vector<8x256xf32>
    %221 = tpu.reciprocal %220 {approx = true} : vector<8x256xf32> -> vector<8x256xf32>
    %222 = arith.mulf %212, %187 : vector<8x256xf32>
    %223 = arith.mulf %205, %214 : vector<8x256xf32>
    %224 = arith.addf %222, %223 : vector<8x256xf32>
    %225 = math.tanh %224 : vector<8x256xf32>
    %226 = arith.mulf %221, %225 : vector<8x256xf32>
    %c6 = arith.constant 6 : index
    %c0_61 = arith.constant 0 : index
    %c0_62 = arith.constant 0 : index
    %227 = vector.load %arg0[%c6, %c0_61, %c0_62] : memref<8x8x1xf32, #tpu.memory_space<vmem>>, vector<1x8x1xf32>
    %228 = vector.shape_cast %227 : vector<1x8x1xf32> to vector<8x1xf32>
    %229 = vector.broadcast %228 : vector<8x1xf32> to vector<8x1024xf32>
    %230 = vector.broadcast %0 : vector<1x1024xf32> to vector<8x1024xf32>
    %231 = arith.mulf %229, %230 : vector<8x1024xf32>
    %232 = vector.broadcast %1 : vector<1x1024xf32> to vector<8x1024xf32>
    %233 = arith.addf %231, %232 : vector<8x1024xf32>
    %cst_63 = arith.constant dense<0.000000e+00> : vector<8x1024xf32>
    %234 = tpu.matmul %226, %2, %cst_63 {dimension_numbers = #tpu.dot_dimension_numbers<[1], [0], [0], [1], [0, 0, 1, 1], [], []>} : vector<8x256xf32>, vector<256x1024xf32>, vector<8x1024xf32> -> vector<8x1024xf32>
    %235 = arith.addf %233, %234 : vector<8x1024xf32>
    %236 = vector.extract_strided_slice %235 {offsets = [0, 0], sizes = [8, 256], strides = [1, 1]} : vector<8x1024xf32> to vector<8x256xf32>
    %cst_64 = arith.constant 0.000000e+00 : f32
    %237 = vector.broadcast %cst_64 : f32 to vector<8x256xf32>
    %238 = arith.subf %237, %236 : vector<8x256xf32>
    %239 = math.exp %238 : vector<8x256xf32>
    %cst_65 = arith.constant 1.000000e+00 : f32
    %240 = vector.broadcast %cst_65 : f32 to vector<8x256xf32>
    %241 = arith.addf %240, %239 : vector<8x256xf32>
    %242 = tpu.reciprocal %241 {approx = true} : vector<8x256xf32> -> vector<8x256xf32>
    %243 = vector.extract_strided_slice %235 {offsets = [0, 256], sizes = [8, 256], strides = [1, 1]} : vector<8x1024xf32> to vector<8x256xf32>
    %cst_66 = arith.constant 0.000000e+00 : f32
    %244 = vector.broadcast %cst_66 : f32 to vector<8x256xf32>
    %245 = arith.subf %244, %243 : vector<8x256xf32>
    %246 = math.exp %245 : vector<8x256xf32>
    %cst_67 = arith.constant 1.000000e+00 : f32
    %247 = vector.broadcast %cst_67 : f32 to vector<8x256xf32>
    %248 = arith.addf %247, %246 : vector<8x256xf32>
    %249 = tpu.reciprocal %248 {approx = true} : vector<8x256xf32> -> vector<8x256xf32>
    %250 = vector.extract_strided_slice %235 {offsets = [0, 512], sizes = [8, 256], strides = [1, 1]} : vector<8x1024xf32> to vector<8x256xf32>
    %251 = math.tanh %250 : vector<8x256xf32>
    %252 = vector.extract_strided_slice %235 {offsets = [0, 768], sizes = [8, 256], strides = [1, 1]} : vector<8x1024xf32> to vector<8x256xf32>
    %cst_68 = arith.constant 0.000000e+00 : f32
    %253 = vector.broadcast %cst_68 : f32 to vector<8x256xf32>
    %254 = arith.subf %253, %252 : vector<8x256xf32>
    %255 = math.exp %254 : vector<8x256xf32>
    %cst_69 = arith.constant 1.000000e+00 : f32
    %256 = vector.broadcast %cst_69 : f32 to vector<8x256xf32>
    %257 = arith.addf %256, %255 : vector<8x256xf32>
    %258 = tpu.reciprocal %257 {approx = true} : vector<8x256xf32> -> vector<8x256xf32>
    %259 = arith.mulf %249, %224 : vector<8x256xf32>
    %260 = arith.mulf %242, %251 : vector<8x256xf32>
    %261 = arith.addf %259, %260 : vector<8x256xf32>
    %262 = math.tanh %261 : vector<8x256xf32>
    %263 = arith.mulf %258, %262 : vector<8x256xf32>
    %c7 = arith.constant 7 : index
    %c0_70 = arith.constant 0 : index
    %c0_71 = arith.constant 0 : index
    %264 = vector.load %arg0[%c7, %c0_70, %c0_71] : memref<8x8x1xf32, #tpu.memory_space<vmem>>, vector<1x8x1xf32>
    %265 = vector.shape_cast %264 : vector<1x8x1xf32> to vector<8x1xf32>
    %266 = vector.broadcast %265 : vector<8x1xf32> to vector<8x1024xf32>
    %267 = vector.broadcast %0 : vector<1x1024xf32> to vector<8x1024xf32>
    %268 = arith.mulf %266, %267 : vector<8x1024xf32>
    %269 = vector.broadcast %1 : vector<1x1024xf32> to vector<8x1024xf32>
    %270 = arith.addf %268, %269 : vector<8x1024xf32>
    %cst_72 = arith.constant dense<0.000000e+00> : vector<8x1024xf32>
    %271 = tpu.matmul %263, %2, %cst_72 {dimension_numbers = #tpu.dot_dimension_numbers<[1], [0], [0], [1], [0, 0, 1, 1], [], []>} : vector<8x256xf32>, vector<256x1024xf32>, vector<8x1024xf32> -> vector<8x1024xf32>
    %272 = arith.addf %270, %271 : vector<8x1024xf32>
    %273 = vector.extract_strided_slice %272 {offsets = [0, 0], sizes = [8, 256], strides = [1, 1]} : vector<8x1024xf32> to vector<8x256xf32>
    %cst_73 = arith.constant 0.000000e+00 : f32
    %274 = vector.broadcast %cst_73 : f32 to vector<8x256xf32>
    %275 = arith.subf %274, %273 : vector<8x256xf32>
    %276 = math.exp %275 : vector<8x256xf32>
    %cst_74 = arith.constant 1.000000e+00 : f32
    %277 = vector.broadcast %cst_74 : f32 to vector<8x256xf32>
    %278 = arith.addf %277, %276 : vector<8x256xf32>
    %279 = tpu.reciprocal %278 {approx = true} : vector<8x256xf32> -> vector<8x256xf32>
    %280 = vector.extract_strided_slice %272 {offsets = [0, 256], sizes = [8, 256], strides = [1, 1]} : vector<8x1024xf32> to vector<8x256xf32>
    %cst_75 = arith.constant 0.000000e+00 : f32
    %281 = vector.broadcast %cst_75 : f32 to vector<8x256xf32>
    %282 = arith.subf %281, %280 : vector<8x256xf32>
    %283 = math.exp %282 : vector<8x256xf32>
    %cst_76 = arith.constant 1.000000e+00 : f32
    %284 = vector.broadcast %cst_76 : f32 to vector<8x256xf32>
    %285 = arith.addf %284, %283 : vector<8x256xf32>
    %286 = tpu.reciprocal %285 {approx = true} : vector<8x256xf32> -> vector<8x256xf32>
    %287 = vector.extract_strided_slice %272 {offsets = [0, 512], sizes = [8, 256], strides = [1, 1]} : vector<8x1024xf32> to vector<8x256xf32>
    %288 = math.tanh %287 : vector<8x256xf32>
    %289 = vector.extract_strided_slice %272 {offsets = [0, 768], sizes = [8, 256], strides = [1, 1]} : vector<8x1024xf32> to vector<8x256xf32>
    %cst_77 = arith.constant 0.000000e+00 : f32
    %290 = vector.broadcast %cst_77 : f32 to vector<8x256xf32>
    %291 = arith.subf %290, %289 : vector<8x256xf32>
    %292 = math.exp %291 : vector<8x256xf32>
    %cst_78 = arith.constant 1.000000e+00 : f32
    %293 = vector.broadcast %cst_78 : f32 to vector<8x256xf32>
    %294 = arith.addf %293, %292 : vector<8x256xf32>
    %295 = tpu.reciprocal %294 {approx = true} : vector<8x256xf32> -> vector<8x256xf32>
    %296 = arith.mulf %286, %261 : vector<8x256xf32>
    %297 = arith.mulf %279, %288 : vector<8x256xf32>
    %298 = arith.addf %296, %297 : vector<8x256xf32>
    %299 = math.tanh %298 : vector<8x256xf32>
    %300 = arith.mulf %295, %299 : vector<8x256xf32>
    %c0_79 = arith.constant 0 : index
    %c0_80 = arith.constant 0 : index
    %301 = vector.load %arg4[%c0_79, %c0_80] : memref<1x256xf32, #tpu.memory_space<vmem>>, vector<1x256xf32>
    %302 = vector.broadcast %301 : vector<1x256xf32> to vector<8x256xf32>
    %303 = arith.mulf %300, %302 : vector<8x256xf32>
    %cst_81 = arith.constant dense<0.000000e+00> : vector<8xf32>
    %304 = vector.multi_reduction <add>, %303, %cst_81 [1] : vector<8x256xf32> to vector<8xf32>
    %305 = vector.shape_cast %304 : vector<8xf32> to vector<8x1xf32>
    %c0_82 = arith.constant 0 : index
    %c0_83 = arith.constant 0 : index
    %306 = vector.load %arg5[%c0_82, %c0_83] : memref<1x1xf32, #tpu.memory_space<vmem>>, vector<1x1xf32>
    %307 = vector.broadcast %306 : vector<1x1xf32> to vector<8x1xf32>
    %308 = arith.addf %305, %307 : vector<8x1xf32>
    %c0_84 = arith.constant 0 : index
    %c0_85 = arith.constant 0 : index
    %309 = vector.load %arg6[%c0_84, %c0_85] : memref<8x1xf32, #tpu.memory_space<vmem>>, vector<8x1xf32>
    tpu.vector_store %arg6[%c0_84, %c0_85], %308 {strides = array<i32>} : memref<8x1xf32, #tpu.memory_space<vmem>>, vector<8x1xf32>,
    return
  }
}

</mosaic_0001>

<llo_original>
// kernel: net_forward.1
$region0: #{net_forward.1}
  #allocation0 [shape = 'u32[]', space=smem, size = 0x4, offset = 0x4, fixed_abs, tag = 'smem constant byte address 0x4 - core index']
  #allocation1 [shape = 'u32[144,128]{1,0:T(1,128)}', space=vmem, size = 0x12000, scoped, tag = 'internal scratch']
  #allocation2 [shape = 'f32[256,1024]{1,0:T(8,128)}', space=vmem, size = 0x100000, scoped, tag = 'scratch operand']
  #allocation3 [shape = 's32[1]{0}', space=sflag, size = 0x4, scoped, tag = 'scratch operand']
  #allocation4 [shape = 'f32[1,1]{1,0:T(1,128)S(1)}', space=vmem, size = 0x200, scoped, tag = 'scoped memory for net_forward.1']
  #allocation5 [shape = 's32[]', space=sflag, size = 0x4, offset = 0, fixed_abs, tag = 'sflag constant byte address 0x0 - dummy sync flag']
  #allocation6 [shape = 's32[]', space=sflag, size = 0x4, offset = 0, fixed_abs, tag = 'sflag constant byte address 0x0 - dummy sync flag']
  #allocation7 [shape = 'u32[]', space=smem, size = 0x4, offset = 0x44, fixed_abs, tag = 'smem constant byte address 0x44 - assertion arg 0']
  #allocation8 [shape = 'u32[]', space=smem, size = 0x4, offset = 0x48, fixed_abs, tag = 'smem constant byte address 0x48 - assertion arg 1']
  %s0 = inlined_call_operand.vmem [shape: f32[8,8,1], index: 0, kind: input, shape index: {}]
  %s1 = inlined_call_operand.vmem [shape: f32[1,1024], index: 1, kind: input, shape index: {}]
  %s2 = inlined_call_operand.hbm [shape: f32[256,1024], index: 2, kind: input, shape index: {}]
  %s3 = inlined_call_operand.vmem [shape: f32[1,1024], index: 3, kind: input, shape index: {}]
  %s4 = inlined_call_operand.vmem [shape: f32[1,256], index: 4, kind: input, shape index: {}]
  %s5 = inlined_call_operand.<no memory space> [shape: f32[1,1], index: 5, kind: input, shape index: {}]
  %s6 = inlined_call_operand.vmem [shape: f32[8,1], index: 6, kind: output, shape index: {}]
  %s7 = sld [smem:[#allocation0]]
  $region34: #{net_forward.1} parent=0
    _
  %s9 = ssub.s32 1, %s7
  %s10 = scalar_select 0, %s9, %s7
  %v11 = vstv %s5
  %12 = vst [vmem:[#allocation4] sm:$0x1] %v11
  // Predicated region
  $region2: #{net_forward.1} parent=0 // pred_check
    _
  $region3: #{net_forward.1} parent=0 // pred_check_branch
    %14 = sbr.rel (0) target = $region5
  $region4: #{net_forward.1} parent=0 // pred_region
    _
  $region5: #{net_forward.1} parent=0 // pred_fallthru
    _
  // Predicated region
  $region6: #{net_forward.1} parent=0 // pred_check
    _
  $region7: #{net_forward.1} parent=0 // pred_check_branch
    %16 = sbr.rel (0) target = $region9
  $region8: #{net_forward.1} parent=0 // pred_region
    _
  $region9: #{net_forward.1} parent=0 // pred_fallthru
    _
  // Predicated region
  $region10: #{net_forward.1} parent=0 // pred_check
    _
  $region11: #{net_forward.1} parent=0 // pred_check_branch
    %18 = sbr.rel (0) target = $region13
  $region12: #{net_forward.1} parent=0 // pred_region
    _
  $region13: #{net_forward.1} parent=0 // pred_fallthru
    _
  // Predicated region
  $region14: #{net_forward.1} parent=0 // pred_check
    _
  $region15: #{net_forward.1} parent=0 // pred_check_branch
    %20 = sbr.rel (0) target = $region17
  $region16: #{net_forward.1} parent=0 // pred_region
    _
  $region17: #{net_forward.1} parent=0 // pred_fallthru
    _
  // Predicated region
  $region18: #{net_forward.1} parent=0 // pred_check
    _
  $region19: #{net_forward.1} parent=0 // pred_check_branch
    %22 = sbr.rel (0) target = $region21
  $region20: #{net_forward.1} parent=0 // pred_region
    _
  $region21: #{net_forward.1} parent=0 // pred_fallthru
    _
  // Predicated region
  $region22: #{net_forward.1} parent=0 // pred_check
    _
  $region23: #{net_forward.1} parent=0 // pred_check_branch
    %24 = sbr.rel target = $region25
  $region24: #{net_forward.1} parent=0 // pred_region
    %25 = sst [smem:[#allocation7]] [#allocation6]
    %26 = sst [smem:[#allocation8]] [#allocation5]
  $region25: #{net_forward.1} parent=0 // pred_fallthru
    _
  %28 = shalt.err (0)
  %s30 = sshll.u32 [#allocation2], 4
  %s31 = int_to_ptr.vmem [resolvable:$true] %s30
  %33 = dma.hbm_to_vmem [thread:$0]  %s2, 32768, %s31, [#allocation3]
  %v34 = vld [vmem:[%s1] sm:$0xff]
  %v35 = vld [vmem:[%s3] sm:$0xff]
  %s36 = smul.u32 8, 32
  %s37 = smul.u32 %s36, 8
  %s38 = sshll.u32 %s37, 4
  %39 = dma.done [#allocation3], %s38
  %v40 = vld [vmem:[#allocation2] sm:$0xff]
  %v41 = vld [vmem:[#allocation2 + $0x8] sm:$0xff]
  %v42 = vld [vmem:[#allocation2 + $0x10] sm:$0xff]
  %v43 = vld [vmem:[#allocation2 + $0x18] sm:$0xff]
  %v44 = vld [vmem:[#allocation2 + $0x20] sm:$0xff]
  %v45 = vld [vmem:[#allocation2 + $0x28] sm:$0xff]
  %v46 = vld [vmem:[#allocation2 + $0x30] sm:$0xff]
  %v47 = vld [vmem:[#allocation2 + $0x38] sm:$0xff]
  %v48 = vld [vmem:[#allocation2 + $0x40] sm:$0xff]
  %v49 = vld [vmem:[#allocation2 + $0x48] sm:$0xff]
  %v50 = vld [vmem:[#allocation2 + $0x50] sm:$0xff]
  %v51 = vld [vmem:[#allocation2 + $0x58] sm:$0xff]
  %v52 = vld [vmem:[#allocation2 + $0x60] sm:$0xff]
  %v53 = vld [vmem:[#allocation2 + $0x68] sm:$0xff]
  %v54 = vld [vmem:[#allocation2 + $0x70] sm:$0xff]
  %v55 = vld [vmem:[#allocation2 + $0x78] sm:$0xff]
  %v56 = vld [vmem:[#allocation2 + $0x80] sm:$0xff]
  %v57 = vld [vmem:[#allocation2 + $0x88] sm:$0xff]
  %v58 = vld [vmem:[#allocation2 + $0x90] sm:$0xff]
  %v59 = vld [vmem:[#allocation2 + $0x98] sm:$0xff]
  %v60 = vld [vmem:[#allocation2 + $0xa0] sm:$0xff]
  %v61 = vld [vmem:[#allocation2 + $0xa8] sm:$0xff]
  %v62 = vld [vmem:[#allocation2 + $0xb0] sm:$0xff]
  %v63 = vld [vmem:[#allocation2 + $0xb8] sm:$0xff]
  %v64 = vld [vmem:[#allocation2 + $0xc0] sm:$0xff]
  %v65 = vld [vmem:[#allocation2 + $0xc8] sm:$0xff]
  %v66 = vld [vmem:[#allocation2 + $0xd0] sm:$0xff]
  %v67 = vld [vmem:[#allocation2 + $0xd8] sm:$0xff]
  %v68 = vld [vmem:[#allocation2 + $0xe0] sm:$0xff]
  %v69 = vld [vmem:[#allocation2 + $0xe8] sm:$0xff]
  %v70 = vld [vmem:[#allocation2 + $0xf0] sm:$0xff]
  %v71 = vld [vmem:[#allocation2 + $0xf8] sm:$0xff]
  %v72 = vld [vmem:[#allocation2 + $0x100] sm:$0xff]
  %v73 = vld [vmem:[#allocation2 + $0x108] sm:$0xff]
  %v74 = vld [vmem:[#allocation2 + $0x110] sm:$0xff]
  %v75 = vld [vmem:[#allocation2 + $0x118] sm:$0xff]
  %v76 = vld [vmem:[#allocation2 + $0x120] sm:$0xff]
  %v77 = vld [vmem:[#allocation2 + $0x128] sm:$0xff]
  %v78 = vld [vmem:[#allocation2 + $0x130] sm:$0xff]
  %v79 = vld [vmem:[#allocation2 + $0x138] sm:$0xff]
  %v80 = vld [vmem:[#allocation2 + $0x140] sm:$0xff]
  %v81 = vld [vmem:[#allocation2 + $0x148] sm:$0xff]
  %v82 = vld [vmem:[#allocation2 + $0x150] sm:$0xff]
  %v83 = vld [vmem:[#allocation2 + $0x158] sm:$0xff]
  %v84 = vld [vmem:[#allocation2 + $0x160] sm:$0xff]
  %v85 = vld [vmem:[#allocation2 + $0x168] sm:$0xff]
  %v86 = vld [vmem:[#allocation2 + $0x170] sm:$0xff]
  %v87 = vld [vmem:[#allocation2 + $0x178] sm:$0xff]
  %v88 = vld [vmem:[#allocation2 + $0x180] sm:$0xff]
  %v89 = vld [vmem:[#allocation2 + $0x188] sm:$0xff]
  %v90 = vld [vmem:[#allocation2 + $0x190] sm:$0xff]
  %v91 = vld [vmem:[#allocation2 + $0x198] sm:$0xff]
  %v92 = vld [vmem:[#allocation2 + $0x1a0] sm:$0xff]
  %v93 = vld [vmem:[#allocation2 + $0x1a8] sm:$0xff]
  %v94 = vld [vmem:[#allocation2 + $0x1b0] sm:$0xff]
  %v95 = vld [vmem:[#allocation2 + $0x1b8] sm:$0xff]
  %v96 = vld [vmem:[#allocation2 + $0x1c0] sm:$0xff]
  %v97 = vld [vmem:[#allocation2 + $0x1c8] sm:$0xff]
  %v98 = vld [vmem:[#allocation2 + $0x1d0] sm:$0xff]
  %v99 = vld [vmem:[#allocation2 + $0x1d8] sm:$0xff]
  %v100 = vld [vmem:[#allocation2 + $0x1e0] sm:$0xff]
  %v101 = vld [vmem:[#allocation2 + $0x1e8] sm:$0xff]
  %v102 = vld [vmem:[#allocation2 + $0x1f0] sm:$0xff]
  %v103 = vld [vmem:[#allocation2 + $0x1f8] sm:$0xff]
  %v104 = vld [vmem:[#allocation2 + $0x200] sm:$0xff]
  %v105 = vld [vmem:[#allocation2 + $0x208] sm:$0xff]
  %v106 = vld [vmem:[#allocation2 + $0x210] sm:$0xff]
  %v107 = vld [vmem:[#allocation2 + $0x218] sm:$0xff]
  %v108 = vld [vmem:[#allocation2 + $0x220] sm:$0xff]
  %v109 = vld [vmem:[#allocation2 + $0x228] sm:$0xff]
  %v110 = vld [vmem:[#allocation2 + $0x230] sm:$0xff]
  %v111 = vld [vmem:[#allocation2 + $0x238] sm:$0xff]
  %v112 = vld [vmem:[#allocation2 + $0x240] sm:$0xff]
  %v113 = vld [vmem:[#allocation2 + $0x248] sm:$0xff]
  %v114 = vld [vmem:[#allocation2 + $0x250] sm:$0xff]
  %v115 = vld [vmem:[#allocation2 + $0x258] sm:$0xff]
  %v116 = vld [vmem:[#allocation2 + $0x260] sm:$0xff]
  %v117 = vld [vmem:[#allocation2 + $0x268] sm:$0xff]
  %v118 = vld [vmem:[#allocation2 + $0x270] sm:$0xff]
  %v119 = vld [vmem:[#allocation2 + $0x278] sm:$0xff]
  %v120 = vld [vmem:[#allocation2 + $0x280] sm:$0xff]
  %v121 = vld [vmem:[#allocation2 + $0x288] sm:$0xff]
  %v122 = vld [vmem:[#allocation2 + $0x290] sm:$0xff]
  %v123 = vld [vmem:[#allocation2 + $0x298] sm:$0xff]
  %v124 = vld [vmem:[#allocation2 + $0x2a0] sm:$0xff]
  %v125 = vld [vmem:[#allocation2 + $0x2a8] sm:$0xff]
  %v126 = vld [vmem:[#allocation2 + $0x2b0] sm:$0xff]
  %v127 = vld [vmem:[#allocation2 + $0x2b8] sm:$0xff]
  %v128 = vld [vmem:[#allocation2 + $0x2c0] sm:$0xff]
  %v129 = vld [vmem:[#allocation2 + $0x2c8] sm:$0xff]
  %v130 = vld [vmem:[#allocation2 + $0x2d0] sm:$0xff]
  %v131 = vld [vmem:[#allocation2 + $0x2d8] sm:$0xff]
  %v132 = vld [vmem:[#allocation2 + $0x2e0] sm:$0xff]
  %v133 = vld [vmem:[#allocation2 + $0x2e8] sm:$0xff]
  %v134 = vld [vmem:[#allocation2 + $0x2f0] sm:$0xff]
  %v135 = vld [vmem:[#allocation2 + $0x2f8] sm:$0xff]
  %v136 = vld [vmem:[#allocation2 + $0x300] sm:$0xff]
  %v137 = vld [vmem:[#allocation2 + $0x308] sm:$0xff]
  %v138 = vld [vmem:[#allocation2 + $0x310] sm:$0xff]
  %v139 = vld [vmem:[#allocation2 + $0x318] sm:$0xff]
  %v140 = vld [vmem:[#allocation2 + $0x320] sm:$0xff]
  %v141 = vld [vmem:[#allocation2 + $0x328] sm:$0xff]
  %v142 = vld [vmem:[#allocation2 + $0x330] sm:$0xff]
  %v143 = vld [vmem:[#allocation2 + $0x338] sm:$0xff]
  %v144 = vld [vmem:[#allocation2 + $0x340] sm:$0xff]
  %v145 = vld [vmem:[#allocation2 + $0x348] sm:$0xff]
  %v146 = vld [vmem:[#allocation2 + $0x350] sm:$0xff]
  %v147 = vld [vmem:[#allocation2 + $0x358] sm:$0xff]
  %v148 = vld [vmem:[#allocation2 + $0x360] sm:$0xff]
  %v149 = vld [vmem:[#allocation2 + $0x368] sm:$0xff]
  %v150 = vld [vmem:[#allocation2 + $0x370] sm:$0xff]
  %v151 = vld [vmem:[#allocation2 + $0x378] sm:$0xff]
  %v152 = vld [vmem:[#allocation2 + $0x380] sm:$0xff]
  %v153 = vld [vmem:[#allocation2 + $0x388] sm:$0xff]
  %v154 = vld [vmem:[#allocation2 + $0x390] sm:$0xff]
  %v155 = vld [vmem:[#allocation2 + $0x398] sm:$0xff]
  %v156 = vld [vmem:[#allocation2 + $0x3a0] sm:$0xff]
  %v157 = vld [vmem:[#allocation2 + $0x3a8] sm:$0xff]
  %v158 = vld [vmem:[#allocation2 + $0x3b0] sm:$0xff]
  %v159 = vld [vmem:[#allocation2 + $0x3b8] sm:$0xff]
  %v160 = vld [vmem:[#allocation2 + $0x3c0] sm:$0xff]
  %v161 = vld [vmem:[#allocation2 + $0x3c8] sm:$0xff]
  %v162 = vld [vmem:[#allocation2 + $0x3d0] sm:$0xff]
  %v163 = vld [vmem:[#allocation2 + $0x3d8] sm:$0xff]
  %v164 = vld [vmem:[#allocation2 + $0x3e0] sm:$0xff]
  %v165 = vld [vmem:[#allocation2 + $0x3e8] sm:$0xff]
  %v166 = vld [vmem:[#allocation2 + $0x3f0] sm:$0xff]
  %v167 = vld [vmem:[#allocation2 + $0x3f8] sm:$0xff]
  %v168 = vld [vmem:[#allocation2 + $0x400] sm:$0xff]
  %v169 = vld [vmem:[#allocation2 + $0x408] sm:$0xff]
  %v170 = vld [vmem:[#allocation2 + $0x410] sm:$0xff]
  %v171 = vld [vmem:[#allocation2 + $0x418] sm:$0xff]
  %v172 = vld [vmem:[#allocation2 + $0x420] sm:$0xff]
  %v173 = vld [vmem:[#allocation2 + $0x428] sm:$0xff]
  %v174 = vld [vmem:[#allocation2 + $0x430] sm:$0xff]
  %v175 = vld [vmem:[#allocation2 + $0x438] sm:$0xff]
  %v176 = vld [vmem:[#allocation2 + $0x440] sm:$0xff]
  %v177 = vld [vmem:[#allocation2 + $0x448] sm:$0xff]
  %v178 = vld [vmem:[#allocation2 + $0x450] sm:$0xff]
  %v179 = vld [vmem:[#allocation2 + $0x458] sm:$0xff]
  %v180 = vld [vmem:[#allocation2 + $0x460] sm:$0xff]
  %v181 = vld [vmem:[#allocation2 + $0x468] sm:$0xff]
  %v182 = vld [vmem:[#allocation2 + $0x470] sm:$0xff]
  %v183 = vld [vmem:[#allocation2 + $0x478] sm:$0xff]
  %v184 = vld [vmem:[#allocation2 + $0x480] sm:$0xff]
  %v185 = vld [vmem:[#allocation2 + $0x488] sm:$0xff]
  %v186 = vld [vmem:[#allocation2 + $0x490] sm:$0xff]
  %v187 = vld [vmem:[#allocation2 + $0x498] sm:$0xff]
  %v188 = vld [vmem:[#allocation2 + $0x4a0] sm:$0xff]
  %v189 = vld [vmem:[#allocation2 + $0x4a8] sm:$0xff]
  %v190 = vld [vmem:[#allocation2 + $0x4b0] sm:$0xff]
  %v191 = vld [vmem:[#allocation2 + $0x4b8] sm:$0xff]
  %v192 = vld [vmem:[#allocation2 + $0x4c0] sm:$0xff]
  %v193 = vld [vmem:[#allocation2 + $0x4c8] sm:$0xff]
  %v194 = vld [vmem:[#allocation2 + $0x4d0] sm:$0xff]
  %v195 = vld [vmem:[#allocation2 + $0x4d8] sm:$0xff]
  %v196 = vld [vmem:[#allocation2 + $0x4e0] sm:$0xff]
  %v197 = vld [vmem:[#allocation2 + $0x4e8] sm:$0xff]
  %v198 = vld [vmem:[#allocation2 + $0x4f0] sm:$0xff]
  %v199 = vld [vmem:[#allocation2 + $0x4f8] sm:$0xff]
  %v200 = vld [vmem:[#allocation2 + $0x500] sm:$0xff]
  %v201 = vld [vmem:[#allocation2 + $0x508] sm:$0xff]
  %v202 = vld [vmem:[#allocation2 + $0x510] sm:$0xff]
  %v203 = vld [vmem:[#allocation2 + $0x518] sm:$0xff]
  %v204 = vld [vmem:[#allocation2 + $0x520] sm:$0xff]
  %v205 = vld [vmem:[#allocation2 + $0x528] sm:$0xff]
  %v206 = vld [vmem:[#allocation2 + $0x530] sm:$0xff]
  %v207 = vld [vmem:[#allocation2 + $0x538] sm:$0xff]
  %v208 = vld [vmem:[#allocation2 + $0x540] sm:$0xff]
  %v209 = vld [vmem:[#allocation2 + $0x548] sm:$0xff]
  %v210 = vld [vmem:[#allocation2 + $0x550] sm:$0xff]
  %v211 = vld [vmem:[#allocation2 + $0x558] sm:$0xff]
  %v212 = vld [vmem:[#allocation2 + $0x560] sm:$0xff]
  %v213 = vld [vmem:[#allocation2 + $0x568] sm:$0xff]
  %v214 = vld [vmem:[#allocation2 + $0x570] sm:$0xff]
  %v215 = vld [vmem:[#allocation2 + $0x578] sm:$0xff]
  %v216 = vld [vmem:[#allocation2 + $0x580] sm:$0xff]
  %v217 = vld [vmem:[#allocation2 + $0x588] sm:$0xff]
  %v218 = vld [vmem:[#allocation2 + $0x590] sm:$0xff]
  %v219 = vld [vmem:[#allocation2 + $0x598] sm:$0xff]
  %v220 = vld [vmem:[#allocation2 + $0x5a0] sm:$0xff]
  %v221 = vld [vmem:[#allocation2 + $0x5a8] sm:$0xff]
  %v222 = vld [vmem:[#allocation2 + $0x5b0] sm:$0xff]
  %v223 = vld [vmem:[#allocation2 + $0x5b8] sm:$0xff]
  %v224 = vld [vmem:[#allocation2 + $0x5c0] sm:$0xff]
  %v225 = vld [vmem:[#allocation2 + $0x5c8] sm:$0xff]
  %v226 = vld [vmem:[#allocation2 + $0x5d0] sm:$0xff]
  %v227 = vld [vmem:[#allocation2 + $0x5d8] sm:$0xff]
  %v228 = vld [vmem:[#allocation2 + $0x5e0] sm:$0xff]
  %v229 = vld [vmem:[#allocation2 + $0x5e8] sm:$0xff]
  %v230 = vld [vmem:[#allocation2 + $0x5f0] sm:$0xff]
  %v231 = vld [vmem:[#allocation2 + $0x5f8] sm:$0xff]
  %v232 = vld [vmem:[#allocation2 + $0x600] sm:$0xff]
  %v233 = vld [vmem:[#allocation2 + $0x608] sm:$0xff]
  %v234 = vld [vmem:[#allocation2 + $0x610] sm:$0xff]
  %v235 = vld [vmem:[#allocation2 + $0x618] sm:$0xff]
  %v236 = vld [vmem:[#allocation2 + $0x620] sm:$0xff]
  %v237 = vld [vmem:[#allocation2 + $0x628] sm:$0xff]
  %v238 = vld [vmem:[#allocation2 + $0x630] sm:$0xff]
  %v239 = vld [vmem:[#allocation2 + $0x638] sm:$0xff]
  %v240 = vld [vmem:[#allocation2 + $0x640] sm:$0xff]
  %v241 = vld [vmem:[#allocation2 + $0x648] sm:$0xff]
  %v242 = vld [vmem:[#allocation2 + $0x650] sm:$0xff]
  %v243 = vld [vmem:[#allocation2 + $0x658] sm:$0xff]
  %v244 = vld [vmem:[#allocation2 + $0x660] sm:$0xff]
  %v245 = vld [vmem:[#allocation2 + $0x668] sm:$0xff]
  %v246 = vld [vmem:[#allocation2 + $0x670] sm:$0xff]
  %v247 = vld [vmem:[#allocation2 + $0x678] sm:$0xff]
  %v248 = vld [vmem:[#allocation2 + $0x680] sm:$0xff]
  %v249 = vld [vmem:[#allocation2 + $0x688] sm:$0xff]
  %v250 = vld [vmem:[#allocation2 + $0x690] sm:$0xff]
  %v251 = vld [vmem:[#allocation2 + $0x698] sm:$0xff]
  %v252 = vld [vmem:[#allocation2 + $0x6a0] sm:$0xff]
  %v253 = vld [vmem:[#allocation2 + $0x6a8] sm:$0xff]
  %v254 = vld [vmem:[#allocation2 + $0x6b0] sm:$0xff]
  %v255 = vld [vmem:[#allocation2 + $0x6b8] sm:$0xff]
  %v256 = vld [vmem:[#allocation2 + $0x6c0] sm:$0xff]
  %v257 = vld [vmem:[#allocation2 + $0x6c8] sm:$0xff]
  %v258 = vld [vmem:[#allocation2 + $0x6d0] sm:$0xff]
  %v259 = vld [vmem:[#allocation2 + $0x6d8] sm:$0xff]
  %v260 = vld [vmem:[#allocation2 + $0x6e0] sm:$0xff]
  %v261 = vld [vmem:[#allocation2 + $0x6e8] sm:$0xff]
  %v262 = vld [vmem:[#allocation2 + $0x6f0] sm:$0xff]
  %v263 = vld [vmem:[#allocation2 + $0x6f8] sm:$0xff]
  %v264 = vld [vmem:[#allocation2 + $0x700] sm:$0xff]
  %v265 = vld [vmem:[#allocation2 + $0x708] sm:$0xff]
  %v266 = vld [vmem:[#allocation2 + $0x710] sm:$0xff]
  %v267 = vld [vmem:[#allocation2 + $0x718] sm:$0xff]
  %v268 = vld [vmem:[#allocation2 + $0x720] sm:$0xff]
  %v269 = vld [vmem:[#allocation2 + $0x728] sm:$0xff]
  %v270 = vld [vmem:[#allocation2 + $0x730] sm:$0xff]
  %v271 = vld [vmem:[#allocation2 + $0x738] sm:$0xff]
  %v272 = vld [vmem:[#allocation2 + $0x740] sm:$0xff]
  %v273 = vld [vmem:[#allocation2 + $0x748] sm:$0xff]
  %v274 = vld [vmem:[#allocation2 + $0x750] sm:$0xff]
  %v275 = vld [vmem:[#allocation2 + $0x758] sm:$0xff]
  %v276 = vld [vmem:[#allocation2 + $0x760] sm:$0xff]
  %v277 = vld [vmem:[#allocation2 + $0x768] sm:$0xff]
  %v278 = vld [vmem:[#allocation2 + $0x770] sm:$0xff]
  %v279 = vld [vmem:[#allocation2 + $0x778] sm:$0xff]
  %v280 = vld [vmem:[#allocation2 + $0x780] sm:$0xff]
  %v281 = vld [vmem:[#allocation2 + $0x788] sm:$0xff]
  %v282 = vld [vmem:[#allocation2 + $0x790] sm:$0xff]
  %v283 = vld [vmem:[#allocation2 + $0x798] sm:$0xff]
  %v284 = vld [vmem:[#allocation2 + $0x7a0] sm:$0xff]
  %v285 = vld [vmem:[#allocation2 + $0x7a8] sm:$0xff]
  %v286 = vld [vmem:[#allocation2 + $0x7b0] sm:$0xff]
  %v287 = vld [vmem:[#allocation2 + $0x7b8] sm:$0xff]
  %v288 = vld [vmem:[#allocation2 + $0x7c0] sm:$0xff]
  %v289 = vld [vmem:[#allocation2 + $0x7c8] sm:$0xff]
  %v290 = vld [vmem:[#allocation2 + $0x7d0] sm:$0xff]
  %v291 = vld [vmem:[#allocation2 + $0x7d8] sm:$0xff]
  %v292 = vld [vmem:[#allocation2 + $0x7e0] sm:$0xff]
  %v293 = vld [vmem:[#allocation2 + $0x7e8] sm:$0xff]
  %v294 = vld [vmem:[#allocation2 + $0x7f0] sm:$0xff]
  %v295 = vld [vmem:[#allocation2 + $0x7f8] sm:$0xff]
  %v296 = vld [vmem:[%s0] sm:$0xff]
  %298 = vset.pattern.permute.xlu0 0
  %299 = vperm.xlu0 %298, %v296
  %v300 = vpop.permute.xlu0 %299
  %v303 = vlaneseq
  %v304 = vshrl.u32 %v303, 7
  %v305 = vsub.s32 0, %v304
  %v306 = vrot.slane %v34, %v305
  %v307 = vlaneseq
  %v308 = vshrl.u32 %v307, 7
  %v309 = vsub.s32 1, %v308
  %v310 = vrot.slane %v34, %v309
  %v311 = vlaneseq
  %v312 = vshrl.u32 %v311, 7
  %v313 = vsub.s32 2, %v312
  %v314 = vrot.slane %v34, %v313
  %v315 = vlaneseq
  %v316 = vshrl.u32 %v315, 7
  %v317 = vsub.s32 3, %v316
  %v318 = vrot.slane %v34, %v317
  %v319 = vlaneseq
  %v320 = vshrl.u32 %v319, 7
  %v321 = vsub.s32 4, %v320
  %v322 = vrot.slane %v34, %v321
  %v323 = vlaneseq
  %v324 = vshrl.u32 %v323, 7
  %v325 = vsub.s32 5, %v324
  %v326 = vrot.slane %v34, %v325
  %v327 = vlaneseq
  %v328 = vshrl.u32 %v327, 7
  %v329 = vsub.s32 6, %v328
  %v330 = vrot.slane %v34, %v329
  %v331 = vlaneseq
  %v332 = vshrl.u32 %v331, 7
  %v333 = vsub.s32 7, %v332
  %v334 = vrot.slane %v34, %v333
  %v343 = vmul.f32 %v300, %v306
  %v344 = vmul.f32 %v300, %v310
  %v345 = vmul.f32 %v300, %v314
  %v346 = vmul.f32 %v300, %v318
  %v347 = vmul.f32 %v300, %v322
  %v348 = vmul.f32 %v300, %v326
  %v349 = vmul.f32 %v300, %v330
  %v350 = vmul.f32 %v300, %v334
  %v352 = vlaneseq
  %v353 = vshrl.u32 %v352, 7
  %v354 = vsub.s32 0, %v353
  %v355 = vrot.slane %v35, %v354
  %v356 = vlaneseq
  %v357 = vshrl.u32 %v356, 7
  %v358 = vsub.s32 1, %v357
  %v359 = vrot.slane %v35, %v358
  %v360 = vlaneseq
  %v361 = vshrl.u32 %v360, 7
  %v362 = vsub.s32 2, %v361
  %v363 = vrot.slane %v35, %v362
  %v364 = vlaneseq
  %v365 = vshrl.u32 %v364, 7
  %v366 = vsub.s32 3, %v365
  %v367 = vrot.slane %v35, %v366
  %v368 = vlaneseq
  %v369 = vshrl.u32 %v368, 7
  %v370 = vsub.s32 4, %v369
  %v371 = vrot.slane %v35, %v370
  %v372 = vlaneseq
  %v373 = vshrl.u32 %v372, 7
  %v374 = vsub.s32 5, %v373
  %v375 = vrot.slane %v35, %v374
  %v376 = vlaneseq
  %v377 = vshrl.u32 %v376, 7
  %v378 = vsub.s32 6, %v377
  %v379 = vrot.slane %v35, %v378
  %v380 = vlaneseq
  %v381 = vshrl.u32 %v380, 7
  %v382 = vsub.s32 7, %v381
  %v383 = vrot.slane %v35, %v382
  %v392 = vadd.f32 %v343, %v355
  %v393 = vadd.f32 %v344, %v359
  %v394 = vadd.f32 %v345, %v363
  %v395 = vadd.f32 %v346, %v367
  %v396 = vadd.f32 %v347, %v371
  %v397 = vadd.f32 %v348, %v375
  %v398 = vadd.f32 %v349, %v379
  %v399 = vadd.f32 %v350, %v383
  %400 = vmatprep.subr.mxu0 %v41
  %401 = vmatpush1.msra.mxu0 %v40
  %402 = vmatprep.subr.mxu0 %v49
  %403 = vmatpush1.msra.mxu0 %v48
  %404 = vmatprep.subr.mxu0 %v57
  %405 = vmatpush1.msra.mxu0 %v56
  %406 = vmatprep.subr.mxu0 %v65
  %407 = vmatpush1.msra.mxu0 %v64
  %408 = vmatprep.subr.mxu0 %v73
  %409 = vmatpush1.msra.mxu0 %v72
  %410 = vmatprep.subr.mxu0 %v81
  %411 = vmatpush1.msra.mxu0 %v80
  %412 = vmatprep.subr.mxu0 %v89
  %413 = vmatpush1.msra.mxu0 %v88
  %414 = vmatprep.subr.mxu0 %v97
  %415 = vmatpush1.msra.mxu0 %v96
  %416 = vmatprep.subr.mxu0 %v105
  %417 = vmatpush1.msra.mxu0 %v104
  %418 = vmatprep.subr.mxu0 %v113
  %419 = vmatpush1.msra.mxu0 %v112
  %420 = vmatprep.subr.mxu0 %v121
  %421 = vmatpush1.msra.mxu0 %v120
  %422 = vmatprep.subr.mxu0 %v129
  %423 = vmatpush1.msra.mxu0 %v128
  %424 = vmatprep.subr.mxu0 %v137
  %425 = vmatpush1.msra.mxu0 %v136
  %426 = vmatprep.subr.mxu0 %v145
  %427 = vmatpush1.msra.mxu0 %v144
  %428 = vmatprep.subr.mxu0 %v153
  %429 = vmatpush1.msra.mxu0 %v152
  %430 = vmatprep.subr.mxu0 %v161
  %431 = vmatpush1.msra.mxu0 %v160
  %432 = vmatprep.subr.mxu0 %v169
  %433 = vmatpush1.msra.mxu0 %v168
  %434 = vmatprep.subr.mxu0 %v177
  %435 = vmatpush1.msra.mxu0 %v176
  %436 = vmatprep.subr.mxu0 %v185
  %437 = vmatpush1.msra.mxu0 %v184
  %438 = vmatprep.subr.mxu0 %v193
  %439 = vmatpush1.msra.mxu0 %v192
  %440 = vmatprep.subr.mxu0 %v201
  %441 = vmatpush1.msra.mxu0 %v200
  %442 = vmatprep.subr.mxu0 %v209
  %443 = vmatpush1.msra.mxu0 %v208
  %444 = vmatprep.subr.mxu0 %v217
  %445 = vmatpush1.msra.mxu0 %v216
  %446 = vmatprep.subr.mxu0 %v225
  %447 = vmatpush1.msra.mxu0 %v224
  %448 = vmatprep.subr.mxu0 %v233
  %449 = vmatpush1.msra.mxu0 %v232
  %450 = vmatprep.subr.mxu0 %v241
  %451 = vmatpush1.msra.mxu0 %v240
  %452 = vmatprep.subr.mxu0 %v249
  %453 = vmatpush1.msra.mxu0 %v248
  %454 = vmatprep.subr.mxu0 %v257
  %455 = vmatpush1.msra.mxu0 %v256
  %456 = vmatprep.subr.mxu0 %v265
  %457 = vmatpush1.msra.mxu0 %v264
  %458 = vmatprep.subr.mxu0 %v273
  %459 = vmatpush1.msra.mxu0 %v272
  %460 = vmatprep.subr.mxu0 %v281
  %461 = vmatpush1.msra.mxu0 %v280
  %462 = vmatprep.subr.mxu0 %v289
  %463 = vmatpush1.msra.mxu0 %v288
  %464 = vmatprep.mubr.f32.mxu0 0.0
  %465 = vmatmul.mubr.f32.gmra.mrb[0].mxu0 0.0
  %v466 = vpop.f32.mrb[0].mxu0
  %v467 = vadd.f32 0.0, %v466
  %v468 = vpop.f32.mrb[0].mxu0
  %v469 = vadd.f32 0.0, %v468
  %470 = vdwg.mxu0
  %471 = vmatprep.subr.mxu0 %v43
  %472 = vmatpush1.msra.mxu0 %v42
  %473 = vmatprep.subr.mxu0 %v51
  %474 = vmatpush1.msra.mxu0 %v50
  %475 = vmatprep.subr.mxu0 %v59
  %476 = vmatpush1.msra.mxu0 %v58
  %477 = vmatprep.subr.mxu0 %v67
  %478 = vmatpush1.msra.mxu0 %v66
  %479 = vmatprep.subr.mxu0 %v75
  %480 = vmatpush1.msra.mxu0 %v74
  %481 = vmatprep.subr.mxu0 %v83
  %482 = vmatpush1.msra.mxu0 %v82
  %483 = vmatprep.subr.mxu0 %v91
  %484 = vmatpush1.msra.mxu0 %v90
  %485 = vmatprep.subr.mxu0 %v99
  %486 = vmatpush1.msra.mxu0 %v98
  %487 = vmatprep.subr.mxu0 %v107
  %488 = vmatpush1.msra.mxu0 %v106
  %489 = vmatprep.subr.mxu0 %v115
  %490 = vmatpush1.msra.mxu0 %v114
  %491 = vmatprep.subr.mxu0 %v123
  %492 = vmatpush1.msra.mxu0 %v122
  %493 = vmatprep.subr.mxu0 %v131
  %494 = vmatpush1.msra.mxu0 %v130
  %495 = vmatprep.subr.mxu0 %v139
  %496 = vmatpush1.msra.mxu0 %v138
  %497 = vmatprep.subr.mxu0 %v147
  %498 = vmatpush1.msra.mxu0 %v146
  %499 = vmatprep.subr.mxu0 %v155
  %500 = vmatpush1.msra.mxu0 %v154
  %501 = vmatprep.subr.mxu0 %v163
  %502 = vmatpush1.msra.mxu0 %v162
  %503 = vmatprep.subr.mxu0 %v171
  %504 = vmatpush1.msra.mxu0 %v170
  %505 = vmatprep.subr.mxu0 %v179
  %506 = vmatpush1.msra.mxu0 %v178
  %507 = vmatprep.subr.mxu0 %v187
  %508 = vmatpush1.msra.mxu0 %v186
  %509 = vmatprep.subr.mxu0 %v195
  %510 = vmatpush1.msra.mxu0 %v194
  %511 = vmatprep.subr.mxu0 %v203
  %512 = vmatpush1.msra.mxu0 %v202
  %513 = vmatprep.subr.mxu0 %v211
  %514 = vmatpush1.msra.mxu0 %v210
  %515 = vmatprep.subr.mxu0 %v219
  %516 = vmatpush1.msra.mxu0 %v218
  %517 = vmatprep.subr.mxu0 %v227
  %518 = vmatpush1.msra.mxu0 %v226
  %519 = vmatprep.subr.mxu0 %v235
  %520 = vmatpush1.msra.mxu0 %v234
  %521 = vmatprep.subr.mxu0 %v243
  %522 = vmatpush1.msra.mxu0 %v242
  %523 = vmatprep.subr.mxu0 %v251
  %524 = vmatpush1.msra.mxu0 %v250
  %525 = vmatprep.subr.mxu0 %v259
  %526 = vmatpush1.msra.mxu0 %v258
  %527 = vmatprep.subr.mxu0 %v267
  %528 = vmatpush1.msra.mxu0 %v266
  %529 = vmatprep.subr.mxu0 %v275
  %530 = vmatpush1.msra.mxu0 %v274
  %531 = vmatprep.subr.mxu0 %v283
  %532 = vmatpush1.msra.mxu0 %v282
  %533 = vmatprep.subr.mxu0 %v291
  %534 = vmatpush1.msra.mxu0 %v290
  %535 = vmatprep.mubr.f32.mxu0 0.0
  %536 = vmatmul.mubr.f32.gmra.mrb[0].mxu0 0.0
  %v537 = vpop.f32.mrb[0].mxu0
  %v538 = vadd.f32 0.0, %v537
  %v539 = vpop.f32.mrb[0].mxu0
  %v540 = vadd.f32 0.0, %v539
  %541 = vdwg.mxu0
  %542 = vmatprep.subr.mxu0 %v45
  %543 = vmatpush1.msra.mxu0 %v44
  %544 = vmatprep.subr.mxu0 %v53
  %545 = vmatpush1.msra.mxu0 %v52
  %546 = vmatprep.subr.mxu0 %v61
  %547 = vmatpush1.msra.mxu0 %v60
  %548 = vmatprep.subr.mxu0 %v69
  %549 = vmatpush1.msra.mxu0 %v68
  %550 = vmatprep.subr.mxu0 %v77
  %551 = vmatpush1.msra.mxu0 %v76
  %552 = vmatprep.subr.mxu0 %v85
  %553 = vmatpush1.msra.mxu0 %v84
  %554 = vmatprep.subr.mxu0 %v93
  %555 = vmatpush1.msra.mxu0 %v92
  %556 = vmatprep.subr.mxu0 %v101
  %557 = vmatpush1.msra.mxu0 %v100
  %558 = vmatprep.subr.mxu0 %v109
  %559 = vmatpush1.msra.mxu0 %v108
  %560 = vmatprep.subr.mxu0 %v117
  %561 = vmatpush1.msra.mxu0 %v116
  %562 = vmatprep.subr.mxu0 %v125
  %563 = vmatpush1.msra.mxu0 %v124
  %564 = vmatprep.subr.mxu0 %v133
  %565 = vmatpush1.msra.mxu0 %v132
  %566 = vmatprep.subr.mxu0 %v141
  %567 = vmatpush1.msra.mxu0 %v140
  %568 = vmatprep.subr.mxu0 %v149
  %569 = vmatpush1.msra.mxu0 %v148
  %570 = vmatprep.subr.mxu0 %v157
  %571 = vmatpush1.msra.mxu0 %v156
  %572 = vmatprep.subr.mxu0 %v165
  %573 = vmatpush1.msra.mxu0 %v164
  %574 = vmatprep.subr.mxu0 %v173
  %575 = vmatpush1.msra.mxu0 %v172
  %576 = vmatprep.subr.mxu0 %v181
  %577 = vmatpush1.msra.mxu0 %v180
  %578 = vmatprep.subr.mxu0 %v189
  %579 = vmatpush1.msra.mxu0 %v188
  %580 = vmatprep.subr.mxu0 %v197
  %581 = vmatpush1.msra.mxu0 %v196
  %582 = vmatprep.subr.mxu0 %v205
  %583 = vmatpush1.msra.mxu0 %v204
  %584 = vmatprep.subr.mxu0 %v213
  %585 = vmatpush1.msra.mxu0 %v212
  %586 = vmatprep.subr.mxu0 %v221
  %587 = vmatpush1.msra.mxu0 %v220
  %588 = vmatprep.subr.mxu0 %v229
  %589 = vmatpush1.msra.mxu0 %v228
  %590 = vmatprep.subr.mxu0 %v237
  %591 = vmatpush1.msra.mxu0 %v236
  %592 = vmatprep.subr.mxu0 %v245
  %593 = vmatpush1.msra.mxu0 %v244
  %594 = vmatprep.subr.mxu0 %v253
  %595 = vmatpush1.msra.mxu0 %v252
  %596 = vmatprep.subr.mxu0 %v261
  %597 = vmatpush1.msra.mxu0 %v260
  %598 = vmatprep.subr.mxu0 %v269
  %599 = vmatpush1.msra.mxu0 %v268
  %600 = vmatprep.subr.mxu0 %v277
  %601 = vmatpush1.msra.mxu0 %v276
  %602 = vmatprep.subr.mxu0 %v285
  %603 = vmatpush1.msra.mxu0 %v284
  %604 = vmatprep.subr.mxu0 %v293
  %605 = vmatpush1.msra.mxu0 %v292
  %606 = vmatprep.mubr.f32.mxu0 0.0
  %607 = vmatmul.mubr.f32.gmra.mrb[0].mxu0 0.0
  %v608 = vpop.f32.mrb[0].mxu0
  %v609 = vadd.f32 0.0, %v608
  %v610 = vpop.f32.mrb[0].mxu0
  %v611 = vadd.f32 0.0, %v610
  %612 = vdwg.mxu0
  %613 = vmatprep.subr.mxu0 %v47
  %614 = vmatpush1.msra.mxu0 %v46
  %615 = vmatprep.subr.mxu0 %v55
  %616 = vmatpush1.msra.mxu0 %v54
  %617 = vmatprep.subr.mxu0 %v63
  %618 = vmatpush1.msra.mxu0 %v62
  %619 = vmatprep.subr.mxu0 %v71
  %620 = vmatpush1.msra.mxu0 %v70
  %621 = vmatprep.subr.mxu0 %v79
  %622 = vmatpush1.msra.mxu0 %v78
  %623 = vmatprep.subr.mxu0 %v87
  %624 = vmatpush1.msra.mxu0 %v86
  %625 = vmatprep.subr.mxu0 %v95
  %626 = vmatpush1.msra.mxu0 %v94
  %627 = vmatprep.subr.mxu0 %v103
  %628 = vmatpush1.msra.mxu0 %v102
  %629 = vmatprep.subr.mxu0 %v111
  %630 = vmatpush1.msra.mxu0 %v110
  %631 = vmatprep.subr.mxu0 %v119
  %632 = vmatpush1.msra.mxu0 %v118
  %633 = vmatprep.subr.mxu0 %v127
  %634 = vmatpush1.msra.mxu0 %v126
  %635 = vmatprep.subr.mxu0 %v135
  %636 = vmatpush1.msra.mxu0 %v134
  %637 = vmatprep.subr.mxu0 %v143
  %638 = vmatpush1.msra.mxu0 %v142
  %639 = vmatprep.subr.mxu0 %v151
  %640 = vmatpush1.msra.mxu0 %v150
  %641 = vmatprep.subr.mxu0 %v159
  %642 = vmatpush1.msra.mxu0 %v158
  %643 = vmatprep.subr.mxu0 %v167
  %644 = vmatpush1.msra.mxu0 %v166
  %645 = vmatprep.subr.mxu0 %v175
  %646 = vmatpush1.msra.mxu0 %v174
  %647 = vmatprep.subr.mxu0 %v183
  %648 = vmatpush1.msra.mxu0 %v182
  %649 = vmatprep.subr.mxu0 %v191
  %650 = vmatpush1.msra.mxu0 %v190
  %651 = vmatprep.subr.mxu0 %v199
  %652 = vmatpush1.msra.mxu0 %v198
  %653 = vmatprep.subr.mxu0 %v207
  %654 = vmatpush1.msra.mxu0 %v206
  %655 = vmatprep.subr.mxu0 %v215
  %656 = vmatpush1.msra.mxu0 %v214
  %657 = vmatprep.subr.mxu0 %v223
  %658 = vmatpush1.msra.mxu0 %v222
  %659 = vmatprep.subr.mxu0 %v231
  %660 = vmatpush1.msra.mxu0 %v230
  %661 = vmatprep.subr.mxu0 %v239
  %662 = vmatpush1.msra.mxu0 %v238
  %663 = vmatprep.subr.mxu0 %v247
  %664 = vmatpush1.msra.mxu0 %v246
  %665 = vmatprep.subr.mxu0 %v255
  %666 = vmatpush1.msra.mxu0 %v254
  %667 = vmatprep.subr.mxu0 %v263
  %668 = vmatpush1.msra.mxu0 %v262
  %669 = vmatprep.subr.mxu0 %v271
  %670 = vmatpush1.msra.mxu0 %v270
  %671 = vmatprep.subr.mxu0 %v279
  %672 = vmatpush1.msra.mxu0 %v278
  %673 = vmatprep.subr.mxu0 %v287
  %674 = vmatpush1.msra.mxu0 %v286
  %675 = vmatprep.subr.mxu0 %v295
  %676 = vmatpush1.msra.mxu0 %v294
  %677 = vmatprep.mubr.f32.mxu0 0.0
  %678 = vmatmul.mubr.f32.gmra.mrb[0].mxu0 0.0
  %v679 = vpop.f32.mrb[0].mxu0
  %v680 = vadd.f32 0.0, %v679
  %v681 = vpop.f32.mrb[0].mxu0
  %v682 = vadd.f32 0.0, %v681
  %683 = vdwg.mxu0
  %v684 = vadd.f32 %v392, %v467
  %v685 = vadd.f32 %v393, %v469
  %v686 = vadd.f32 %v394, %v538
  %v687 = vadd.f32 %v395, %v540
  %v688 = vadd.f32 %v396, %v609
  %v689 = vadd.f32 %v397, %v611
  %v690 = vadd.f32 %v398, %v680
  %v691 = vadd.f32 %v399, %v682
  %v692 = vsub.f32 0.0, %v684
  %v693 = vsub.f32 0.0, %v685
  %v694 = vmul.f32 %v692, 1.442695
  %v695 = vpow.pop %v694
  %v696 = vmul.f32 %v693, 1.442695
  %v697 = vpow.pop %v696
  %v698 = vadd.f32 %v695, 1.0
  %v699 = vadd.f32 %v697, 1.0
  %v700 = vrcp.pop %v698
  %v701 = vrcp.pop %v699
  %v702 = vsub.f32 0.0, %v686
  %v703 = vsub.f32 0.0, %v687
  %v704 = vmul.f32 %v702, 1.442695
  %v705 = vpow.pop %v704
  %v706 = vmul.f32 %v703, 1.442695
  %v707 = vpow.pop %v706
  %v708 = vadd.f32 %v705, 1.0
  %v709 = vadd.f32 %v707, 1.0
  %v710 = vrcp.pop %v708
  %v711 = vrcp.pop %v709
  %v712 = vtanh.pop %v688
  %v713 = vtanh.pop %v689
  %v714 = vsub.f32 0.0, %v690
  %v715 = vsub.f32 0.0, %v691
  %v716 = vmul.f32 %v714, 1.442695
  %v717 = vpow.pop %v716
  %v718 = vmul.f32 %v715, 1.442695
  %v719 = vpow.pop %v718
  %v720 = vadd.f32 %v717, 1.0
  %v721 = vadd.f32 %v719, 1.0
  %v722 = vrcp.pop %v720
  %v723 = vrcp.pop %v721
  %v724 = vmul.f32 %v710, 0.0
  %v725 = vmul.f32 %v711, 0.0
  %v726 = vmul.f32 %v700, %v712
  %v727 = vmul.f32 %v701, %v713
  %v728 = vadd.f32 %v724, %v726
  %v729 = vadd.f32 %v725, %v727
  %v730 = vtanh.pop %v728
  %v731 = vtanh.pop %v729
  %v732 = vmul.f32 %v722, %v730
  %v733 = vmul.f32 %v723, %v731
  %s734 = scalar_lea.vmem %s0, 8
  %v735 = vld [vmem:[%s734] sm:$0xff]
  %737 = vset.pattern.permute.xlu0 0
  %738 = vperm.xlu0 %737, %v735
  %v739 = vpop.permute.xlu0 %738
  %v741 = vmul.f32 %v739, %v306
  %v742 = vmul.f32 %v739, %v310
  %v743 = vmul.f32 %v739, %v314
  %v744 = vmul.f32 %v739, %v318
  %v745 = vmul.f32 %v739, %v322
  %v746 = vmul.f32 %v739, %v326
  %v747 = vmul.f32 %v739, %v330
  %v748 = vmul.f32 %v739, %v334
  %v749 = vadd.f32 %v741, %v355
  %v750 = vadd.f32 %v742, %v359
  %v751 = vadd.f32 %v743, %v363
  %v752 = vadd.f32 %v744, %v367
  %v753 = vadd.f32 %v745, %v371
  %v754 = vadd.f32 %v746, %v375
  %v755 = vadd.f32 %v747, %v379
  %v756 = vadd.f32 %v748, %v383
  %757 = vmatprep.subr.mxu0 %v41
  %758 = vmatpush1.msra.mxu0 %v40
  %759 = vmatprep.subr.mxu0 %v49
  %760 = vmatpush1.msra.mxu0 %v48
  %761 = vmatprep.subr.mxu0 %v57
  %762 = vmatpush1.msra.mxu0 %v56
  %763 = vmatprep.subr.mxu0 %v65
  %764 = vmatpush1.msra.mxu0 %v64
  %765 = vmatprep.subr.mxu0 %v73
  %766 = vmatpush1.msra.mxu0 %v72
  %767 = vmatprep.subr.mxu0 %v81
  %768 = vmatpush1.msra.mxu0 %v80
  %769 = vmatprep.subr.mxu0 %v89
  %770 = vmatpush1.msra.mxu0 %v88
  %771 = vmatprep.subr.mxu0 %v97
  %772 = vmatpush1.msra.mxu0 %v96
  %773 = vmatprep.subr.mxu0 %v105
  %774 = vmatpush1.msra.mxu0 %v104
  %775 = vmatprep.subr.mxu0 %v113
  %776 = vmatpush1.msra.mxu0 %v112
  %777 = vmatprep.subr.mxu0 %v121
  %778 = vmatpush1.msra.mxu0 %v120
  %779 = vmatprep.subr.mxu0 %v129
  %780 = vmatpush1.msra.mxu0 %v128
  %781 = vmatprep.subr.mxu0 %v137
  %782 = vmatpush1.msra.mxu0 %v136
  %783 = vmatprep.subr.mxu0 %v145
  %784 = vmatpush1.msra.mxu0 %v144
  %785 = vmatprep.subr.mxu0 %v153
  %786 = vmatpush1.msra.mxu0 %v152
  %787 = vmatprep.subr.mxu0 %v161
  %788 = vmatpush1.msra.mxu0 %v160
  %789 = vmatprep.subr.mxu0 %v169
  %790 = vmatpush1.msra.mxu0 %v168
  %791 = vmatprep.subr.mxu0 %v177
  %792 = vmatpush1.msra.mxu0 %v176
  %793 = vmatprep.subr.mxu0 %v185
  %794 = vmatpush1.msra.mxu0 %v184
  %795 = vmatprep.subr.mxu0 %v193
  %796 = vmatpush1.msra.mxu0 %v192
  %797 = vmatprep.subr.mxu0 %v201
  %798 = vmatpush1.msra.mxu0 %v200
  %799 = vmatprep.subr.mxu0 %v209
  %800 = vmatpush1.msra.mxu0 %v208
  %801 = vmatprep.subr.mxu0 %v217
  %802 = vmatpush1.msra.mxu0 %v216
  %803 = vmatprep.subr.mxu0 %v225
  %804 = vmatpush1.msra.mxu0 %v224
  %805 = vmatprep.subr.mxu0 %v233
  %806 = vmatpush1.msra.mxu0 %v232
  %807 = vmatprep.subr.mxu0 %v241
  %808 = vmatpush1.msra.mxu0 %v240
  %809 = vmatprep.subr.mxu0 %v249
  %810 = vmatpush1.msra.mxu0 %v248
  %811 = vmatprep.subr.mxu0 %v257
  %812 = vmatpush1.msra.mxu0 %v256
  %813 = vmatprep.subr.mxu0 %v265
  %814 = vmatpush1.msra.mxu0 %v264
  %815 = vmatprep.subr.mxu0 %v273
  %816 = vmatpush1.msra.mxu0 %v272
  %817 = vmatprep.subr.mxu0 %v281
  %818 = vmatpush1.msra.mxu0 %v280
  %819 = vmatprep.subr.mxu0 %v289
  %820 = vmatpush1.msra.mxu0 %v288
  %821 = vmatprep.mubr.f32.mxu0 %v733
  %822 = vmatmul.mubr.f32.gmra.mrb[0].mxu0 %v732
  %v823 = vpop.f32.mrb[0].mxu0
  %v824 = vadd.f32 0.0, %v823
  %v825 = vpop.f32.mrb[0].mxu0
  %v826 = vadd.f32 0.0, %v825
  %827 = vdwg.mxu0
  %828 = vmatprep.subr.mxu0 %v43
  %829 = vmatpush1.msra.mxu0 %v42
  %830 = vmatprep.subr.mxu0 %v51
  %831 = vmatpush1.msra.mxu0 %v50
  %832 = vmatprep.subr.mxu0 %v59
  %833 = vmatpush1.msra.mxu0 %v58
  %834 = vmatprep.subr.mxu0 %v67
  %835 = vmatpush1.msra.mxu0 %v66
  %836 = vmatprep.subr.mxu0 %v75
  %837 = vmatpush1.msra.mxu0 %v74
  %838 = vmatprep.subr.mxu0 %v83
  %839 = vmatpush1.msra.mxu0 %v82
  %840 = vmatprep.subr.mxu0 %v91
  %841 = vmatpush1.msra.mxu0 %v90
  %842 = vmatprep.subr.mxu0 %v99
  %843 = vmatpush1.msra.mxu0 %v98
  %844 = vmatprep.subr.mxu0 %v107
  %845 = vmatpush1.msra.mxu0 %v106
  %846 = vmatprep.subr.mxu0 %v115
  %847 = vmatpush1.msra.mxu0 %v114
  %848 = vmatprep.subr.mxu0 %v123
  %849 = vmatpush1.msra.mxu0 %v122
  %850 = vmatprep.subr.mxu0 %v131
  %851 = vmatpush1.msra.mxu0 %v130
  %852 = vmatprep.subr.mxu0 %v139
  %853 = vmatpush1.msra.mxu0 %v138
  %854 = vmatprep.subr.mxu0 %v147
  %855 = vmatpush1.msra.mxu0 %v146
  %856 = vmatprep.subr.mxu0 %v155
  %857 = vmatpush1.msra.mxu0 %v154
  %858 = vmatprep.subr.mxu0 %v163
  %859 = vmatpush1.msra.mxu0 %v162
  %860 = vmatprep.subr.mxu0 %v171
  %861 = vmatpush1.msra.mxu0 %v170
  %862 = vmatprep.subr.mxu0 %v179
  %863 = vmatpush1.msra.mxu0 %v178
  %864 = vmatprep.subr.mxu0 %v187
  %865 = vmatpush1.msra.mxu0 %v186
  %866 = vmatprep.subr.mxu0 %v195
  %867 = vmatpush1.msra.mxu0 %v194
  %868 = vmatprep.subr.mxu0 %v203
  %869 = vmatpush1.msra.mxu0 %v202
  %870 = vmatprep.subr.mxu0 %v211
  %871 = vmatpush1.msra.mxu0 %v210
  %872 = vmatprep.subr.mxu0 %v219
  %873 = vmatpush1.msra.mxu0 %v218
  %874 = vmatprep.subr.mxu0 %v227
  %875 = vmatpush1.msra.mxu0 %v226
  %876 = vmatprep.subr.mxu0 %v235
  %877 = vmatpush1.msra.mxu0 %v234
  %878 = vmatprep.subr.mxu0 %v243
  %879 = vmatpush1.msra.mxu0 %v242
  %880 = vmatprep.subr.mxu0 %v251
  %881 = vmatpush1.msra.mxu0 %v250
  %882 = vmatprep.subr.mxu0 %v259
  %883 = vmatpush1.msra.mxu0 %v258
  %884 = vmatprep.subr.mxu0 %v267
  %885 = vmatpush1.msra.mxu0 %v266
  %886 = vmatprep.subr.mxu0 %v275
  %887 = vmatpush1.msra.mxu0 %v274
  %888 = vmatprep.subr.mxu0 %v283
  %889 = vmatpush1.msra.mxu0 %v282
  %890 = vmatprep.subr.mxu0 %v291
  %891 = vmatpush1.msra.mxu0 %v290
  %892 = vmatprep.mubr.f32.mxu0 %v733
  %893 = vmatmul.mubr.f32.gmra.mrb[0].mxu0 %v732
  %v894 = vpop.f32.mrb[0].mxu0
  %v895 = vadd.f32 0.0, %v894
  %v896 = vpop.f32.mrb[0].mxu0
  %v897 = vadd.f32 0.0, %v896
  %898 = vdwg.mxu0
  %899 = vmatprep.subr.mxu0 %v45
  %900 = vmatpush1.msra.mxu0 %v44
  %901 = vmatprep.subr.mxu0 %v53
  %902 = vmatpush1.msra.mxu0 %v52
  %903 = vmatprep.subr.mxu0 %v61
  %904 = vmatpush1.msra.mxu0 %v60
  %905 = vmatprep.subr.mxu0 %v69
  %906 = vmatpush1.msra.mxu0 %v68
  %907 = vmatprep.subr.mxu0 %v77
  %908 = vmatpush1.msra.mxu0 %v76
  %909 = vmatprep.subr.mxu0 %v85
  %910 = vmatpush1.msra.mxu0 %v84
  %911 = vmatprep.subr.mxu0 %v93
  %912 = vmatpush1.msra.mxu0 %v92
  %913 = vmatprep.subr.mxu0 %v101
  %914 = vmatpush1.msra.mxu0 %v100
  %915 = vmatprep.subr.mxu0 %v109
  %916 = vmatpush1.msra.mxu0 %v108
  %917 = vmatprep.subr.mxu0 %v117
  %918 = vmatpush1.msra.mxu0 %v116
  %919 = vmatprep.subr.mxu0 %v125
  %920 = vmatpush1.msra.mxu0 %v124
  %921 = vmatprep.subr.mxu0 %v133
  %922 = vmatpush1.msra.mxu0 %v132
  %923 = vmatprep.subr.mxu0 %v141
  %924 = vmatpush1.msra.mxu0 %v140
  %925 = vmatprep.subr.mxu0 %v149
  %926 = vmatpush1.msra.mxu0 %v148
  %927 = vmatprep.subr.mxu0 %v157
  %928 = vmatpush1.msra.mxu0 %v156
  %929 = vmatprep.subr.mxu0 %v165
  %930 = vmatpush1.msra.mxu0 %v164
  %931 = vmatprep.subr.mxu0 %v173
  %932 = vmatpush1.msra.mxu0 %v172
  %933 = vmatprep.subr.mxu0 %v181
  %934 = vmatpush1.msra.mxu0 %v180
  %935 = vmatprep.subr.mxu0 %v189
  %936 = vmatpush1.msra.mxu0 %v188
  %937 = vmatprep.subr.mxu0 %v197
  %938 = vmatpush1.msra.mxu0 %v196
  %939 = vmatprep.subr.mxu0 %v205
  %940 = vmatpush1.msra.mxu0 %v204
  %941 = vmatprep.subr.mxu0 %v213
  %942 = vmatpush1.msra.mxu0 %v212
  %943 = vmatprep.subr.mxu0 %v221
  %944 = vmatpush1.msra.mxu0 %v220
  %945 = vmatprep.subr.mxu0 %v229
  %946 = vmatpush1.msra.mxu0 %v228
  %947 = vmatprep.subr.mxu0 %v237
  %948 = vmatpush1.msra.mxu0 %v236
  %949 = vmatprep.subr.mxu0 %v245
  %950 = vmatpush1.msra.mxu0 %v244
  %951 = vmatprep.subr.mxu0 %v253
  %952 = vmatpush1.msra.mxu0 %v252
  %953 = vmatprep.subr.mxu0 %v261
  %954 = vmatpush1.msra.mxu0 %v260
  %955 = vmatprep.subr.mxu0 %v269
  %956 = vmatpush1.msra.mxu0 %v268
  %957 = vmatprep.subr.mxu0 %v277
  %958 = vmatpush1.msra.mxu0 %v276
  %959 = vmatprep.subr.mxu0 %v285
  %960 = vmatpush1.msra.mxu0 %v284
  %961 = vmatprep.subr.mxu0 %v293
  %962 = vmatpush1.msra.mxu0 %v292
  %963 = vmatprep.mubr.f32.mxu0 %v733
  %964 = vmatmul.mubr.f32.gmra.mrb[0].mxu0 %v732
  %v965 = vpop.f32.mrb[0].mxu0
  %v966 = vadd.f32 0.0, %v965
  %v967 = vpop.f32.mrb[0].mxu0
  %v968 = vadd.f32 0.0, %v967
  %969 = vdwg.mxu0
  %970 = vmatprep.subr.mxu0 %v47
  %971 = vmatpush1.msra.mxu0 %v46
  %972 = vmatprep.subr.mxu0 %v55
  %973 = vmatpush1.msra.mxu0 %v54
  %974 = vmatprep.subr.mxu0 %v63
  %975 = vmatpush1.msra.mxu0 %v62
  %976 = vmatprep.subr.mxu0 %v71
  %977 = vmatpush1.msra.mxu0 %v70
  %978 = vmatprep.subr.mxu0 %v79
  %979 = vmatpush1.msra.mxu0 %v78
  %980 = vmatprep.subr.mxu0 %v87
  %981 = vmatpush1.msra.mxu0 %v86
  %982 = vmatprep.subr.mxu0 %v95
  %983 = vmatpush1.msra.mxu0 %v94
  %984 = vmatprep.subr.mxu0 %v103
  %985 = vmatpush1.msra.mxu0 %v102
  %986 = vmatprep.subr.mxu0 %v111
  %987 = vmatpush1.msra.mxu0 %v110
  %988 = vmatprep.subr.mxu0 %v119
  %989 = vmatpush1.msra.mxu0 %v118
  %990 = vmatprep.subr.mxu0 %v127
  %991 = vmatpush1.msra.mxu0 %v126
  %992 = vmatprep.subr.mxu0 %v135
  %993 = vmatpush1.msra.mxu0 %v134
  %994 = vmatprep.subr.mxu0 %v143
  %995 = vmatpush1.msra.mxu0 %v142
  %996 = vmatprep.subr.mxu0 %v151
  %997 = vmatpush1.msra.mxu0 %v150
  %998 = vmatprep.subr.mxu0 %v159
  %999 = vmatpush1.msra.mxu0 %v158
  %1000 = vmatprep.subr.mxu0 %v167
  %1001 = vmatpush1.msra.mxu0 %v166
  %1002 = vmatprep.subr.mxu0 %v175
  %1003 = vmatpush1.msra.mxu0 %v174
  %1004 = vmatprep.subr.mxu0 %v183
  %1005 = vmatpush1.msra.mxu0 %v182
  %1006 = vmatprep.subr.mxu0 %v191
  %1007 = vmatpush1.msra.mxu0 %v190
  %1008 = vmatprep.subr.mxu0 %v199
  %1009 = vmatpush1.msra.mxu0 %v198
  %1010 = vmatprep.subr.mxu0 %v207
  %1011 = vmatpush1.msra.mxu0 %v206
  %1012 = vmatprep.subr.mxu0 %v215
  %1013 = vmatpush1.msra.mxu0 %v214
  %1014 = vmatprep.subr.mxu0 %v223
  %1015 = vmatpush1.msra.mxu0 %v222
  %1016 = vmatprep.subr.mxu0 %v231
  %1017 = vmatpush1.msra.mxu0 %v230
  %1018 = vmatprep.subr.mxu0 %v239
  %1019 = vmatpush1.msra.mxu0 %v238
  %1020 = vmatprep.subr.mxu0 %v247
  %1021 = vmatpush1.msra.mxu0 %v246
  %1022 = vmatprep.subr.mxu0 %v255
  %1023 = vmatpush1.msra.mxu0 %v254
  %1024 = vmatprep.subr.mxu0 %v263
  %1025 = vmatpush1.msra.mxu0 %v262
  %1026 = vmatprep.subr.mxu0 %v271
  %1027 = vmatpush1.msra.mxu0 %v270
  %1028 = vmatprep.subr.mxu0 %v279
  %1029 = vmatpush1.msra.mxu0 %v278
  %1030 = vmatprep.subr.mxu0 %v287
  %1031 = vmatpush1.msra.mxu0 %v286
  %1032 = vmatprep.subr.mxu0 %v295
  %1033 = vmatpush1.msra.mxu0 %v294
  %1034 = vmatprep.mubr.f32.mxu0 %v733
  %1035 = vmatmul.mubr.f32.gmra.mrb[0].mxu0 %v732
  %v1036 = vpop.f32.mrb[0].mxu0
  %v1037 = vadd.f32 0.0, %v1036
  %v1038 = vpop.f32.mrb[0].mxu0
  %v1039 = vadd.f32 0.0, %v1038
  %1040 = vdwg.mxu0
  %v1041 = vadd.f32 %v749, %v824
  %v1042 = vadd.f32 %v750, %v826
  %v1043 = vadd.f32 %v751, %v895
  %v1044 = vadd.f32 %v752, %v897
  %v1045 = vadd.f32 %v753, %v966
  %v1046 = vadd.f32 %v754, %v968
  %v1047 = vadd.f32 %v755, %v1037
  %v1048 = vadd.f32 %v756, %v1039
  %v1049 = vsub.f32 0.0, %v1041
  %v1050 = vsub.f32 0.0, %v1042
  %v1051 = vmul.f32 %v1049, 1.442695
  %v1052 = vpow.pop %v1051
  %v1053 = vmul.f32 %v1050, 1.442695
  %v1054 = vpow.pop %v1053
  %v1055 = vadd.f32 %v1052, 1.0
  %v1056 = vadd.f32 %v1054, 1.0
  %v1057 = vrcp.pop %v1055
  %v1058 = vrcp.pop %v1056
  %v1059 = vsub.f32 0.0, %v1043
  %v1060 = vsub.f32 0.0, %v1044
  %v1061 = vmul.f32 %v1059, 1.442695
  %v1062 = vpow.pop %v1061
  %v1063 = vmul.f32 %v1060, 1.442695
  %v1064 = vpow.pop %v1063
  %v1065 = vadd.f32 %v1062, 1.0
  %v1066 = vadd.f32 %v1064, 1.0
  %v1067 = vrcp.pop %v1065
  %v1068 = vrcp.pop %v1066
  %v1069 = vtanh.pop %v1045
  %v1070 = vtanh.pop %v1046
  %v1071 = vsub.f32 0.0, %v1047
  %v1072 = vsub.f32 0.0, %v1048
  %v1073 = vmul.f32 %v1071, 1.442695
  %v1074 = vpow.pop %v1073
  %v1075 = vmul.f32 %v1072, 1.442695
  %v1076 = vpow.pop %v1075
  %v1077 = vadd.f32 %v1074, 1.0
  %v1078 = vadd.f32 %v1076, 1.0
  %v1079 = vrcp.pop %v1077
  %v1080 = vrcp.pop %v1078
  %v1081 = vmul.f32 %v1067, %v728
  %v1082 = vmul.f32 %v1068, %v729
  %v1083 = vmul.f32 %v1057, %v1069
  %v1084 = vmul.f32 %v1058, %v1070
  %v1085 = vadd.f32 %v1081, %v1083
  %v1086 = vadd.f32 %v1082, %v1084
  %v1087 = vtanh.pop %v1085
  %v1088 = vtanh.pop %v1086
  %v1089 = vmul.f32 %v1079, %v1087
  %v1090 = vmul.f32 %v1080, %v1088
  %s1091 = scalar_lea.vmem %s0, 16
  %v1092 = vld [vmem:[%s1091] sm:$0xff]
  %1094 = vset.pattern.permute.xlu0 0
  %1095 = vperm.xlu0 %1094, %v1092
  %v1096 = vpop.permute.xlu0 %1095
  %v1098 = vmul.f32 %v1096, %v306
  %v1099 = vmul.f32 %v1096, %v310
  %v1100 = vmul.f32 %v1096, %v314
  %v1101 = vmul.f32 %v1096, %v318
  %v1102 = vmul.f32 %v1096, %v322
  %v1103 = vmul.f32 %v1096, %v326
  %v1104 = vmul.f32 %v1096, %v330
  %v1105 = vmul.f32 %v1096, %v334
  %v1106 = vadd.f32 %v1098, %v355
  %v1107 = vadd.f32 %v1099, %v359
  %v1108 = vadd.f32 %v1100, %v363
  %v1109 = vadd.f32 %v1101, %v367
  %v1110 = vadd.f32 %v1102, %v371
  %v1111 = vadd.f32 %v1103, %v375
  %v1112 = vadd.f32 %v1104, %v379
  %v1113 = vadd.f32 %v1105, %v383
  %1114 = vmatprep.subr.mxu0 %v41
  %1115 = vmatpush1.msra.mxu0 %v40
  %1116 = vmatprep.subr.mxu0 %v49
  %1117 = vmatpush1.msra.mxu0 %v48
  %1118 = vmatprep.subr.mxu0 %v57
  %1119 = vmatpush1.msra.mxu0 %v56
  %1120 = vmatprep.subr.mxu0 %v65
  %1121 = vmatpush1.msra.mxu0 %v64
  %1122 = vmatprep.subr.mxu0 %v73
  %1123 = vmatpush1.msra.mxu0 %v72
  %1124 = vmatprep.subr.mxu0 %v81
  %1125 = vmatpush1.msra.mxu0 %v80
  %1126 = vmatprep.subr.mxu0 %v89
  %1127 = vmatpush1.msra.mxu0 %v88
  %1128 = vmatprep.subr.mxu0 %v97
  %1129 = vmatpush1.msra.mxu0 %v96
  %1130 = vmatprep.subr.mxu0 %v105
  %1131 = vmatpush1.msra.mxu0 %v104
  %1132 = vmatprep.subr.mxu0 %v113
  %1133 = vmatpush1.msra.mxu0 %v112
  %1134 = vmatprep.subr.mxu0 %v121
  %1135 = vmatpush1.msra.mxu0 %v120
  %1136 = vmatprep.subr.mxu0 %v129
  %1137 = vmatpush1.msra.mxu0 %v128
  %1138 = vmatprep.subr.mxu0 %v137
  %1139 = vmatpush1.msra.mxu0 %v136
  %1140 = vmatprep.subr.mxu0 %v145
  %1141 = vmatpush1.msra.mxu0 %v144
  %1142 = vmatprep.subr.mxu0 %v153
  %1143 = vmatpush1.msra.mxu0 %v152
  %1144 = vmatprep.subr.mxu0 %v161
  %1145 = vmatpush1.msra.mxu0 %v160
  %1146 = vmatprep.subr.mxu0 %v169
  %1147 = vmatpush1.msra.mxu0 %v168
  %1148 = vmatprep.subr.mxu0 %v177
  %1149 = vmatpush1.msra.mxu0 %v176
  %1150 = vmatprep.subr.mxu0 %v185
  %1151 = vmatpush1.msra.mxu0 %v184
  %1152 = vmatprep.subr.mxu0 %v193
  %1153 = vmatpush1.msra.mxu0 %v192
  %1154 = vmatprep.subr.mxu0 %v201
  %1155 = vmatpush1.msra.mxu0 %v200
  %1156 = vmatprep.subr.mxu0 %v209
  %1157 = vmatpush1.msra.mxu0 %v208
  %1158 = vmatprep.subr.mxu0 %v217
  %1159 = vmatpush1.msra.mxu0 %v216
  %1160 = vmatprep.subr.mxu0 %v225
  %1161 = vmatpush1.msra.mxu0 %v224
  %1162 = vmatprep.subr.mxu0 %v233
  %1163 = vmatpush1.msra.mxu0 %v232
  %1164 = vmatprep.subr.mxu0 %v241
  %1165 = vmatpush1.msra.mxu0 %v240
  %1166 = vmatprep.subr.mxu0 %v249
  %1167 = vmatpush1.msra.mxu0 %v248
  %1168 = vmatprep.subr.mxu0 %v257
  %1169 = vmatpush1.msra.mxu0 %v256
  %1170 = vmatprep.subr.mxu0 %v265
  %1171 = vmatpush1.msra.mxu0 %v264
  %1172 = vmatprep.subr.mxu0 %v273
  %1173 = vmatpush1.msra.mxu0 %v272
  %1174 = vmatprep.subr.mxu0 %v281
  %1175 = vmatpush1.msra.mxu0 %v280
  %1176 = vmatprep.subr.mxu0 %v289
  %1177 = vmatpush1.msra.mxu0 %v288
  %1178 = vmatprep.mubr.f32.mxu0 %v1090
  %1179 = vmatmul.mubr.f32.gmra.mrb[0].mxu0 %v1089
  %v1180 = vpop.f32.mrb[0].mxu0
  %v1181 = vadd.f32 0.0, %v1180
  %v1182 = vpop.f32.mrb[0].mxu0
  %v1183 = vadd.f32 0.0, %v1182
  %1184 = vdwg.mxu0
  %1185 = vmatprep.subr.mxu0 %v43
  %1186 = vmatpush1.msra.mxu0 %v42
  %1187 = vmatprep.subr.mxu0 %v51
  %1188 = vmatpush1.msra.mxu0 %v50
  %1189 = vmatprep.subr.mxu0 %v59
  %1190 = vmatpush1.msra.mxu0 %v58
  %1191 = vmatprep.subr.mxu0 %v67
  %1192 = vmatpush1.msra.mxu0 %v66
  %1193 = vmatprep.subr.mxu0 %v75
  %1194 = vmatpush1.msra.mxu0 %v74
  %1195 = vmatprep.subr.mxu0 %v83
  %1196 = vmatpush1.msra.mxu0 %v82
  %1197 = vmatprep.subr.mxu0 %v91
  %1198 = vmatpush1.msra.mxu0 %v90
  %1199 = vmatprep.subr.mxu0 %v99
  %1200 = vmatpush1.msra.mxu0 %v98
  %1201 = vmatprep.subr.mxu0 %v107
  %1202 = vmatpush1.msra.mxu0 %v106
  %1203 = vmatprep.subr.mxu0 %v115
  %1204 = vmatpush1.msra.mxu0 %v114
  %1205 = vmatprep.subr.mxu0 %v123
  %1206 = vmatpush1.msra.mxu0 %v122
  %1207 = vmatprep.subr.mxu0 %v131
  %1208 = vmatpush1.msra.mxu0 %v130
  %1209 = vmatprep.subr.mxu0 %v139
  %1210 = vmatpush1.msra.mxu0 %v138
  %1211 = vmatprep.subr.mxu0 %v147
  %1212 = vmatpush1.msra.mxu0 %v146
  %1213 = vmatprep.subr.mxu0 %v155
  %1214 = vmatpush1.msra.mxu0 %v154
  %1215 = vmatprep.subr.mxu0 %v163
  %1216 = vmatpush1.msra.mxu0 %v162
  %1217 = vmatprep.subr.mxu0 %v171
  %1218 = vmatpush1.msra.mxu0 %v170
  %1219 = vmatprep.subr.mxu0 %v179
  %1220 = vmatpush1.msra.mxu0 %v178
  %1221 = vmatprep.subr.mxu0 %v187
  %1222 = vmatpush1.msra.mxu0 %v186
  %1223 = vmatprep.subr.mxu0 %v195
  %1224 = vmatpush1.msra.mxu0 %v194
  %1225 = vmatprep.subr.mxu0 %v203
  %1226 = vmatpush1.msra.mxu0 %v202
  %1227 = vmatprep.subr.mxu0 %v211
  %1228 = vmatpush1.msra.mxu0 %v210
  %1229 = vmatprep.subr.mxu0 %v219
  %1230 = vmatpush1.msra.mxu0 %v218
  %1231 = vmatprep.subr.mxu0 %v227
  %1232 = vmatpush1.msra.mxu0 %v226
  %1233 = vmatprep.subr.mxu0 %v235
  %1234 = vmatpush1.msra.mxu0 %v234
  %1235 = vmatprep.subr.mxu0 %v243
  %1236 = vmatpush1.msra.mxu0 %v242
  %1237 = vmatprep.subr.mxu0 %v251
  %1238 = vmatpush1.msra.mxu0 %v250
  %1239 = vmatprep.subr.mxu0 %v259
  %1240 = vmatpush1.msra.mxu0 %v258
  %1241 = vmatprep.subr.mxu0 %v267
  %1242 = vmatpush1.msra.mxu0 %v266
  %1243 = vmatprep.subr.mxu0 %v275
  %1244 = vmatpush1.msra.mxu0 %v274
  %1245 = vmatprep.subr.mxu0 %v283
  %1246 = vmatpush1.msra.mxu0 %v282
  %1247 = vmatprep.subr.mxu0 %v291
  %1248 = vmatpush1.msra.mxu0 %v290
  %1249 = vmatprep.mubr.f32.mxu0 %v1090
  %1250 = vmatmul.mubr.f32.gmra.mrb[0].mxu0 %v1089
  %v1251 = vpop.f32.mrb[0].mxu0
  %v1252 = vadd.f32 0.0, %v1251
  %v1253 = vpop.f32.mrb[0].mxu0
  %v1254 = vadd.f32 0.0, %v1253
  %1255 = vdwg.mxu0
  %1256 = vmatprep.subr.mxu0 %v45
  %1257 = vmatpush1.msra.mxu0 %v44
  %1258 = vmatprep.subr.mxu0 %v53
  %1259 = vmatpush1.msra.mxu0 %v52
  %1260 = vmatprep.subr.mxu0 %v61
  %1261 = vmatpush1.msra.mxu0 %v60
  %1262 = vmatprep.subr.mxu0 %v69
  %1263 = vmatpush1.msra.mxu0 %v68
  %1264 = vmatprep.subr.mxu0 %v77
  %1265 = vmatpush1.msra.mxu0 %v76
  %1266 = vmatprep.subr.mxu0 %v85
  %1267 = vmatpush1.msra.mxu0 %v84
  %1268 = vmatprep.subr.mxu0 %v93
  %1269 = vmatpush1.msra.mxu0 %v92
  %1270 = vmatprep.subr.mxu0 %v101
  %1271 = vmatpush1.msra.mxu0 %v100
  %1272 = vmatprep.subr.mxu0 %v109
  %1273 = vmatpush1.msra.mxu0 %v108
  %1274 = vmatprep.subr.mxu0 %v117
  %1275 = vmatpush1.msra.mxu0 %v116
  %1276 = vmatprep.subr.mxu0 %v125
  %1277 = vmatpush1.msra.mxu0 %v124
  %1278 = vmatprep.subr.mxu0 %v133
  %1279 = vmatpush1.msra.mxu0 %v132
  %1280 = vmatprep.subr.mxu0 %v141
  %1281 = vmatpush1.msra.mxu0 %v140
  %1282 = vmatprep.subr.mxu0 %v149
  %1283 = vmatpush1.msra.mxu0 %v148
  %1284 = vmatprep.subr.mxu0 %v157
  %1285 = vmatpush1.msra.mxu0 %v156
  %1286 = vmatprep.subr.mxu0 %v165
  %1287 = vmatpush1.msra.mxu0 %v164
  %1288 = vmatprep.subr.mxu0 %v173
  %1289 = vmatpush1.msra.mxu0 %v172
  %1290 = vmatprep.subr.mxu0 %v181
  %1291 = vmatpush1.msra.mxu0 %v180
  %1292 = vmatprep.subr.mxu0 %v189
  %1293 = vmatpush1.msra.mxu0 %v188
  %1294 = vmatprep.subr.mxu0 %v197
  %1295 = vmatpush1.msra.mxu0 %v196
  %1296 = vmatprep.subr.mxu0 %v205
  %1297 = vmatpush1.msra.mxu0 %v204
  %1298 = vmatprep.subr.mxu0 %v213
  %1299 = vmatpush1.msra.mxu0 %v212
  %1300 = vmatprep.subr.mxu0 %v221
  %1301 = vmatpush1.msra.mxu0 %v220
  %1302 = vmatprep.subr.mxu0 %v229
  %1303 = vmatpush1.msra.mxu0 %v228
  %1304 = vmatprep.subr.mxu0 %v237
  %1305 = vmatpush1.msra.mxu0 %v236
  %1306 = vmatprep.subr.mxu0 %v245
  %1307 = vmatpush1.msra.mxu0 %v244
  %1308 = vmatprep.subr.mxu0 %v253
  %1309 = vmatpush1.msra.mxu0 %v252
  %1310 = vmatprep.subr.mxu0 %v261
  %1311 = vmatpush1.msra.mxu0 %v260
  %1312 = vmatprep.subr.mxu0 %v269
  %1313 = vmatpush1.msra.mxu0 %v268
  %1314 = vmatprep.subr.mxu0 %v277
  %1315 = vmatpush1.msra.mxu0 %v276
  %1316 = vmatprep.subr.mxu0 %v285
  %1317 = vmatpush1.msra.mxu0 %v284
  %1318 = vmatprep.subr.mxu0 %v293
  %1319 = vmatpush1.msra.mxu0 %v292
  %1320 = vmatprep.mubr.f32.mxu0 %v1090
  %1321 = vmatmul.mubr.f32.gmra.mrb[0].mxu0 %v1089
  %v1322 = vpop.f32.mrb[0].mxu0
  %v1323 = vadd.f32 0.0, %v1322
  %v1324 = vpop.f32.mrb[0].mxu0
  %v1325 = vadd.f32 0.0, %v1324
  %1326 = vdwg.mxu0
  %1327 = vmatprep.subr.mxu0 %v47
  %1328 = vmatpush1.msra.mxu0 %v46
  %1329 = vmatprep.subr.mxu0 %v55
  %1330 = vmatpush1.msra.mxu0 %v54
  %1331 = vmatprep.subr.mxu0 %v63
  %1332 = vmatpush1.msra.mxu0 %v62
  %1333 = vmatprep.subr.mxu0 %v71
  %1334 = vmatpush1.msra.mxu0 %v70
  %1335 = vmatprep.subr.mxu0 %v79
  %1336 = vmatpush1.msra.mxu0 %v78
  %1337 = vmatprep.subr.mxu0 %v87
  %1338 = vmatpush1.msra.mxu0 %v86
  %1339 = vmatprep.subr.mxu0 %v95
  %1340 = vmatpush1.msra.mxu0 %v94
  %1341 = vmatprep.subr.mxu0 %v103
  %1342 = vmatpush1.msra.mxu0 %v102
  %1343 = vmatprep.subr.mxu0 %v111
  %1344 = vmatpush1.msra.mxu0 %v110
  %1345 = vmatprep.subr.mxu0 %v119
  %1346 = vmatpush1.msra.mxu0 %v118
  %1347 = vmatprep.subr.mxu0 %v127
  %1348 = vmatpush1.msra.mxu0 %v126
  %1349 = vmatprep.subr.mxu0 %v135
  %1350 = vmatpush1.msra.mxu0 %v134
  %1351 = vmatprep.subr.mxu0 %v143
  %1352 = vmatpush1.msra.mxu0 %v142
  %1353 = vmatprep.subr.mxu0 %v151
  %1354 = vmatpush1.msra.mxu0 %v150
  %1355 = vmatprep.subr.mxu0 %v159
  %1356 = vmatpush1.msra.mxu0 %v158
  %1357 = vmatprep.subr.mxu0 %v167
  %1358 = vmatpush1.msra.mxu0 %v166
  %1359 = vmatprep.subr.mxu0 %v175
  %1360 = vmatpush1.msra.mxu0 %v174
  %1361 = vmatprep.subr.mxu0 %v183
  %1362 = vmatpush1.msra.mxu0 %v182
  %1363 = vmatprep.subr.mxu0 %v191
  %1364 = vmatpush1.msra.mxu0 %v190
  %1365 = vmatprep.subr.mxu0 %v199
  %1366 = vmatpush1.msra.mxu0 %v198
  %1367 = vmatprep.subr.mxu0 %v207
  %1368 = vmatpush1.msra.mxu0 %v206
  %1369 = vmatprep.subr.mxu0 %v215
  %1370 = vmatpush1.msra.mxu0 %v214
  %1371 = vmatprep.subr.mxu0 %v223
  %1372 = vmatpush1.msra.mxu0 %v222
  %1373 = vmatprep.subr.mxu0 %v231
  %1374 = vmatpush1.msra.mxu0 %v230
  %1375 = vmatprep.subr.mxu0 %v239
  %1376 = vmatpush1.msra.mxu0 %v238
  %1377 = vmatprep.subr.mxu0 %v247
  %1378 = vmatpush1.msra.mxu0 %v246
  %1379 = vmatprep.subr.mxu0 %v255
  %1380 = vmatpush1.msra.mxu0 %v254
  %1381 = vmatprep.subr.mxu0 %v263
  %1382 = vmatpush1.msra.mxu0 %v262
  %1383 = vmatprep.subr.mxu0 %v271
  %1384 = vmatpush1.msra.mxu0 %v270
  %1385 = vmatprep.subr.mxu0 %v279
  %1386 = vmatpush1.msra.mxu0 %v278
  %1387 = vmatprep.subr.mxu0 %v287
  %1388 = vmatpush1.msra.mxu0 %v286
  %1389 = vmatprep.subr.mxu0 %v295
  %1390 = vmatpush1.msra.mxu0 %v294
  %1391 = vmatprep.mubr.f32.mxu0 %v1090
  %1392 = vmatmul.mubr.f32.gmra.mrb[0].mxu0 %v1089
  %v1393 = vpop.f32.mrb[0].mxu0
  %v1394 = vadd.f32 0.0, %v1393
  %v1395 = vpop.f32.mrb[0].mxu0
  %v1396 = vadd.f32 0.0, %v1395
  %1397 = vdwg.mxu0
  %v1398 = vadd.f32 %v1106, %v1181
  %v1399 = vadd.f32 %v1107, %v1183
  %v1400 = vadd.f32 %v1108, %v1252
  %v1401 = vadd.f32 %v1109, %v1254
  %v1402 = vadd.f32 %v1110, %v1323
  %v1403 = vadd.f32 %v1111, %v1325
  %v1404 = vadd.f32 %v1112, %v1394
  %v1405 = vadd.f32 %v1113, %v1396
  %v1406 = vsub.f32 0.0, %v1398
  %v1407 = vsub.f32 0.0, %v1399
  %v1408 = vmul.f32 %v1406, 1.442695
  %v1409 = vpow.pop %v1408
  %v1410 = vmul.f32 %v1407, 1.442695
  %v1411 = vpow.pop %v1410
  %v1412 = vadd.f32 %v1409, 1.0
  %v1413 = vadd.f32 %v1411, 1.0
  %v1414 = vrcp.pop %v1412
  %v1415 = vrcp.pop %v1413
  %v1416 = vsub.f32 0.0, %v1400
  %v1417 = vsub.f32 0.0, %v1401
  %v1418 = vmul.f32 %v1416, 1.442695
  %v1419 = vpow.pop %v1418
  %v1420 = vmul.f32 %v1417, 1.442695
  %v1421 = vpow.pop %v1420
  %v1422 = vadd.f32 %v1419, 1.0
  %v1423 = vadd.f32 %v1421, 1.0
  %v1424 = vrcp.pop %v1422
  %v1425 = vrcp.pop %v1423
  %v1426 = vtanh.pop %v1402
  %v1427 = vtanh.pop %v1403
  %v1428 = vsub.f32 0.0, %v1404
  %v1429 = vsub.f32 0.0, %v1405
  %v1430 = vmul.f32 %v1428, 1.442695
  %v1431 = vpow.pop %v1430
  %v1432 = vmul.f32 %v1429, 1.442695
  %v1433 = vpow.pop %v1432
  %v1434 = vadd.f32 %v1431, 1.0
  %v1435 = vadd.f32 %v1433, 1.0
  %v1436 = vrcp.pop %v1434
  %v1437 = vrcp.pop %v1435
  %v1438 = vmul.f32 %v1424, %v1085
  %v1439 = vmul.f32 %v1425, %v1086
  %v1440 = vmul.f32 %v1414, %v1426
  %v1441 = vmul.f32 %v1415, %v1427
  %v1442 = vadd.f32 %v1438, %v1440
  %v1443 = vadd.f32 %v1439, %v1441
  %v1444 = vtanh.pop %v1442
  %v1445 = vtanh.pop %v1443
  %v1446 = vmul.f32 %v1436, %v1444
  %v1447 = vmul.f32 %v1437, %v1445
  %s1448 = scalar_lea.vmem %s0, 24
  %v1449 = vld [vmem:[%s1448] sm:$0xff]
  %1451 = vset.pattern.permute.xlu0 0
  %1452 = vperm.xlu0 %1451, %v1449
  %v1453 = vpop.permute.xlu0 %1452
  %v1455 = vmul.f32 %v1453, %v306
  %v1456 = vmul.f32 %v1453, %v310
  %v1457 = vmul.f32 %v1453, %v314
  %v1458 = vmul.f32 %v1453, %v318
  %v1459 = vmul.f32 %v1453, %v322
  %v1460 = vmul.f32 %v1453, %v326
  %v1461 = vmul.f32 %v1453, %v330
  %v1462 = vmul.f32 %v1453, %v334
  %v1463 = vadd.f32 %v1455, %v355
  %v1464 = vadd.f32 %v1456, %v359
  %v1465 = vadd.f32 %v1457, %v363
  %v1466 = vadd.f32 %v1458, %v367
  %v1467 = vadd.f32 %v1459, %v371
  %v1468 = vadd.f32 %v1460, %v375
  %v1469 = vadd.f32 %v1461, %v379
  %v1470 = vadd.f32 %v1462, %v383
  %1471 = vmatprep.subr.mxu0 %v41
  %1472 = vmatpush1.msra.mxu0 %v40
  %1473 = vmatprep.subr.mxu0 %v49
  %1474 = vmatpush1.msra.mxu0 %v48
  %1475 = vmatprep.subr.mxu0 %v57
  %1476 = vmatpush1.msra.mxu0 %v56
  %1477 = vmatprep.subr.mxu0 %v65
  %1478 = vmatpush1.msra.mxu0 %v64
  %1479 = vmatprep.subr.mxu0 %v73
  %1480 = vmatpush1.msra.mxu0 %v72
  %1481 = vmatprep.subr.mxu0 %v81
  %1482 = vmatpush1.msra.mxu0 %v80
  %1483 = vmatprep.subr.mxu0 %v89
  %1484 = vmatpush1.msra.mxu0 %v88
  %1485 = vmatprep.subr.mxu0 %v97
  %1486 = vmatpush1.msra.mxu0 %v96
  %1487 = vmatprep.subr.mxu0 %v105
  %1488 = vmatpush1.msra.mxu0 %v104
  %1489 = vmatprep.subr.mxu0 %v113
  %1490 = vmatpush1.msra.mxu0 %v112
  %1491 = vmatprep.subr.mxu0 %v121
  %1492 = vmatpush1.msra.mxu0 %v120
  %1493 = vmatprep.subr.mxu0 %v129
  %1494 = vmatpush1.msra.mxu0 %v128
  %1495 = vmatprep.subr.mxu0 %v137
  %1496 = vmatpush1.msra.mxu0 %v136
  %1497 = vmatprep.subr.mxu0 %v145
  %1498 = vmatpush1.msra.mxu0 %v144
  %1499 = vmatprep.subr.mxu0 %v153
  %1500 = vmatpush1.msra.mxu0 %v152
  %1501 = vmatprep.subr.mxu0 %v161
  %1502 = vmatpush1.msra.mxu0 %v160
  %1503 = vmatprep.subr.mxu0 %v169
  %1504 = vmatpush1.msra.mxu0 %v168
  %1505 = vmatprep.subr.mxu0 %v177
  %1506 = vmatpush1.msra.mxu0 %v176
  %1507 = vmatprep.subr.mxu0 %v185
  %1508 = vmatpush1.msra.mxu0 %v184
  %1509 = vmatprep.subr.mxu0 %v193
  %1510 = vmatpush1.msra.mxu0 %v192
  %1511 = vmatprep.subr.mxu0 %v201
  %1512 = vmatpush1.msra.mxu0 %v200
  %1513 = vmatprep.subr.mxu0 %v209
  %1514 = vmatpush1.msra.mxu0 %v208
  %1515 = vmatprep.subr.mxu0 %v217
  %1516 = vmatpush1.msra.mxu0 %v216
  %1517 = vmatprep.subr.mxu0 %v225
  %1518 = vmatpush1.msra.mxu0 %v224
  %1519 = vmatprep.subr.mxu0 %v233
  %1520 = vmatpush1.msra.mxu0 %v232
  %1521 = vmatprep.subr.mxu0 %v241
  %1522 = vmatpush1.msra.mxu0 %v240
  %1523 = vmatprep.subr.mxu0 %v249
  %1524 = vmatpush1.msra.mxu0 %v248
  %1525 = vmatprep.subr.mxu0 %v257
  %1526 = vmatpush1.msra.mxu0 %v256
  %1527 = vmatprep.subr.mxu0 %v265
  %1528 = vmatpush1.msra.mxu0 %v264
  %1529 = vmatprep.subr.mxu0 %v273
  %1530 = vmatpush1.msra.mxu0 %v272
  %1531 = vmatprep.subr.mxu0 %v281
  %1532 = vmatpush1.msra.mxu0 %v280
  %1533 = vmatprep.subr.mxu0 %v289
  %1534 = vmatpush1.msra.mxu0 %v288
  %1535 = vmatprep.mubr.f32.mxu0 %v1447
  %1536 = vmatmul.mubr.f32.gmra.mrb[0].mxu0 %v1446
  %v1537 = vpop.f32.mrb[0].mxu0
  %v1538 = vadd.f32 0.0, %v1537
  %v1539 = vpop.f32.mrb[0].mxu0
  %v1540 = vadd.f32 0.0, %v1539
  %1541 = vdwg.mxu0
  %1542 = vmatprep.subr.mxu0 %v43
  %1543 = vmatpush1.msra.mxu0 %v42
  %1544 = vmatprep.subr.mxu0 %v51
  %1545 = vmatpush1.msra.mxu0 %v50
  %1546 = vmatprep.subr.mxu0 %v59
  %1547 = vmatpush1.msra.mxu0 %v58
  %1548 = vmatprep.subr.mxu0 %v67
  %1549 = vmatpush1.msra.mxu0 %v66
  %1550 = vmatprep.subr.mxu0 %v75
  %1551 = vmatpush1.msra.mxu0 %v74
  %1552 = vmatprep.subr.mxu0 %v83
  %1553 = vmatpush1.msra.mxu0 %v82
  %1554 = vmatprep.subr.mxu0 %v91
  %1555 = vmatpush1.msra.mxu0 %v90
  %1556 = vmatprep.subr.mxu0 %v99
  %1557 = vmatpush1.msra.mxu0 %v98
  %1558 = vmatprep.subr.mxu0 %v107
  %1559 = vmatpush1.msra.mxu0 %v106
  %1560 = vmatprep.subr.mxu0 %v115
  %1561 = vmatpush1.msra.mxu0 %v114
  %1562 = vmatprep.subr.mxu0 %v123
  %1563 = vmatpush1.msra.mxu0 %v122
  %1564 = vmatprep.subr.mxu0 %v131
  %1565 = vmatpush1.msra.mxu0 %v130
  %1566 = vmatprep.subr.mxu0 %v139
  %1567 = vmatpush1.msra.mxu0 %v138
  %1568 = vmatprep.subr.mxu0 %v147
  %1569 = vmatpush1.msra.mxu0 %v146
  %1570 = vmatprep.subr.mxu0 %v155
  %1571 = vmatpush1.msra.mxu0 %v154
  %1572 = vmatprep.subr.mxu0 %v163
  %1573 = vmatpush1.msra.mxu0 %v162
  %1574 = vmatprep.subr.mxu0 %v171
  %1575 = vmatpush1.msra.mxu0 %v170
  %1576 = vmatprep.subr.mxu0 %v179
  %1577 = vmatpush1.msra.mxu0 %v178
  %1578 = vmatprep.subr.mxu0 %v187
  %1579 = vmatpush1.msra.mxu0 %v186
  %1580 = vmatprep.subr.mxu0 %v195
  %1581 = vmatpush1.msra.mxu0 %v194
  %1582 = vmatprep.subr.mxu0 %v203
  %1583 = vmatpush1.msra.mxu0 %v202
  %1584 = vmatprep.subr.mxu0 %v211
  %1585 = vmatpush1.msra.mxu0 %v210
  %1586 = vmatprep.subr.mxu0 %v219
  %1587 = vmatpush1.msra.mxu0 %v218
  %1588 = vmatprep.subr.mxu0 %v227
  %1589 = vmatpush1.msra.mxu0 %v226
  %1590 = vmatprep.subr.mxu0 %v235
  %1591 = vmatpush1.msra.mxu0 %v234
  %1592 = vmatprep.subr.mxu0 %v243
  %1593 = vmatpush1.msra.mxu0 %v242
  %1594 = vmatprep.subr.mxu0 %v251
  %1595 = vmatpush1.msra.mxu0 %v250
  %1596 = vmatprep.subr.mxu0 %v259
  %1597 = vmatpush1.msra.mxu0 %v258
  %1598 = vmatprep.subr.mxu0 %v267
  %1599 = vmatpush1.msra.mxu0 %v266
  %1600 = vmatprep.subr.mxu0 %v275
  %1601 = vmatpush1.msra.mxu0 %v274
  %1602 = vmatprep.subr.mxu0 %v283
  %1603 = vmatpush1.msra.mxu0 %v282
  %1604 = vmatprep.subr.mxu0 %v291
  %1605 = vmatpush1.msra.mxu0 %v290
  %1606 = vmatprep.mubr.f32.mxu0 %v1447
  %1607 = vmatmul.mubr.f32.gmra.mrb[0].mxu0 %v1446
  %v1608 = vpop.f32.mrb[0].mxu0
  %v1609 = vadd.f32 0.0, %v1608
  %v1610 = vpop.f32.mrb[0].mxu0
  %v1611 = vadd.f32 0.0, %v1610
  %1612 = vdwg.mxu0
  %1613 = vmatprep.subr.mxu0 %v45
  %1614 = vmatpush1.msra.mxu0 %v44
  %1615 = vmatprep.subr.mxu0 %v53
  %1616 = vmatpush1.msra.mxu0 %v52
  %1617 = vmatprep.subr.mxu0 %v61
  %1618 = vmatpush1.msra.mxu0 %v60
  %1619 = vmatprep.subr.mxu0 %v69
  %1620 = vmatpush1.msra.mxu0 %v68
  %1621 = vmatprep.subr.mxu0 %v77
  %1622 = vmatpush1.msra.mxu0 %v76
  %1623 = vmatprep.subr.mxu0 %v85
  %1624 = vmatpush1.msra.mxu0 %v84
  %1625 = vmatprep.subr.mxu0 %v93
  %1626 = vmatpush1.msra.mxu0 %v92
  %1627 = vmatprep.subr.mxu0 %v101
  %1628 = vmatpush1.msra.mxu0 %v100
  %1629 = vmatprep.subr.mxu0 %v109
  %1630 = vmatpush1.msra.mxu0 %v108
  %1631 = vmatprep.subr.mxu0 %v117
  %1632 = vmatpush1.msra.mxu0 %v116
  %1633 = vmatprep.subr.mxu0 %v125
  %1634 = vmatpush1.msra.mxu0 %v124
  %1635 = vmatprep.subr.mxu0 %v133
  %1636 = vmatpush1.msra.mxu0 %v132
  %1637 = vmatprep.subr.mxu0 %v141
  %1638 = vmatpush1.msra.mxu0 %v140
  %1639 = vmatprep.subr.mxu0 %v149
  %1640 = vmatpush1.msra.mxu0 %v148
  %1641 = vmatprep.subr.mxu0 %v157
  %1642 = vmatpush1.msra.mxu0 %v156
  %1643 = vmatprep.subr.mxu0 %v165
  %1644 = vmatpush1.msra.mxu0 %v164
  %1645 = vmatprep.subr.mxu0 %v173
  %1646 = vmatpush1.msra.mxu0 %v172
  %1647 = vmatprep.subr.mxu0 %v181
  %1648 = vmatpush1.msra.mxu0 %v180
  %1649 = vmatprep.subr.mxu0 %v189
  %1650 = vmatpush1.msra.mxu0 %v188
  %1651 = vmatprep.subr.mxu0 %v197
  %1652 = vmatpush1.msra.mxu0 %v196
  %1653 = vmatprep.subr.mxu0 %v205
  %1654 = vmatpush1.msra.mxu0 %v204
  %1655 = vmatprep.subr.mxu0 %v213
  %1656 = vmatpush1.msra.mxu0 %v212
  %1657 = vmatprep.subr.mxu0 %v221
  %1658 = vmatpush1.msra.mxu0 %v220
  %1659 = vmatprep.subr.mxu0 %v229
  %1660 = vmatpush1.msra.mxu0 %v228
  %1661 = vmatprep.subr.mxu0 %v237
  %1662 = vmatpush1.msra.mxu0 %v236
  %1663 = vmatprep.subr.mxu0 %v245
  %1664 = vmatpush1.msra.mxu0 %v244
  %1665 = vmatprep.subr.mxu0 %v253
  %1666 = vmatpush1.msra.mxu0 %v252
  %1667 = vmatprep.subr.mxu0 %v261
  %1668 = vmatpush1.msra.mxu0 %v260
  %1669 = vmatprep.subr.mxu0 %v269
  %1670 = vmatpush1.msra.mxu0 %v268
  %1671 = vmatprep.subr.mxu0 %v277
  %1672 = vmatpush1.msra.mxu0 %v276
  %1673 = vmatprep.subr.mxu0 %v285
  %1674 = vmatpush1.msra.mxu0 %v284
  %1675 = vmatprep.subr.mxu0 %v293
  %1676 = vmatpush1.msra.mxu0 %v292
  %1677 = vmatprep.mubr.f32.mxu0 %v1447
  %1678 = vmatmul.mubr.f32.gmra.mrb[0].mxu0 %v1446
  %v1679 = vpop.f32.mrb[0].mxu0
  %v1680 = vadd.f32 0.0, %v1679
  %v1681 = vpop.f32.mrb[0].mxu0
  %v1682 = vadd.f32 0.0, %v1681
  %1683 = vdwg.mxu0
  %1684 = vmatprep.subr.mxu0 %v47
  %1685 = vmatpush1.msra.mxu0 %v46
  %1686 = vmatprep.subr.mxu0 %v55
  %1687 = vmatpush1.msra.mxu0 %v54
  %1688 = vmatprep.subr.mxu0 %v63
  %1689 = vmatpush1.msra.mxu0 %v62
  %1690 = vmatprep.subr.mxu0 %v71
  %1691 = vmatpush1.msra.mxu0 %v70
  %1692 = vmatprep.subr.mxu0 %v79
  %1693 = vmatpush1.msra.mxu0 %v78
  %1694 = vmatprep.subr.mxu0 %v87
  %1695 = vmatpush1.msra.mxu0 %v86
  %1696 = vmatprep.subr.mxu0 %v95
  %1697 = vmatpush1.msra.mxu0 %v94
  %1698 = vmatprep.subr.mxu0 %v103
  %1699 = vmatpush1.msra.mxu0 %v102
  %1700 = vmatprep.subr.mxu0 %v111
  %1701 = vmatpush1.msra.mxu0 %v110
  %1702 = vmatprep.subr.mxu0 %v119
  %1703 = vmatpush1.msra.mxu0 %v118
  %1704 = vmatprep.subr.mxu0 %v127
  %1705 = vmatpush1.msra.mxu0 %v126
  %1706 = vmatprep.subr.mxu0 %v135
  %1707 = vmatpush1.msra.mxu0 %v134
  %1708 = vmatprep.subr.mxu0 %v143
  %1709 = vmatpush1.msra.mxu0 %v142
  %1710 = vmatprep.subr.mxu0 %v151
  %1711 = vmatpush1.msra.mxu0 %v150
  %1712 = vmatprep.subr.mxu0 %v159
  %1713 = vmatpush1.msra.mxu0 %v158
  %1714 = vmatprep.subr.mxu0 %v167
  %1715 = vmatpush1.msra.mxu0 %v166
  %1716 = vmatprep.subr.mxu0 %v175
  %1717 = vmatpush1.msra.mxu0 %v174
  %1718 = vmatprep.subr.mxu0 %v183
  %1719 = vmatpush1.msra.mxu0 %v182
  %1720 = vmatprep.subr.mxu0 %v191
  %1721 = vmatpush1.msra.mxu0 %v190
  %1722 = vmatprep.subr.mxu0 %v199
  %1723 = vmatpush1.msra.mxu0 %v198
  %1724 = vmatprep.subr.mxu0 %v207
  %1725 = vmatpush1.msra.mxu0 %v206
  %1726 = vmatprep.subr.mxu0 %v215
  %1727 = vmatpush1.msra.mxu0 %v214
  %1728 = vmatprep.subr.mxu0 %v223
  %1729 = vmatpush1.msra.mxu0 %v222
  %1730 = vmatprep.subr.mxu0 %v231
  %1731 = vmatpush1.msra.mxu0 %v230
  %1732 = vmatprep.subr.mxu0 %v239
  %1733 = vmatpush1.msra.mxu0 %v238
  %1734 = vmatprep.subr.mxu0 %v247
  %1735 = vmatpush1.msra.mxu0 %v246
  %1736 = vmatprep.subr.mxu0 %v255
  %1737 = vmatpush1.msra.mxu0 %v254
  %1738 = vmatprep.subr.mxu0 %v263
  %1739 = vmatpush1.msra.mxu0 %v262
  %1740 = vmatprep.subr.mxu0 %v271
  %1741 = vmatpush1.msra.mxu0 %v270
  %1742 = vmatprep.subr.mxu0 %v279
  %1743 = vmatpush1.msra.mxu0 %v278
  %1744 = vmatprep.subr.mxu0 %v287
  %1745 = vmatpush1.msra.mxu0 %v286
  %1746 = vmatprep.subr.mxu0 %v295
  %1747 = vmatpush1.msra.mxu0 %v294
  %1748 = vmatprep.mubr.f32.mxu0 %v1447
  %1749 = vmatmul.mubr.f32.gmra.mrb[0].mxu0 %v1446
  %v1750 = vpop.f32.mrb[0].mxu0
  %v1751 = vadd.f32 0.0, %v1750
  %v1752 = vpop.f32.mrb[0].mxu0
  %v1753 = vadd.f32 0.0, %v1752
  %1754 = vdwg.mxu0
  %v1755 = vadd.f32 %v1463, %v1538
  %v1756 = vadd.f32 %v1464, %v1540
  %v1757 = vadd.f32 %v1465, %v1609
  %v1758 = vadd.f32 %v1466, %v1611
  %v1759 = vadd.f32 %v1467, %v1680
  %v1760 = vadd.f32 %v1468, %v1682
  %v1761 = vadd.f32 %v1469, %v1751
  %v1762 = vadd.f32 %v1470, %v1753
  %v1763 = vsub.f32 0.0, %v1755
  %v1764 = vsub.f32 0.0, %v1756
  %v1765 = vmul.f32 %v1763, 1.442695
  %v1766 = vpow.pop %v1765
  %v1767 = vmul.f32 %v1764, 1.442695
  %v1768 = vpow.pop %v1767
  %v1769 = vadd.f32 %v1766, 1.0
  %v1770 = vadd.f32 %v1768, 1.0
  %v1771 = vrcp.pop %v1769
  %v1772 = vrcp.pop %v1770
  %v1773 = vsub.f32 0.0, %v1757
  %v1774 = vsub.f32 0.0, %v1758
  %v1775 = vmul.f32 %v1773, 1.442695
  %v1776 = vpow.pop %v1775
  %v1777 = vmul.f32 %v1774, 1.442695
  %v1778 = vpow.pop %v1777
  %v1779 = vadd.f32 %v1776, 1.0
  %v1780 = vadd.f32 %v1778, 1.0
  %v1781 = vrcp.pop %v1779
  %v1782 = vrcp.pop %v1780
  %v1783 = vtanh.pop %v1759
  %v1784 = vtanh.pop %v1760
  %v1785 = vsub.f32 0.0, %v1761
  %v1786 = vsub.f32 0.0, %v1762
  %v1787 = vmul.f32 %v1785, 1.442695
  %v1788 = vpow.pop %v1787
  %v1789 = vmul.f32 %v1786, 1.442695
  %v1790 = vpow.pop %v1789
  %v1791 = vadd.f32 %v1788, 1.0
  %v1792 = vadd.f32 %v1790, 1.0
  %v1793 = vrcp.pop %v1791
  %v1794 = vrcp.pop %v1792
  %v1795 = vmul.f32 %v1781, %v1442
  %v1796 = vmul.f32 %v1782, %v1443
  %v1797 = vmul.f32 %v1771, %v1783
  %v1798 = vmul.f32 %v1772, %v1784
  %v1799 = vadd.f32 %v1795, %v1797
  %v1800 = vadd.f32 %v1796, %v1798
  %v1801 = vtanh.pop %v1799
  %v1802 = vtanh.pop %v1800
  %v1803 = vmul.f32 %v1793, %v1801
  %v1804 = vmul.f32 %v1794, %v1802
  %s1805 = scalar_lea.vmem %s0, 32
  %v1806 = vld [vmem:[%s1805] sm:$0xff]
  %1808 = vset.pattern.permute.xlu0 0
  %1809 = vperm.xlu0 %1808, %v1806
  %v1810 = vpop.permute.xlu0 %1809
  %v1812 = vmul.f32 %v1810, %v306
  %v1813 = vmul.f32 %v1810, %v310
  %v1814 = vmul.f32 %v1810, %v314
  %v1815 = vmul.f32 %v1810, %v318
  %v1816 = vmul.f32 %v1810, %v322
  %v1817 = vmul.f32 %v1810, %v326
  %v1818 = vmul.f32 %v1810, %v330
  %v1819 = vmul.f32 %v1810, %v334
  %v1820 = vadd.f32 %v1812, %v355
  %v1821 = vadd.f32 %v1813, %v359
  %v1822 = vadd.f32 %v1814, %v363
  %v1823 = vadd.f32 %v1815, %v367
  %v1824 = vadd.f32 %v1816, %v371
  %v1825 = vadd.f32 %v1817, %v375
  %v1826 = vadd.f32 %v1818, %v379
  %v1827 = vadd.f32 %v1819, %v383
  %1828 = vmatprep.subr.mxu0 %v41
  %1829 = vmatpush1.msra.mxu0 %v40
  %1830 = vmatprep.subr.mxu0 %v49
  %1831 = vmatpush1.msra.mxu0 %v48
  %1832 = vmatprep.subr.mxu0 %v57
  %1833 = vmatpush1.msra.mxu0 %v56
  %1834 = vmatprep.subr.mxu0 %v65
  %1835 = vmatpush1.msra.mxu0 %v64
  %1836 = vmatprep.subr.mxu0 %v73
  %1837 = vmatpush1.msra.mxu0 %v72
  %1838 = vmatprep.subr.mxu0 %v81
  %1839 = vmatpush1.msra.mxu0 %v80
  %1840 = vmatprep.subr.mxu0 %v89
  %1841 = vmatpush1.msra.mxu0 %v88
  %1842 = vmatprep.subr.mxu0 %v97
  %1843 = vmatpush1.msra.mxu0 %v96
  %1844 = vmatprep.subr.mxu0 %v105
  %1845 = vmatpush1.msra.mxu0 %v104
  %1846 = vmatprep.subr.mxu0 %v113
  %1847 = vmatpush1.msra.mxu0 %v112
  %1848 = vmatprep.subr.mxu0 %v121
  %1849 = vmatpush1.msra.mxu0 %v120
  %1850 = vmatprep.subr.mxu0 %v129
  %1851 = vmatpush1.msra.mxu0 %v128
  %1852 = vmatprep.subr.mxu0 %v137
  %1853 = vmatpush1.msra.mxu0 %v136
  %1854 = vmatprep.subr.mxu0 %v145
  %1855 = vmatpush1.msra.mxu0 %v144
  %1856 = vmatprep.subr.mxu0 %v153
  %1857 = vmatpush1.msra.mxu0 %v152
  %1858 = vmatprep.subr.mxu0 %v161
  %1859 = vmatpush1.msra.mxu0 %v160
  %1860 = vmatprep.subr.mxu0 %v169
  %1861 = vmatpush1.msra.mxu0 %v168
  %1862 = vmatprep.subr.mxu0 %v177
  %1863 = vmatpush1.msra.mxu0 %v176
  %1864 = vmatprep.subr.mxu0 %v185
  %1865 = vmatpush1.msra.mxu0 %v184
  %1866 = vmatprep.subr.mxu0 %v193
  %1867 = vmatpush1.msra.mxu0 %v192
  %1868 = vmatprep.subr.mxu0 %v201
  %1869 = vmatpush1.msra.mxu0 %v200
  %1870 = vmatprep.subr.mxu0 %v209
  %1871 = vmatpush1.msra.mxu0 %v208
  %1872 = vmatprep.subr.mxu0 %v217
  %1873 = vmatpush1.msra.mxu0 %v216
  %1874 = vmatprep.subr.mxu0 %v225
  %1875 = vmatpush1.msra.mxu0 %v224
  %1876 = vmatprep.subr.mxu0 %v233
  %1877 = vmatpush1.msra.mxu0 %v232
  %1878 = vmatprep.subr.mxu0 %v241
  %1879 = vmatpush1.msra.mxu0 %v240
  %1880 = vmatprep.subr.mxu0 %v249
  %1881 = vmatpush1.msra.mxu0 %v248
  %1882 = vmatprep.subr.mxu0 %v257
  %1883 = vmatpush1.msra.mxu0 %v256
  %1884 = vmatprep.subr.mxu0 %v265
  %1885 = vmatpush1.msra.mxu0 %v264
  %1886 = vmatprep.subr.mxu0 %v273
  %1887 = vmatpush1.msra.mxu0 %v272
  %1888 = vmatprep.subr.mxu0 %v281
  %1889 = vmatpush1.msra.mxu0 %v280
  %1890 = vmatprep.subr.mxu0 %v289
  %1891 = vmatpush1.msra.mxu0 %v288
  %1892 = vmatprep.mubr.f32.mxu0 %v1804
  %1893 = vmatmul.mubr.f32.gmra.mrb[0].mxu0 %v1803
  %v1894 = vpop.f32.mrb[0].mxu0
  %v1895 = vadd.f32 0.0, %v1894
  %v1896 = vpop.f32.mrb[0].mxu0
  %v1897 = vadd.f32 0.0, %v1896
  %1898 = vdwg.mxu0
  %1899 = vmatprep.subr.mxu0 %v43
  %1900 = vmatpush1.msra.mxu0 %v42
  %1901 = vmatprep.subr.mxu0 %v51
  %1902 = vmatpush1.msra.mxu0 %v50
  %1903 = vmatprep.subr.mxu0 %v59
  %1904 = vmatpush1.msra.mxu0 %v58
  %1905 = vmatprep.subr.mxu0 %v67
  %1906 = vmatpush1.msra.mxu0 %v66
  %1907 = vmatprep.subr.mxu0 %v75
  %1908 = vmatpush1.msra.mxu0 %v74
  %1909 = vmatprep.subr.mxu0 %v83
  %1910 = vmatpush1.msra.mxu0 %v82
  %1911 = vmatprep.subr.mxu0 %v91
  %1912 = vmatpush1.msra.mxu0 %v90
  %1913 = vmatprep.subr.mxu0 %v99
  %1914 = vmatpush1.msra.mxu0 %v98
  %1915 = vmatprep.subr.mxu0 %v107
  %1916 = vmatpush1.msra.mxu0 %v106
  %1917 = vmatprep.subr.mxu0 %v115
  %1918 = vmatpush1.msra.mxu0 %v114
  %1919 = vmatprep.subr.mxu0 %v123
  %1920 = vmatpush1.msra.mxu0 %v122
  %1921 = vmatprep.subr.mxu0 %v131
  %1922 = vmatpush1.msra.mxu0 %v130
  %1923 = vmatprep.subr.mxu0 %v139
  %1924 = vmatpush1.msra.mxu0 %v138
  %1925 = vmatprep.subr.mxu0 %v147
  %1926 = vmatpush1.msra.mxu0 %v146
  %1927 = vmatprep.subr.mxu0 %v155
  %1928 = vmatpush1.msra.mxu0 %v154
  %1929 = vmatprep.subr.mxu0 %v163
  %1930 = vmatpush1.msra.mxu0 %v162
  %1931 = vmatprep.subr.mxu0 %v171
  %1932 = vmatpush1.msra.mxu0 %v170
  %1933 = vmatprep.subr.mxu0 %v179
  %1934 = vmatpush1.msra.mxu0 %v178
  %1935 = vmatprep.subr.mxu0 %v187
  %1936 = vmatpush1.msra.mxu0 %v186
  %1937 = vmatprep.subr.mxu0 %v195
  %1938 = vmatpush1.msra.mxu0 %v194
  %1939 = vmatprep.subr.mxu0 %v203
  %1940 = vmatpush1.msra.mxu0 %v202
  %1941 = vmatprep.subr.mxu0 %v211
  %1942 = vmatpush1.msra.mxu0 %v210
  %1943 = vmatprep.subr.mxu0 %v219
  %1944 = vmatpush1.msra.mxu0 %v218
  %1945 = vmatprep.subr.mxu0 %v227
  %1946 = vmatpush1.msra.mxu0 %v226
  %1947 = vmatprep.subr.mxu0 %v235
  %1948 = vmatpush1.msra.mxu0 %v234
  %1949 = vmatprep.subr.mxu0 %v243
  %1950 = vmatpush1.msra.mxu0 %v242
  %1951 = vmatprep.subr.mxu0 %v251
  %1952 = vmatpush1.msra.mxu0 %v250
  %1953 = vmatprep.subr.mxu0 %v259
  %1954 = vmatpush1.msra.mxu0 %v258
  %1955 = vmatprep.subr.mxu0 %v267
  %1956 = vmatpush1.msra.mxu0 %v266
  %1957 = vmatprep.subr.mxu0 %v275
  %1958 = vmatpush1.msra.mxu0 %v274
  %1959 = vmatprep.subr.mxu0 %v283
  %1960 = vmatpush1.msra.mxu0 %v282
  %1961 = vmatprep.subr.mxu0 %v291
  %1962 = vmatpush1.msra.mxu0 %v290
  %1963 = vmatprep.mubr.f32.mxu0 %v1804
  %1964 = vmatmul.mubr.f32.gmra.mrb[0].mxu0 %v1803
  %v1965 = vpop.f32.mrb[0].mxu0
  %v1966 = vadd.f32 0.0, %v1965
  %v1967 = vpop.f32.mrb[0].mxu0
  %v1968 = vadd.f32 0.0, %v1967
  %1969 = vdwg.mxu0
  %1970 = vmatprep.subr.mxu0 %v45
  %1971 = vmatpush1.msra.mxu0 %v44
  %1972 = vmatprep.subr.mxu0 %v53
  %1973 = vmatpush1.msra.mxu0 %v52
  %1974 = vmatprep.subr.mxu0 %v61
  %1975 = vmatpush1.msra.mxu0 %v60
  %1976 = vmatprep.subr.mxu0 %v69
  %1977 = vmatpush1.msra.mxu0 %v68
  %1978 = vmatprep.subr.mxu0 %v77
  %1979 = vmatpush1.msra.mxu0 %v76
  %1980 = vmatprep.subr.mxu0 %v85
  %1981 = vmatpush1.msra.mxu0 %v84
  %1982 = vmatprep.subr.mxu0 %v93
  %1983 = vmatpush1.msra.mxu0 %v92
  %1984 = vmatprep.subr.mxu0 %v101
  %1985 = vmatpush1.msra.mxu0 %v100
  %1986 = vmatprep.subr.mxu0 %v109
  %1987 = vmatpush1.msra.mxu0 %v108
  %1988 = vmatprep.subr.mxu0 %v117
  %1989 = vmatpush1.msra.mxu0 %v116
  %1990 = vmatprep.subr.mxu0 %v125
  %1991 = vmatpush1.msra.mxu0 %v124
  %1992 = vmatprep.subr.mxu0 %v133
  %1993 = vmatpush1.msra.mxu0 %v132
  %1994 = vmatprep.subr.mxu0 %v141
  %1995 = vmatpush1.msra.mxu0 %v140
  %1996 = vmatprep.subr.mxu0 %v149
  %1997 = vmatpush1.msra.mxu0 %v148
  %1998 = vmatprep.subr.mxu0 %v157
  %1999 = vmatpush1.msra.mxu0 %v156
  %2000 = vmatprep.subr.mxu0 %v165
  %2001 = vmatpush1.msra.mxu0 %v164
  %2002 = vmatprep.subr.mxu0 %v173
  %2003 = vmatpush1.msra.mxu0 %v172
  %2004 = vmatprep.subr.mxu0 %v181
  %2005 = vmatpush1.msra.mxu0 %v180
  %2006 = vmatprep.subr.mxu0 %v189
  %2007 = vmatpush1.msra.mxu0 %v188
  %2008 = vmatprep.subr.mxu0 %v197
  %2009 = vmatpush1.msra.mxu0 %v196
  %2010 = vmatprep.subr.mxu0 %v205
  %2011 = vmatpush1.msra.mxu0 %v204
  %2012 = vmatprep.subr.mxu0 %v213
  %2013 = vmatpush1.msra.mxu0 %v212
  %2014 = vmatprep.subr.mxu0 %v221
  %2015 = vmatpush1.msra.mxu0 %v220
  %2016 = vmatprep.subr.mxu0 %v229
  %2017 = vmatpush1.msra.mxu0 %v228
  %2018 = vmatprep.subr.mxu0 %v237
  %2019 = vmatpush1.msra.mxu0 %v236
  %2020 = vmatprep.subr.mxu0 %v245
  %2021 = vmatpush1.msra.mxu0 %v244
  %2022 = vmatprep.subr.mxu0 %v253
  %2023 = vmatpush1.msra.mxu0 %v252
  %2024 = vmatprep.subr.mxu0 %v261
  %2025 = vmatpush1.msra.mxu0 %v260
  %2026 = vmatprep.subr.mxu0 %v269
  %2027 = vmatpush1.msra.mxu0 %v268
  %2028 = vmatprep.subr.mxu0 %v277
  %2029 = vmatpush1.msra.mxu0 %v276
  %2030 = vmatprep.subr.mxu0 %v285
  %2031 = vmatpush1.msra.mxu0 %v284
  %2032 = vmatprep.subr.mxu0 %v293
  %2033 = vmatpush1.msra.mxu0 %v292
  %2034 = vmatprep.mubr.f32.mxu0 %v1804
  %2035 = vmatmul.mubr.f32.gmra.mrb[0].mxu0 %v1803
  %v2036 = vpop.f32.mrb[0].mxu0
  %v2037 = vadd.f32 0.0, %v2036
  %v2038 = vpop.f32.mrb[0].mxu0
  %v2039 = vadd.f32 0.0, %v2038
  %2040 = vdwg.mxu0
  %2041 = vmatprep.subr.mxu0 %v47
  %2042 = vmatpush1.msra.mxu0 %v46
  %2043 = vmatprep.subr.mxu0 %v55
  %2044 = vmatpush1.msra.mxu0 %v54
  %2045 = vmatprep.subr.mxu0 %v63
  %2046 = vmatpush1.msra.mxu0 %v62
  %2047 = vmatprep.subr.mxu0 %v71
  %2048 = vmatpush1.msra.mxu0 %v70
  %2049 = vmatprep.subr.mxu0 %v79
  %2050 = vmatpush1.msra.mxu0 %v78
  %2051 = vmatprep.subr.mxu0 %v87
  %2052 = vmatpush1.msra.mxu0 %v86
  %2053 = vmatprep.subr.mxu0 %v95
  %2054 = vmatpush1.msra.mxu0 %v94
  %2055 = vmatprep.subr.mxu0 %v103
  %2056 = vmatpush1.msra.mxu0 %v102
  %2057 = vmatprep.subr.mxu0 %v111
  %2058 = vmatpush1.msra.mxu0 %v110
  %2059 = vmatprep.subr.mxu0 %v119
  %2060 = vmatpush1.msra.mxu0 %v118
  %2061 = vmatprep.subr.mxu0 %v127
  %2062 = vmatpush1.msra.mxu0 %v126
  %2063 = vmatprep.subr.mxu0 %v135
  %2064 = vmatpush1.msra.mxu0 %v134
  %2065 = vmatprep.subr.mxu0 %v143
  %2066 = vmatpush1.msra.mxu0 %v142
  %2067 = vmatprep.subr.mxu0 %v151
  %2068 = vmatpush1.msra.mxu0 %v150
  %2069 = vmatprep.subr.mxu0 %v159
  %2070 = vmatpush1.msra.mxu0 %v158
  %2071 = vmatprep.subr.mxu0 %v167
  %2072 = vmatpush1.msra.mxu0 %v166
  %2073 = vmatprep.subr.mxu0 %v175
  %2074 = vmatpush1.msra.mxu0 %v174
  %2075 = vmatprep.subr.mxu0 %v183
  %2076 = vmatpush1.msra.mxu0 %v182
  %2077 = vmatprep.subr.mxu0 %v191
  %2078 = vmatpush1.msra.mxu0 %v190
  %2079 = vmatprep.subr.mxu0 %v199
  %2080 = vmatpush1.msra.mxu0 %v198
  %2081 = vmatprep.subr.mxu0 %v207
  %2082 = vmatpush1.msra.mxu0 %v206
  %2083 = vmatprep.subr.mxu0 %v215
  %2084 = vmatpush1.msra.mxu0 %v214
  %2085 = vmatprep.subr.mxu0 %v223
  %2086 = vmatpush1.msra.mxu0 %v222
  %2087 = vmatprep.subr.mxu0 %v231
  %2088 = vmatpush1.msra.mxu0 %v230
  %2089 = vmatprep.subr.mxu0 %v239
  %2090 = vmatpush1.msra.mxu0 %v238
  %2091 = vmatprep.subr.mxu0 %v247
  %2092 = vmatpush1.msra.mxu0 %v246
  %2093 = vmatprep.subr.mxu0 %v255
  %2094 = vmatpush1.msra.mxu0 %v254
  %2095 = vmatprep.subr.mxu0 %v263
  %2096 = vmatpush1.msra.mxu0 %v262
  %2097 = vmatprep.subr.mxu0 %v271
  %2098 = vmatpush1.msra.mxu0 %v270
  %2099 = vmatprep.subr.mxu0 %v279
  %2100 = vmatpush1.msra.mxu0 %v278
  %2101 = vmatprep.subr.mxu0 %v287
  %2102 = vmatpush1.msra.mxu0 %v286
  %2103 = vmatprep.subr.mxu0 %v295
  %2104 = vmatpush1.msra.mxu0 %v294
  %2105 = vmatprep.mubr.f32.mxu0 %v1804
  %2106 = vmatmul.mubr.f32.gmra.mrb[0].mxu0 %v1803
  %v2107 = vpop.f32.mrb[0].mxu0
  %v2108 = vadd.f32 0.0, %v2107
  %v2109 = vpop.f32.mrb[0].mxu0
  %v2110 = vadd.f32 0.0, %v2109
  %2111 = vdwg.mxu0
  %v2112 = vadd.f32 %v1820, %v1895
  %v2113 = vadd.f32 %v1821, %v1897
  %v2114 = vadd.f32 %v1822, %v1966
  %v2115 = vadd.f32 %v1823, %v1968
  %v2116 = vadd.f32 %v1824, %v2037
  %v2117 = vadd.f32 %v1825, %v2039
  %v2118 = vadd.f32 %v1826, %v2108
  %v2119 = vadd.f32 %v1827, %v2110
  %v2120 = vsub.f32 0.0, %v2112
  %v2121 = vsub.f32 0.0, %v2113
  %v2122 = vmul.f32 %v2120, 1.442695
  %v2123 = vpow.pop %v2122
  %v2124 = vmul.f32 %v2121, 1.442695
  %v2125 = vpow.pop %v2124
  %v2126 = vadd.f32 %v2123, 1.0
  %v2127 = vadd.f32 %v2125, 1.0
  %v2128 = vrcp.pop %v2126
  %v2129 = vrcp.pop %v2127
  %v2130 = vsub.f32 0.0, %v2114
  %v2131 = vsub.f32 0.0, %v2115
  %v2132 = vmul.f32 %v2130, 1.442695
  %v2133 = vpow.pop %v2132
  %v2134 = vmul.f32 %v2131, 1.442695
  %v2135 = vpow.pop %v2134
  %v2136 = vadd.f32 %v2133, 1.0
  %v2137 = vadd.f32 %v2135, 1.0
  %v2138 = vrcp.pop %v2136
  %v2139 = vrcp.pop %v2137
  %v2140 = vtanh.pop %v2116
  %v2141 = vtanh.pop %v2117
  %v2142 = vsub.f32 0.0, %v2118
  %v2143 = vsub.f32 0.0, %v2119
  %v2144 = vmul.f32 %v2142, 1.442695
  %v2145 = vpow.pop %v2144
  %v2146 = vmul.f32 %v2143, 1.442695
  %v2147 = vpow.pop %v2146
  %v2148 = vadd.f32 %v2145, 1.0
  %v2149 = vadd.f32 %v2147, 1.0
  %v2150 = vrcp.pop %v2148
  %v2151 = vrcp.pop %v2149
  %v2152 = vmul.f32 %v2138, %v1799
  %v2153 = vmul.f32 %v2139, %v1800
  %v2154 = vmul.f32 %v2128, %v2140
  %v2155 = vmul.f32 %v2129, %v2141
  %v2156 = vadd.f32 %v2152, %v2154
  %v2157 = vadd.f32 %v2153, %v2155
  %v2158 = vtanh.pop %v2156
  %v2159 = vtanh.pop %v2157
  %v2160 = vmul.f32 %v2150, %v2158
  %v2161 = vmul.f32 %v2151, %v2159
  %s2162 = scalar_lea.vmem %s0, 40
  %v2163 = vld [vmem:[%s2162] sm:$0xff]
  %2165 = vset.pattern.permute.xlu0 0
  %2166 = vperm.xlu0 %2165, %v2163
  %v2167 = vpop.permute.xlu0 %2166
  %v2169 = vmul.f32 %v2167, %v306
  %v2170 = vmul.f32 %v2167, %v310
  %v2171 = vmul.f32 %v2167, %v314
  %v2172 = vmul.f32 %v2167, %v318
  %v2173 = vmul.f32 %v2167, %v322
  %v2174 = vmul.f32 %v2167, %v326
  %v2175 = vmul.f32 %v2167, %v330
  %v2176 = vmul.f32 %v2167, %v334
  %v2177 = vadd.f32 %v2169, %v355
  %v2178 = vadd.f32 %v2170, %v359
  %v2179 = vadd.f32 %v2171, %v363
  %v2180 = vadd.f32 %v2172, %v367
  %v2181 = vadd.f32 %v2173, %v371
  %v2182 = vadd.f32 %v2174, %v375
  %v2183 = vadd.f32 %v2175, %v379
  %v2184 = vadd.f32 %v2176, %v383
  %2185 = vmatprep.subr.mxu0 %v41
  %2186 = vmatpush1.msra.mxu0 %v40
  %2187 = vmatprep.subr.mxu0 %v49
  %2188 = vmatpush1.msra.mxu0 %v48
  %2189 = vmatprep.subr.mxu0 %v57
  %2190 = vmatpush1.msra.mxu0 %v56
  %2191 = vmatprep.subr.mxu0 %v65
  %2192 = vmatpush1.msra.mxu0 %v64
  %2193 = vmatprep.subr.mxu0 %v73
  %2194 = vmatpush1.msra.mxu0 %v72
  %2195 = vmatprep.subr.mxu0 %v81
  %2196 = vmatpush1.msra.mxu0 %v80
  %2197 = vmatprep.subr.mxu0 %v89
  %2198 = vmatpush1.msra.mxu0 %v88
  %2199 = vmatprep.subr.mxu0 %v97
  %2200 = vmatpush1.msra.mxu0 %v96
  %2201 = vmatprep.subr.mxu0 %v105
  %2202 = vmatpush1.msra.mxu0 %v104
  %2203 = vmatprep.subr.mxu0 %v113
  %2204 = vmatpush1.msra.mxu0 %v112
  %2205 = vmatprep.subr.mxu0 %v121
  %2206 = vmatpush1.msra.mxu0 %v120
  %2207 = vmatprep.subr.mxu0 %v129
  %2208 = vmatpush1.msra.mxu0 %v128
  %2209 = vmatprep.subr.mxu0 %v137
  %2210 = vmatpush1.msra.mxu0 %v136
  %2211 = vmatprep.subr.mxu0 %v145
  %2212 = vmatpush1.msra.mxu0 %v144
  %2213 = vmatprep.subr.mxu0 %v153
  %2214 = vmatpush1.msra.mxu0 %v152
  %2215 = vmatprep.subr.mxu0 %v161
  %2216 = vmatpush1.msra.mxu0 %v160
  %2217 = vmatprep.subr.mxu0 %v169
  %2218 = vmatpush1.msra.mxu0 %v168
  %2219 = vmatprep.subr.mxu0 %v177
  %2220 = vmatpush1.msra.mxu0 %v176
  %2221 = vmatprep.subr.mxu0 %v185
  %2222 = vmatpush1.msra.mxu0 %v184
  %2223 = vmatprep.subr.mxu0 %v193
  %2224 = vmatpush1.msra.mxu0 %v192
  %2225 = vmatprep.subr.mxu0 %v201
  %2226 = vmatpush1.msra.mxu0 %v200
  %2227 = vmatprep.subr.mxu0 %v209
  %2228 = vmatpush1.msra.mxu0 %v208
  %2229 = vmatprep.subr.mxu0 %v217
  %2230 = vmatpush1.msra.mxu0 %v216
  %2231 = vmatprep.subr.mxu0 %v225
  %2232 = vmatpush1.msra.mxu0 %v224
  %2233 = vmatprep.subr.mxu0 %v233
  %2234 = vmatpush1.msra.mxu0 %v232
  %2235 = vmatprep.subr.mxu0 %v241
  %2236 = vmatpush1.msra.mxu0 %v240
  %2237 = vmatprep.subr.mxu0 %v249
  %2238 = vmatpush1.msra.mxu0 %v248
  %2239 = vmatprep.subr.mxu0 %v257
  %2240 = vmatpush1.msra.mxu0 %v256
  %2241 = vmatprep.subr.mxu0 %v265
  %2242 = vmatpush1.msra.mxu0 %v264
  %2243 = vmatprep.subr.mxu0 %v273
  %2244 = vmatpush1.msra.mxu0 %v272
  %2245 = vmatprep.subr.mxu0 %v281
  %2246 = vmatpush1.msra.mxu0 %v280
  %2247 = vmatprep.subr.mxu0 %v289
  %2248 = vmatpush1.msra.mxu0 %v288
  %2249 = vmatprep.mubr.f32.mxu0 %v2161
  %2250 = vmatmul.mubr.f32.gmra.mrb[0].mxu0 %v2160
  %v2251 = vpop.f32.mrb[0].mxu0
  %v2252 = vadd.f32 0.0, %v2251
  %v2253 = vpop.f32.mrb[0].mxu0
  %v2254 = vadd.f32 0.0, %v2253
  %2255 = vdwg.mxu0
  %2256 = vmatprep.subr.mxu0 %v43
  %2257 = vmatpush1.msra.mxu0 %v42
  %2258 = vmatprep.subr.mxu0 %v51
  %2259 = vmatpush1.msra.mxu0 %v50
  %2260 = vmatprep.subr.mxu0 %v59
  %2261 = vmatpush1.msra.mxu0 %v58
  %2262 = vmatprep.subr.mxu0 %v67
  %2263 = vmatpush1.msra.mxu0 %v66
  %2264 = vmatprep.subr.mxu0 %v75
  %2265 = vmatpush1.msra.mxu0 %v74
  %2266 = vmatprep.subr.mxu0 %v83
  %2267 = vmatpush1.msra.mxu0 %v82
  %2268 = vmatprep.subr.mxu0 %v91
  %2269 = vmatpush1.msra.mxu0 %v90
  %2270 = vmatprep.subr.mxu0 %v99
  %2271 = vmatpush1.msra.mxu0 %v98
  %2272 = vmatprep.subr.mxu0 %v107
  %2273 = vmatpush1.msra.mxu0 %v106
  %2274 = vmatprep.subr.mxu0 %v115
  %2275 = vmatpush1.msra.mxu0 %v114
  %2276 = vmatprep.subr.mxu0 %v123
  %2277 = vmatpush1.msra.mxu0 %v122
  %2278 = vmatprep.subr.mxu0 %v131
  %2279 = vmatpush1.msra.mxu0 %v130
  %2280 = vmatprep.subr.mxu0 %v139
  %2281 = vmatpush1.msra.mxu0 %v138
  %2282 = vmatprep.subr.mxu0 %v147
  %2283 = vmatpush1.msra.mxu0 %v146
  %2284 = vmatprep.subr.mxu0 %v155
  %2285 = vmatpush1.msra.mxu0 %v154
  %2286 = vmatprep.subr.mxu0 %v163
  %2287 = vmatpush1.msra.mxu0 %v162
  %2288 = vmatprep.subr.mxu0 %v171
  %2289 = vmatpush1.msra.mxu0 %v170
  %2290 = vmatprep.subr.mxu0 %v179
  %2291 = vmatpush1.msra.mxu0 %v178
  %2292 = vmatprep.subr.mxu0 %v187
  %2293 = vmatpush1.msra.mxu0 %v186
  %2294 = vmatprep.subr.mxu0 %v195
  %2295 = vmatpush1.msra.mxu0 %v194
  %2296 = vmatprep.subr.mxu0 %v203
  %2297 = vmatpush1.msra.mxu0 %v202
  %2298 = vmatprep.subr.mxu0 %v211
  %2299 = vmatpush1.msra.mxu0 %v210
  %2300 = vmatprep.subr.mxu0 %v219
  %2301 = vmatpush1.msra.mxu0 %v218
  %2302 = vmatprep.subr.mxu0 %v227
  %2303 = vmatpush1.msra.mxu0 %v226
  %2304 = vmatprep.subr.mxu0 %v235
  %2305 = vmatpush1.msra.mxu0 %v234
  %2306 = vmatprep.subr.mxu0 %v243
  %2307 = vmatpush1.msra.mxu0 %v242
  %2308 = vmatprep.subr.mxu0 %v251
  %2309 = vmatpush1.msra.mxu0 %v250
  %2310 = vmatprep.subr.mxu0 %v259
  %2311 = vmatpush1.msra.mxu0 %v258
  %2312 = vmatprep.subr.mxu0 %v267
  %2313 = vmatpush1.msra.mxu0 %v266
  %2314 = vmatprep.subr.mxu0 %v275
  %2315 = vmatpush1.msra.mxu0 %v274
  %2316 = vmatprep.subr.mxu0 %v283
  %2317 = vmatpush1.msra.mxu0 %v282
  %2318 = vmatprep.subr.mxu0 %v291
  %2319 = vmatpush1.msra.mxu0 %v290
  %2320 = vmatprep.mubr.f32.mxu0 %v2161
  %2321 = vmatmul.mubr.f32.gmra.mrb[0].mxu0 %v2160
  %v2322 = vpop.f32.mrb[0].mxu0
  %v2323 = vadd.f32 0.0, %v2322
  %v2324 = vpop.f32.mrb[0].mxu0
  %v2325 = vadd.f32 0.0, %v2324
  %2326 = vdwg.mxu0
  %2327 = vmatprep.subr.mxu0 %v45
  %2328 = vmatpush1.msra.mxu0 %v44
  %2329 = vmatprep.subr.mxu0 %v53
  %2330 = vmatpush1.msra.mxu0 %v52
  %2331 = vmatprep.subr.mxu0 %v61
  %2332 = vmatpush1.msra.mxu0 %v60
  %2333 = vmatprep.subr.mxu0 %v69
  %2334 = vmatpush1.msra.mxu0 %v68
  %2335 = vmatprep.subr.mxu0 %v77
  %2336 = vmatpush1.msra.mxu0 %v76
  %2337 = vmatprep.subr.mxu0 %v85
  %2338 = vmatpush1.msra.mxu0 %v84
  %2339 = vmatprep.subr.mxu0 %v93
  %2340 = vmatpush1.msra.mxu0 %v92
  %2341 = vmatprep.subr.mxu0 %v101
  %2342 = vmatpush1.msra.mxu0 %v100
  %2343 = vmatprep.subr.mxu0 %v109
  %2344 = vmatpush1.msra.mxu0 %v108
  %2345 = vmatprep.subr.mxu0 %v117
  %2346 = vmatpush1.msra.mxu0 %v116
  %2347 = vmatprep.subr.mxu0 %v125
  %2348 = vmatpush1.msra.mxu0 %v124
  %2349 = vmatprep.subr.mxu0 %v133
  %2350 = vmatpush1.msra.mxu0 %v132
  %2351 = vmatprep.subr.mxu0 %v141
  %2352 = vmatpush1.msra.mxu0 %v140
  %2353 = vmatprep.subr.mxu0 %v149
  %2354 = vmatpush1.msra.mxu0 %v148
  %2355 = vmatprep.subr.mxu0 %v157
  %2356 = vmatpush1.msra.mxu0 %v156
  %2357 = vmatprep.subr.mxu0 %v165
  %2358 = vmatpush1.msra.mxu0 %v164
  %2359 = vmatprep.subr.mxu0 %v173
  %2360 = vmatpush1.msra.mxu0 %v172
  %2361 = vmatprep.subr.mxu0 %v181
  %2362 = vmatpush1.msra.mxu0 %v180
  %2363 = vmatprep.subr.mxu0 %v189
  %2364 = vmatpush1.msra.mxu0 %v188
  %2365 = vmatprep.subr.mxu0 %v197
  %2366 = vmatpush1.msra.mxu0 %v196
  %2367 = vmatprep.subr.mxu0 %v205
  %2368 = vmatpush1.msra.mxu0 %v204
  %2369 = vmatprep.subr.mxu0 %v213
  %2370 = vmatpush1.msra.mxu0 %v212
  %2371 = vmatprep.subr.mxu0 %v221
  %2372 = vmatpush1.msra.mxu0 %v220
  %2373 = vmatprep.subr.mxu0 %v229
  %2374 = vmatpush1.msra.mxu0 %v228
  %2375 = vmatprep.subr.mxu0 %v237
  %2376 = vmatpush1.msra.mxu0 %v236
  %2377 = vmatprep.subr.mxu0 %v245
  %2378 = vmatpush1.msra.mxu0 %v244
  %2379 = vmatprep.subr.mxu0 %v253
  %2380 = vmatpush1.msra.mxu0 %v252
  %2381 = vmatprep.subr.mxu0 %v261
  %2382 = vmatpush1.msra.mxu0 %v260
  %2383 = vmatprep.subr.mxu0 %v269
  %2384 = vmatpush1.msra.mxu0 %v268
  %2385 = vmatprep.subr.mxu0 %v277
  %2386 = vmatpush1.msra.mxu0 %v276
  %2387 = vmatprep.subr.mxu0 %v285
  %2388 = vmatpush1.msra.mxu0 %v284
  %2389 = vmatprep.subr.mxu0 %v293
  %2390 = vmatpush1.msra.mxu0 %v292
  %2391 = vmatprep.mubr.f32.mxu0 %v2161
  %2392 = vmatmul.mubr.f32.gmra.mrb[0].mxu0 %v2160
  %v2393 = vpop.f32.mrb[0].mxu0
  %v2394 = vadd.f32 0.0, %v2393
  %v2395 = vpop.f32.mrb[0].mxu0
  %v2396 = vadd.f32 0.0, %v2395
  %2397 = vdwg.mxu0
  %2398 = vmatprep.subr.mxu0 %v47
  %2399 = vmatpush1.msra.mxu0 %v46
  %2400 = vmatprep.subr.mxu0 %v55
  %2401 = vmatpush1.msra.mxu0 %v54
  %2402 = vmatprep.subr.mxu0 %v63
  %2403 = vmatpush1.msra.mxu0 %v62
  %2404 = vmatprep.subr.mxu0 %v71
  %2405 = vmatpush1.msra.mxu0 %v70
  %2406 = vmatprep.subr.mxu0 %v79
  %2407 = vmatpush1.msra.mxu0 %v78
  %2408 = vmatprep.subr.mxu0 %v87
  %2409 = vmatpush1.msra.mxu0 %v86
  %2410 = vmatprep.subr.mxu0 %v95
  %2411 = vmatpush1.msra.mxu0 %v94
  %2412 = vmatprep.subr.mxu0 %v103
  %2413 = vmatpush1.msra.mxu0 %v102
  %2414 = vmatprep.subr.mxu0 %v111
  %2415 = vmatpush1.msra.mxu0 %v110
  %2416 = vmatprep.subr.mxu0 %v119
  %2417 = vmatpush1.msra.mxu0 %v118
  %2418 = vmatprep.subr.mxu0 %v127
  %2419 = vmatpush1.msra.mxu0 %v126
  %2420 = vmatprep.subr.mxu0 %v135
  %2421 = vmatpush1.msra.mxu0 %v134
  %2422 = vmatprep.subr.mxu0 %v143
  %2423 = vmatpush1.msra.mxu0 %v142
  %2424 = vmatprep.subr.mxu0 %v151
  %2425 = vmatpush1.msra.mxu0 %v150
  %2426 = vmatprep.subr.mxu0 %v159
  %2427 = vmatpush1.msra.mxu0 %v158
  %2428 = vmatprep.subr.mxu0 %v167
  %2429 = vmatpush1.msra.mxu0 %v166
  %2430 = vmatprep.subr.mxu0 %v175
  %2431 = vmatpush1.msra.mxu0 %v174
  %2432 = vmatprep.subr.mxu0 %v183
  %2433 = vmatpush1.msra.mxu0 %v182
  %2434 = vmatprep.subr.mxu0 %v191
  %2435 = vmatpush1.msra.mxu0 %v190
  %2436 = vmatprep.subr.mxu0 %v199
  %2437 = vmatpush1.msra.mxu0 %v198
  %2438 = vmatprep.subr.mxu0 %v207
  %2439 = vmatpush1.msra.mxu0 %v206
  %2440 = vmatprep.subr.mxu0 %v215
  %2441 = vmatpush1.msra.mxu0 %v214
  %2442 = vmatprep.subr.mxu0 %v223
  %2443 = vmatpush1.msra.mxu0 %v222
  %2444 = vmatprep.subr.mxu0 %v231
  %2445 = vmatpush1.msra.mxu0 %v230
  %2446 = vmatprep.subr.mxu0 %v239
  %2447 = vmatpush1.msra.mxu0 %v238
  %2448 = vmatprep.subr.mxu0 %v247
  %2449 = vmatpush1.msra.mxu0 %v246
  %2450 = vmatprep.subr.mxu0 %v255
  %2451 = vmatpush1.msra.mxu0 %v254
  %2452 = vmatprep.subr.mxu0 %v263
  %2453 = vmatpush1.msra.mxu0 %v262
  %2454 = vmatprep.subr.mxu0 %v271
  %2455 = vmatpush1.msra.mxu0 %v270
  %2456 = vmatprep.subr.mxu0 %v279
  %2457 = vmatpush1.msra.mxu0 %v278
  %2458 = vmatprep.subr.mxu0 %v287
  %2459 = vmatpush1.msra.mxu0 %v286
  %2460 = vmatprep.subr.mxu0 %v295
  %2461 = vmatpush1.msra.mxu0 %v294
  %2462 = vmatprep.mubr.f32.mxu0 %v2161
  %2463 = vmatmul.mubr.f32.gmra.mrb[0].mxu0 %v2160
  %v2464 = vpop.f32.mrb[0].mxu0
  %v2465 = vadd.f32 0.0, %v2464
  %v2466 = vpop.f32.mrb[0].mxu0
  %v2467 = vadd.f32 0.0, %v2466
  %2468 = vdwg.mxu0
  %v2469 = vadd.f32 %v2177, %v2252
  %v2470 = vadd.f32 %v2178, %v2254
  %v2471 = vadd.f32 %v2179, %v2323
  %v2472 = vadd.f32 %v2180, %v2325
  %v2473 = vadd.f32 %v2181, %v2394
  %v2474 = vadd.f32 %v2182, %v2396
  %v2475 = vadd.f32 %v2183, %v2465
  %v2476 = vadd.f32 %v2184, %v2467
  %v2477 = vsub.f32 0.0, %v2469
  %v2478 = vsub.f32 0.0, %v2470
  %v2479 = vmul.f32 %v2477, 1.442695
  %v2480 = vpow.pop %v2479
  %v2481 = vmul.f32 %v2478, 1.442695
  %v2482 = vpow.pop %v2481
  %v2483 = vadd.f32 %v2480, 1.0
  %v2484 = vadd.f32 %v2482, 1.0
  %v2485 = vrcp.pop %v2483
  %v2486 = vrcp.pop %v2484
  %v2487 = vsub.f32 0.0, %v2471
  %v2488 = vsub.f32 0.0, %v2472
  %v2489 = vmul.f32 %v2487, 1.442695
  %v2490 = vpow.pop %v2489
  %v2491 = vmul.f32 %v2488, 1.442695
  %v2492 = vpow.pop %v2491
  %v2493 = vadd.f32 %v2490, 1.0
  %v2494 = vadd.f32 %v2492, 1.0
  %v2495 = vrcp.pop %v2493
  %v2496 = vrcp.pop %v2494
  %v2497 = vtanh.pop %v2473
  %v2498 = vtanh.pop %v2474
  %v2499 = vsub.f32 0.0, %v2475
  %v2500 = vsub.f32 0.0, %v2476
  %v2501 = vmul.f32 %v2499, 1.442695
  %v2502 = vpow.pop %v2501
  %v2503 = vmul.f32 %v2500, 1.442695
  %v2504 = vpow.pop %v2503
  %v2505 = vadd.f32 %v2502, 1.0
  %v2506 = vadd.f32 %v2504, 1.0
  %v2507 = vrcp.pop %v2505
  %v2508 = vrcp.pop %v2506
  %v2509 = vmul.f32 %v2495, %v2156
  %v2510 = vmul.f32 %v2496, %v2157
  %v2511 = vmul.f32 %v2485, %v2497
  %v2512 = vmul.f32 %v2486, %v2498
  %v2513 = vadd.f32 %v2509, %v2511
  %v2514 = vadd.f32 %v2510, %v2512
  %v2515 = vtanh.pop %v2513
  %v2516 = vtanh.pop %v2514
  %v2517 = vmul.f32 %v2507, %v2515
  %v2518 = vmul.f32 %v2508, %v2516
  %s2519 = scalar_lea.vmem %s0, 48
  %v2520 = vld [vmem:[%s2519] sm:$0xff]
  %2522 = vset.pattern.permute.xlu0 0
  %2523 = vperm.xlu0 %2522, %v2520
  %v2524 = vpop.permute.xlu0 %2523
  %v2526 = vmul.f32 %v2524, %v306
  %v2527 = vmul.f32 %v2524, %v310
  %v2528 = vmul.f32 %v2524, %v314
  %v2529 = vmul.f32 %v2524, %v318
  %v2530 = vmul.f32 %v2524, %v322
  %v2531 = vmul.f32 %v2524, %v326
  %v2532 = vmul.f32 %v2524, %v330
  %v2533 = vmul.f32 %v2524, %v334
  %v2534 = vadd.f32 %v2526, %v355
  %v2535 = vadd.f32 %v2527, %v359
  %v2536 = vadd.f32 %v2528, %v363
  %v2537 = vadd.f32 %v2529, %v367
  %v2538 = vadd.f32 %v2530, %v371
  %v2539 = vadd.f32 %v2531, %v375
  %v2540 = vadd.f32 %v2532, %v379
  %v2541 = vadd.f32 %v2533, %v383
  %2542 = vmatprep.subr.mxu0 %v41
  %2543 = vmatpush1.msra.mxu0 %v40
  %2544 = vmatprep.subr.mxu0 %v49
  %2545 = vmatpush1.msra.mxu0 %v48
  %2546 = vmatprep.subr.mxu0 %v57
  %2547 = vmatpush1.msra.mxu0 %v56
  %2548 = vmatprep.subr.mxu0 %v65
  %2549 = vmatpush1.msra.mxu0 %v64
  %2550 = vmatprep.subr.mxu0 %v73
  %2551 = vmatpush1.msra.mxu0 %v72
  %2552 = vmatprep.subr.mxu0 %v81
  %2553 = vmatpush1.msra.mxu0 %v80
  %2554 = vmatprep.subr.mxu0 %v89
  %2555 = vmatpush1.msra.mxu0 %v88
  %2556 = vmatprep.subr.mxu0 %v97
  %2557 = vmatpush1.msra.mxu0 %v96
  %2558 = vmatprep.subr.mxu0 %v105
  %2559 = vmatpush1.msra.mxu0 %v104
  %2560 = vmatprep.subr.mxu0 %v113
  %2561 = vmatpush1.msra.mxu0 %v112
  %2562 = vmatprep.subr.mxu0 %v121
  %2563 = vmatpush1.msra.mxu0 %v120
  %2564 = vmatprep.subr.mxu0 %v129
  %2565 = vmatpush1.msra.mxu0 %v128
  %2566 = vmatprep.subr.mxu0 %v137
  %2567 = vmatpush1.msra.mxu0 %v136
  %2568 = vmatprep.subr.mxu0 %v145
  %2569 = vmatpush1.msra.mxu0 %v144
  %2570 = vmatprep.subr.mxu0 %v153
  %2571 = vmatpush1.msra.mxu0 %v152
  %2572 = vmatprep.subr.mxu0 %v161
  %2573 = vmatpush1.msra.mxu0 %v160
  %2574 = vmatprep.subr.mxu0 %v169
  %2575 = vmatpush1.msra.mxu0 %v168
  %2576 = vmatprep.subr.mxu0 %v177
  %2577 = vmatpush1.msra.mxu0 %v176
  %2578 = vmatprep.subr.mxu0 %v185
  %2579 = vmatpush1.msra.mxu0 %v184
  %2580 = vmatprep.subr.mxu0 %v193
  %2581 = vmatpush1.msra.mxu0 %v192
  %2582 = vmatprep.subr.mxu0 %v201
  %2583 = vmatpush1.msra.mxu0 %v200
  %2584 = vmatprep.subr.mxu0 %v209
  %2585 = vmatpush1.msra.mxu0 %v208
  %2586 = vmatprep.subr.mxu0 %v217
  %2587 = vmatpush1.msra.mxu0 %v216
  %2588 = vmatprep.subr.mxu0 %v225
  %2589 = vmatpush1.msra.mxu0 %v224
  %2590 = vmatprep.subr.mxu0 %v233
  %2591 = vmatpush1.msra.mxu0 %v232
  %2592 = vmatprep.subr.mxu0 %v241
  %2593 = vmatpush1.msra.mxu0 %v240
  %2594 = vmatprep.subr.mxu0 %v249
  %2595 = vmatpush1.msra.mxu0 %v248
  %2596 = vmatprep.subr.mxu0 %v257
  %2597 = vmatpush1.msra.mxu0 %v256
  %2598 = vmatprep.subr.mxu0 %v265
  %2599 = vmatpush1.msra.mxu0 %v264
  %2600 = vmatprep.subr.mxu0 %v273
  %2601 = vmatpush1.msra.mxu0 %v272
  %2602 = vmatprep.subr.mxu0 %v281
  %2603 = vmatpush1.msra.mxu0 %v280
  %2604 = vmatprep.subr.mxu0 %v289
  %2605 = vmatpush1.msra.mxu0 %v288
  %2606 = vmatprep.mubr.f32.mxu0 %v2518
  %2607 = vmatmul.mubr.f32.gmra.mrb[0].mxu0 %v2517
  %v2608 = vpop.f32.mrb[0].mxu0
  %v2609 = vadd.f32 0.0, %v2608
  %v2610 = vpop.f32.mrb[0].mxu0
  %v2611 = vadd.f32 0.0, %v2610
  %2612 = vdwg.mxu0
  %2613 = vmatprep.subr.mxu0 %v43
  %2614 = vmatpush1.msra.mxu0 %v42
  %2615 = vmatprep.subr.mxu0 %v51
  %2616 = vmatpush1.msra.mxu0 %v50
  %2617 = vmatprep.subr.mxu0 %v59
  %2618 = vmatpush1.msra.mxu0 %v58
  %2619 = vmatprep.subr.mxu0 %v67
  %2620 = vmatpush1.msra.mxu0 %v66
  %2621 = vmatprep.subr.mxu0 %v75
  %2622 = vmatpush1.msra.mxu0 %v74
  %2623 = vmatprep.subr.mxu0 %v83
  %2624 = vmatpush1.msra.mxu0 %v82
  %2625 = vmatprep.subr.mxu0 %v91
  %2626 = vmatpush1.msra.mxu0 %v90
  %2627 = vmatprep.subr.mxu0 %v99
  %2628 = vmatpush1.msra.mxu0 %v98
  %2629 = vmatprep.subr.mxu0 %v107
  %2630 = vmatpush1.msra.mxu0 %v106
  %2631 = vmatprep.subr.mxu0 %v115
  %2632 = vmatpush1.msra.mxu0 %v114
  %2633 = vmatprep.subr.mxu0 %v123
  %2634 = vmatpush1.msra.mxu0 %v122
  %2635 = vmatprep.subr.mxu0 %v131
  %2636 = vmatpush1.msra.mxu0 %v130
  %2637 = vmatprep.subr.mxu0 %v139
  %2638 = vmatpush1.msra.mxu0 %v138
  %2639 = vmatprep.subr.mxu0 %v147
  %2640 = vmatpush1.msra.mxu0 %v146
  %2641 = vmatprep.subr.mxu0 %v155
  %2642 = vmatpush1.msra.mxu0 %v154
  %2643 = vmatprep.subr.mxu0 %v163
  %2644 = vmatpush1.msra.mxu0 %v162
  %2645 = vmatprep.subr.mxu0 %v171
  %2646 = vmatpush1.msra.mxu0 %v170
  %2647 = vmatprep.subr.mxu0 %v179
  %2648 = vmatpush1.msra.mxu0 %v178
  %2649 = vmatprep.subr.mxu0 %v187
  %2650 = vmatpush1.msra.mxu0 %v186
  %2651 = vmatprep.subr.mxu0 %v195
  %2652 = vmatpush1.msra.mxu0 %v194
  %2653 = vmatprep.subr.mxu0 %v203
  %2654 = vmatpush1.msra.mxu0 %v202
  %2655 = vmatprep.subr.mxu0 %v211
  %2656 = vmatpush1.msra.mxu0 %v210
  %2657 = vmatprep.subr.mxu0 %v219
  %2658 = vmatpush1.msra.mxu0 %v218
  %2659 = vmatprep.subr.mxu0 %v227
  %2660 = vmatpush1.msra.mxu0 %v226
  %2661 = vmatprep.subr.mxu0 %v235
  %2662 = vmatpush1.msra.mxu0 %v234
  %2663 = vmatprep.subr.mxu0 %v243
  %2664 = vmatpush1.msra.mxu0 %v242
  %2665 = vmatprep.subr.mxu0 %v251
  %2666 = vmatpush1.msra.mxu0 %v250
  %2667 = vmatprep.subr.mxu0 %v259
  %2668 = vmatpush1.msra.mxu0 %v258
  %2669 = vmatprep.subr.mxu0 %v267
  %2670 = vmatpush1.msra.mxu0 %v266
  %2671 = vmatprep.subr.mxu0 %v275
  %2672 = vmatpush1.msra.mxu0 %v274
  %2673 = vmatprep.subr.mxu0 %v283
  %2674 = vmatpush1.msra.mxu0 %v282
  %2675 = vmatprep.subr.mxu0 %v291
  %2676 = vmatpush1.msra.mxu0 %v290
  %2677 = vmatprep.mubr.f32.mxu0 %v2518
  %2678 = vmatmul.mubr.f32.gmra.mrb[0].mxu0 %v2517
  %v2679 = vpop.f32.mrb[0].mxu0
  %v2680 = vadd.f32 0.0, %v2679
  %v2681 = vpop.f32.mrb[0].mxu0
  %v2682 = vadd.f32 0.0, %v2681
  %2683 = vdwg.mxu0
  %2684 = vmatprep.subr.mxu0 %v45
  %2685 = vmatpush1.msra.mxu0 %v44
  %2686 = vmatprep.subr.mxu0 %v53
  %2687 = vmatpush1.msra.mxu0 %v52
  %2688 = vmatprep.subr.mxu0 %v61
  %2689 = vmatpush1.msra.mxu0 %v60
  %2690 = vmatprep.subr.mxu0 %v69
  %2691 = vmatpush1.msra.mxu0 %v68
  %2692 = vmatprep.subr.mxu0 %v77
  %2693 = vmatpush1.msra.mxu0 %v76
  %2694 = vmatprep.subr.mxu0 %v85
  %2695 = vmatpush1.msra.mxu0 %v84
  %2696 = vmatprep.subr.mxu0 %v93
  %2697 = vmatpush1.msra.mxu0 %v92
  %2698 = vmatprep.subr.mxu0 %v101
  %2699 = vmatpush1.msra.mxu0 %v100
  %2700 = vmatprep.subr.mxu0 %v109
  %2701 = vmatpush1.msra.mxu0 %v108
  %2702 = vmatprep.subr.mxu0 %v117
  %2703 = vmatpush1.msra.mxu0 %v116
  %2704 = vmatprep.subr.mxu0 %v125
  %2705 = vmatpush1.msra.mxu0 %v124
  %2706 = vmatprep.subr.mxu0 %v133
  %2707 = vmatpush1.msra.mxu0 %v132
  %2708 = vmatprep.subr.mxu0 %v141
  %2709 = vmatpush1.msra.mxu0 %v140
  %2710 = vmatprep.subr.mxu0 %v149
  %2711 = vmatpush1.msra.mxu0 %v148
  %2712 = vmatprep.subr.mxu0 %v157
  %2713 = vmatpush1.msra.mxu0 %v156
  %2714 = vmatprep.subr.mxu0 %v165
  %2715 = vmatpush1.msra.mxu0 %v164
  %2716 = vmatprep.subr.mxu0 %v173
  %2717 = vmatpush1.msra.mxu0 %v172
  %2718 = vmatprep.subr.mxu0 %v181
  %2719 = vmatpush1.msra.mxu0 %v180
  %2720 = vmatprep.subr.mxu0 %v189
  %2721 = vmatpush1.msra.mxu0 %v188
  %2722 = vmatprep.subr.mxu0 %v197
  %2723 = vmatpush1.msra.mxu0 %v196
  %2724 = vmatprep.subr.mxu0 %v205
  %2725 = vmatpush1.msra.mxu0 %v204
  %2726 = vmatprep.subr.mxu0 %v213
  %2727 = vmatpush1.msra.mxu0 %v212
  %2728 = vmatprep.subr.mxu0 %v221
  %2729 = vmatpush1.msra.mxu0 %v220
  %2730 = vmatprep.subr.mxu0 %v229
  %2731 = vmatpush1.msra.mxu0 %v228
  %2732 = vmatprep.subr.mxu0 %v237
  %2733 = vmatpush1.msra.mxu0 %v236
  %2734 = vmatprep.subr.mxu0 %v245
  %2735 = vmatpush1.msra.mxu0 %v244
  %2736 = vmatprep.subr.mxu0 %v253
  %2737 = vmatpush1.msra.mxu0 %v252
  %2738 = vmatprep.subr.mxu0 %v261
  %2739 = vmatpush1.msra.mxu0 %v260
  %2740 = vmatprep.subr.mxu0 %v269
  %2741 = vmatpush1.msra.mxu0 %v268
  %2742 = vmatprep.subr.mxu0 %v277
  %2743 = vmatpush1.msra.mxu0 %v276
  %2744 = vmatprep.subr.mxu0 %v285
  %2745 = vmatpush1.msra.mxu0 %v284
  %2746 = vmatprep.subr.mxu0 %v293
  %2747 = vmatpush1.msra.mxu0 %v292
  %2748 = vmatprep.mubr.f32.mxu0 %v2518
  %2749 = vmatmul.mubr.f32.gmra.mrb[0].mxu0 %v2517
  %v2750 = vpop.f32.mrb[0].mxu0
  %v2751 = vadd.f32 0.0, %v2750
  %v2752 = vpop.f32.mrb[0].mxu0
  %v2753 = vadd.f32 0.0, %v2752
  %2754 = vdwg.mxu0
  %2755 = vmatprep.subr.mxu0 %v47
  %2756 = vmatpush1.msra.mxu0 %v46
  %2757 = vmatprep.subr.mxu0 %v55
  %2758 = vmatpush1.msra.mxu0 %v54
  %2759 = vmatprep.subr.mxu0 %v63
  %2760 = vmatpush1.msra.mxu0 %v62
  %2761 = vmatprep.subr.mxu0 %v71
  %2762 = vmatpush1.msra.mxu0 %v70
  %2763 = vmatprep.subr.mxu0 %v79
  %2764 = vmatpush1.msra.mxu0 %v78
  %2765 = vmatprep.subr.mxu0 %v87
  %2766 = vmatpush1.msra.mxu0 %v86
  %2767 = vmatprep.subr.mxu0 %v95
  %2768 = vmatpush1.msra.mxu0 %v94
  %2769 = vmatprep.subr.mxu0 %v103
  %2770 = vmatpush1.msra.mxu0 %v102
  %2771 = vmatprep.subr.mxu0 %v111
  %2772 = vmatpush1.msra.mxu0 %v110
  %2773 = vmatprep.subr.mxu0 %v119
  %2774 = vmatpush1.msra.mxu0 %v118
  %2775 = vmatprep.subr.mxu0 %v127
  %2776 = vmatpush1.msra.mxu0 %v126
  %2777 = vmatprep.subr.mxu0 %v135
  %2778 = vmatpush1.msra.mxu0 %v134
  %2779 = vmatprep.subr.mxu0 %v143
  %2780 = vmatpush1.msra.mxu0 %v142
  %2781 = vmatprep.subr.mxu0 %v151
  %2782 = vmatpush1.msra.mxu0 %v150
  %2783 = vmatprep.subr.mxu0 %v159
  %2784 = vmatpush1.msra.mxu0 %v158
  %2785 = vmatprep.subr.mxu0 %v167
  %2786 = vmatpush1.msra.mxu0 %v166
  %2787 = vmatprep.subr.mxu0 %v175
  %2788 = vmatpush1.msra.mxu0 %v174
  %2789 = vmatprep.subr.mxu0 %v183
  %2790 = vmatpush1.msra.mxu0 %v182
  %2791 = vmatprep.subr.mxu0 %v191
  %2792 = vmatpush1.msra.mxu0 %v190
  %2793 = vmatprep.subr.mxu0 %v199
  %2794 = vmatpush1.msra.mxu0 %v198
  %2795 = vmatprep.subr.mxu0 %v207
  %2796 = vmatpush1.msra.mxu0 %v206
  %2797 = vmatprep.subr.mxu0 %v215
  %2798 = vmatpush1.msra.mxu0 %v214
  %2799 = vmatprep.subr.mxu0 %v223
  %2800 = vmatpush1.msra.mxu0 %v222
  %2801 = vmatprep.subr.mxu0 %v231
  %2802 = vmatpush1.msra.mxu0 %v230
  %2803 = vmatprep.subr.mxu0 %v239
  %2804 = vmatpush1.msra.mxu0 %v238
  %2805 = vmatprep.subr.mxu0 %v247
  %2806 = vmatpush1.msra.mxu0 %v246
  %2807 = vmatprep.subr.mxu0 %v255
  %2808 = vmatpush1.msra.mxu0 %v254
  %2809 = vmatprep.subr.mxu0 %v263
  %2810 = vmatpush1.msra.mxu0 %v262
  %2811 = vmatprep.subr.mxu0 %v271
  %2812 = vmatpush1.msra.mxu0 %v270
  %2813 = vmatprep.subr.mxu0 %v279
  %2814 = vmatpush1.msra.mxu0 %v278
  %2815 = vmatprep.subr.mxu0 %v287
  %2816 = vmatpush1.msra.mxu0 %v286
  %2817 = vmatprep.subr.mxu0 %v295
  %2818 = vmatpush1.msra.mxu0 %v294
  %2819 = vmatprep.mubr.f32.mxu0 %v2518
  %2820 = vmatmul.mubr.f32.gmra.mrb[0].mxu0 %v2517
  %v2821 = vpop.f32.mrb[0].mxu0
  %v2822 = vadd.f32 0.0, %v2821
  %v2823 = vpop.f32.mrb[0].mxu0
  %v2824 = vadd.f32 0.0, %v2823
  %2825 = vdwg.mxu0
  %v2826 = vadd.f32 %v2534, %v2609
  %v2827 = vadd.f32 %v2535, %v2611
  %v2828 = vadd.f32 %v2536, %v2680
  %v2829 = vadd.f32 %v2537, %v2682
  %v2830 = vadd.f32 %v2538, %v2751
  %v2831 = vadd.f32 %v2539, %v2753
  %v2832 = vadd.f32 %v2540, %v2822
  %v2833 = vadd.f32 %v2541, %v2824
  %v2834 = vsub.f32 0.0, %v2826
  %v2835 = vsub.f32 0.0, %v2827
  %v2836 = vmul.f32 %v2834, 1.442695
  %v2837 = vpow.pop %v2836
  %v2838 = vmul.f32 %v2835, 1.442695
  %v2839 = vpow.pop %v2838
  %v2840 = vadd.f32 %v2837, 1.0
  %v2841 = vadd.f32 %v2839, 1.0
  %v2842 = vrcp.pop %v2840
  %v2843 = vrcp.pop %v2841
  %v2844 = vsub.f32 0.0, %v2828
  %v2845 = vsub.f32 0.0, %v2829
  %v2846 = vmul.f32 %v2844, 1.442695
  %v2847 = vpow.pop %v2846
  %v2848 = vmul.f32 %v2845, 1.442695
  %v2849 = vpow.pop %v2848
  %v2850 = vadd.f32 %v2847, 1.0
  %v2851 = vadd.f32 %v2849, 1.0
  %v2852 = vrcp.pop %v2850
  %v2853 = vrcp.pop %v2851
  %v2854 = vtanh.pop %v2830
  %v2855 = vtanh.pop %v2831
  %v2856 = vsub.f32 0.0, %v2832
  %v2857 = vsub.f32 0.0, %v2833
  %v2858 = vmul.f32 %v2856, 1.442695
  %v2859 = vpow.pop %v2858
  %v2860 = vmul.f32 %v2857, 1.442695
  %v2861 = vpow.pop %v2860
  %v2862 = vadd.f32 %v2859, 1.0
  %v2863 = vadd.f32 %v2861, 1.0
  %v2864 = vrcp.pop %v2862
  %v2865 = vrcp.pop %v2863
  %v2866 = vmul.f32 %v2852, %v2513
  %v2867 = vmul.f32 %v2853, %v2514
  %v2868 = vmul.f32 %v2842, %v2854
  %v2869 = vmul.f32 %v2843, %v2855
  %v2870 = vadd.f32 %v2866, %v2868
  %v2871 = vadd.f32 %v2867, %v2869
  %v2872 = vtanh.pop %v2870
  %v2873 = vtanh.pop %v2871
  %v2874 = vmul.f32 %v2864, %v2872
  %v2875 = vmul.f32 %v2865, %v2873
  %s2876 = scalar_lea.vmem %s0, 56
  %v2877 = vld [vmem:[%s2876] sm:$0xff]
  %2879 = vset.pattern.permute.xlu0 0
  %2880 = vperm.xlu0 %2879, %v2877
  %v2881 = vpop.permute.xlu0 %2880
  %v2883 = vmul.f32 %v2881, %v306
  %v2884 = vmul.f32 %v2881, %v310
  %v2885 = vmul.f32 %v2881, %v314
  %v2886 = vmul.f32 %v2881, %v318
  %v2887 = vmul.f32 %v2881, %v322
  %v2888 = vmul.f32 %v2881, %v326
  %v2889 = vmul.f32 %v2881, %v330
  %v2890 = vmul.f32 %v2881, %v334
  %v2891 = vadd.f32 %v2883, %v355
  %v2892 = vadd.f32 %v2884, %v359
  %v2893 = vadd.f32 %v2885, %v363
  %v2894 = vadd.f32 %v2886, %v367
  %v2895 = vadd.f32 %v2887, %v371
  %v2896 = vadd.f32 %v2888, %v375
  %v2897 = vadd.f32 %v2889, %v379
  %v2898 = vadd.f32 %v2890, %v383
  %2899 = vmatprep.subr.mxu0 %v41
  %2900 = vmatpush1.msra.mxu0 %v40
  %2901 = vmatprep.subr.mxu0 %v49
  %2902 = vmatpush1.msra.mxu0 %v48
  %2903 = vmatprep.subr.mxu0 %v57
  %2904 = vmatpush1.msra.mxu0 %v56
  %2905 = vmatprep.subr.mxu0 %v65
  %2906 = vmatpush1.msra.mxu0 %v64
  %2907 = vmatprep.subr.mxu0 %v73
  %2908 = vmatpush1.msra.mxu0 %v72
  %2909 = vmatprep.subr.mxu0 %v81
  %2910 = vmatpush1.msra.mxu0 %v80
  %2911 = vmatprep.subr.mxu0 %v89
  %2912 = vmatpush1.msra.mxu0 %v88
  %2913 = vmatprep.subr.mxu0 %v97
  %2914 = vmatpush1.msra.mxu0 %v96
  %2915 = vmatprep.subr.mxu0 %v105
  %2916 = vmatpush1.msra.mxu0 %v104
  %2917 = vmatprep.subr.mxu0 %v113
  %2918 = vmatpush1.msra.mxu0 %v112
  %2919 = vmatprep.subr.mxu0 %v121
  %2920 = vmatpush1.msra.mxu0 %v120
  %2921 = vmatprep.subr.mxu0 %v129
  %2922 = vmatpush1.msra.mxu0 %v128
  %2923 = vmatprep.subr.mxu0 %v137
  %2924 = vmatpush1.msra.mxu0 %v136
  %2925 = vmatprep.subr.mxu0 %v145
  %2926 = vmatpush1.msra.mxu0 %v144
  %2927 = vmatprep.subr.mxu0 %v153
  %2928 = vmatpush1.msra.mxu0 %v152
  %2929 = vmatprep.subr.mxu0 %v161
  %2930 = vmatpush1.msra.mxu0 %v160
  %2931 = vmatprep.subr.mxu0 %v169
  %2932 = vmatpush1.msra.mxu0 %v168
  %2933 = vmatprep.subr.mxu0 %v177
  %2934 = vmatpush1.msra.mxu0 %v176
  %2935 = vmatprep.subr.mxu0 %v185
  %2936 = vmatpush1.msra.mxu0 %v184
  %2937 = vmatprep.subr.mxu0 %v193
  %2938 = vmatpush1.msra.mxu0 %v192
  %2939 = vmatprep.subr.mxu0 %v201
  %2940 = vmatpush1.msra.mxu0 %v200
  %2941 = vmatprep.subr.mxu0 %v209
  %2942 = vmatpush1.msra.mxu0 %v208
  %2943 = vmatprep.subr.mxu0 %v217
  %2944 = vmatpush1.msra.mxu0 %v216
  %2945 = vmatprep.subr.mxu0 %v225
  %2946 = vmatpush1.msra.mxu0 %v224
  %2947 = vmatprep.subr.mxu0 %v233
  %2948 = vmatpush1.msra.mxu0 %v232
  %2949 = vmatprep.subr.mxu0 %v241
  %2950 = vmatpush1.msra.mxu0 %v240
  %2951 = vmatprep.subr.mxu0 %v249
  %2952 = vmatpush1.msra.mxu0 %v248
  %2953 = vmatprep.subr.mxu0 %v257
  %2954 = vmatpush1.msra.mxu0 %v256
  %2955 = vmatprep.subr.mxu0 %v265
  %2956 = vmatpush1.msra.mxu0 %v264
  %2957 = vmatprep.subr.mxu0 %v273
  %2958 = vmatpush1.msra.mxu0 %v272
  %2959 = vmatprep.subr.mxu0 %v281
  %2960 = vmatpush1.msra.mxu0 %v280
  %2961 = vmatprep.subr.mxu0 %v289
  %2962 = vmatpush1.msra.mxu0 %v288
  %2963 = vmatprep.mubr.f32.mxu0 %v2875
  %2964 = vmatmul.mubr.f32.gmra.mrb[0].mxu0 %v2874
  %v2965 = vpop.f32.mrb[0].mxu0
  %v2966 = vadd.f32 0.0, %v2965
  %v2967 = vpop.f32.mrb[0].mxu0
  %v2968 = vadd.f32 0.0, %v2967
  %2969 = vdwg.mxu0
  %2970 = vmatprep.subr.mxu0 %v43
  %2971 = vmatpush1.msra.mxu0 %v42
  %2972 = vmatprep.subr.mxu0 %v51
  %2973 = vmatpush1.msra.mxu0 %v50
  %2974 = vmatprep.subr.mxu0 %v59
  %2975 = vmatpush1.msra.mxu0 %v58
  %2976 = vmatprep.subr.mxu0 %v67
  %2977 = vmatpush1.msra.mxu0 %v66
  %2978 = vmatprep.subr.mxu0 %v75
  %2979 = vmatpush1.msra.mxu0 %v74
  %2980 = vmatprep.subr.mxu0 %v83
  %2981 = vmatpush1.msra.mxu0 %v82
  %2982 = vmatprep.subr.mxu0 %v91
  %2983 = vmatpush1.msra.mxu0 %v90
  %2984 = vmatprep.subr.mxu0 %v99
  %2985 = vmatpush1.msra.mxu0 %v98
  %2986 = vmatprep.subr.mxu0 %v107
  %2987 = vmatpush1.msra.mxu0 %v106
  %2988 = vmatprep.subr.mxu0 %v115
  %2989 = vmatpush1.msra.mxu0 %v114
  %2990 = vmatprep.subr.mxu0 %v123
  %2991 = vmatpush1.msra.mxu0 %v122
  %2992 = vmatprep.subr.mxu0 %v131
  %2993 = vmatpush1.msra.mxu0 %v130
  %2994 = vmatprep.subr.mxu0 %v139
  %2995 = vmatpush1.msra.mxu0 %v138
  %2996 = vmatprep.subr.mxu0 %v147
  %2997 = vmatpush1.msra.mxu0 %v146
  %2998 = vmatprep.subr.mxu0 %v155
  %2999 = vmatpush1.msra.mxu0 %v154
  %3000 = vmatprep.subr.mxu0 %v163
  %3001 = vmatpush1.msra.mxu0 %v162
  %3002 = vmatprep.subr.mxu0 %v171
  %3003 = vmatpush1.msra.mxu0 %v170
  %3004 = vmatprep.subr.mxu0 %v179
  %3005 = vmatpush1.msra.mxu0 %v178
  %3006 = vmatprep.subr.mxu0 %v187
  %3007 = vmatpush1.msra.mxu0 %v186
  %3008 = vmatprep.subr.mxu0 %v195
  %3009 = vmatpush1.msra.mxu0 %v194
  %3010 = vmatprep.subr.mxu0 %v203
  %3011 = vmatpush1.msra.mxu0 %v202
  %3012 = vmatprep.subr.mxu0 %v211
  %3013 = vmatpush1.msra.mxu0 %v210
  %3014 = vmatprep.subr.mxu0 %v219
  %3015 = vmatpush1.msra.mxu0 %v218
  %3016 = vmatprep.subr.mxu0 %v227
  %3017 = vmatpush1.msra.mxu0 %v226
  %3018 = vmatprep.subr.mxu0 %v235
  %3019 = vmatpush1.msra.mxu0 %v234
  %3020 = vmatprep.subr.mxu0 %v243
  %3021 = vmatpush1.msra.mxu0 %v242
  %3022 = vmatprep.subr.mxu0 %v251
  %3023 = vmatpush1.msra.mxu0 %v250
  %3024 = vmatprep.subr.mxu0 %v259
  %3025 = vmatpush1.msra.mxu0 %v258
  %3026 = vmatprep.subr.mxu0 %v267
  %3027 = vmatpush1.msra.mxu0 %v266
  %3028 = vmatprep.subr.mxu0 %v275
  %3029 = vmatpush1.msra.mxu0 %v274
  %3030 = vmatprep.subr.mxu0 %v283
  %3031 = vmatpush1.msra.mxu0 %v282
  %3032 = vmatprep.subr.mxu0 %v291
  %3033 = vmatpush1.msra.mxu0 %v290
  %3034 = vmatprep.mubr.f32.mxu0 %v2875
  %3035 = vmatmul.mubr.f32.gmra.mrb[0].mxu0 %v2874
  %v3036 = vpop.f32.mrb[0].mxu0
  %v3037 = vadd.f32 0.0, %v3036
  %v3038 = vpop.f32.mrb[0].mxu0
  %v3039 = vadd.f32 0.0, %v3038
  %3040 = vdwg.mxu0
  %3041 = vmatprep.subr.mxu0 %v45
  %3042 = vmatpush1.msra.mxu0 %v44
  %3043 = vmatprep.subr.mxu0 %v53
  %3044 = vmatpush1.msra.mxu0 %v52
  %3045 = vmatprep.subr.mxu0 %v61
  %3046 = vmatpush1.msra.mxu0 %v60
  %3047 = vmatprep.subr.mxu0 %v69
  %3048 = vmatpush1.msra.mxu0 %v68
  %3049 = vmatprep.subr.mxu0 %v77
  %3050 = vmatpush1.msra.mxu0 %v76
  %3051 = vmatprep.subr.mxu0 %v85
  %3052 = vmatpush1.msra.mxu0 %v84
  %3053 = vmatprep.subr.mxu0 %v93
  %3054 = vmatpush1.msra.mxu0 %v92
  %3055 = vmatprep.subr.mxu0 %v101
  %3056 = vmatpush1.msra.mxu0 %v100
  %3057 = vmatprep.subr.mxu0 %v109
  %3058 = vmatpush1.msra.mxu0 %v108
  %3059 = vmatprep.subr.mxu0 %v117
  %3060 = vmatpush1.msra.mxu0 %v116
  %3061 = vmatprep.subr.mxu0 %v125
  %3062 = vmatpush1.msra.mxu0 %v124
  %3063 = vmatprep.subr.mxu0 %v133
  %3064 = vmatpush1.msra.mxu0 %v132
  %3065 = vmatprep.subr.mxu0 %v141
  %3066 = vmatpush1.msra.mxu0 %v140
  %3067 = vmatprep.subr.mxu0 %v149
  %3068 = vmatpush1.msra.mxu0 %v148
  %3069 = vmatprep.subr.mxu0 %v157
  %3070 = vmatpush1.msra.mxu0 %v156
  %3071 = vmatprep.subr.mxu0 %v165
  %3072 = vmatpush1.msra.mxu0 %v164
  %3073 = vmatprep.subr.mxu0 %v173
  %3074 = vmatpush1.msra.mxu0 %v172
  %3075 = vmatprep.subr.mxu0 %v181
  %3076 = vmatpush1.msra.mxu0 %v180
  %3077 = vmatprep.subr.mxu0 %v189
  %3078 = vmatpush1.msra.mxu0 %v188
  %3079 = vmatprep.subr.mxu0 %v197
  %3080 = vmatpush1.msra.mxu0 %v196
  %3081 = vmatprep.subr.mxu0 %v205
  %3082 = vmatpush1.msra.mxu0 %v204
  %3083 = vmatprep.subr.mxu0 %v213
  %3084 = vmatpush1.msra.mxu0 %v212
  %3085 = vmatprep.subr.mxu0 %v221
  %3086 = vmatpush1.msra.mxu0 %v220
  %3087 = vmatprep.subr.mxu0 %v229
  %3088 = vmatpush1.msra.mxu0 %v228
  %3089 = vmatprep.subr.mxu0 %v237
  %3090 = vmatpush1.msra.mxu0 %v236
  %3091 = vmatprep.subr.mxu0 %v245
  %3092 = vmatpush1.msra.mxu0 %v244
  %3093 = vmatprep.subr.mxu0 %v253
  %3094 = vmatpush1.msra.mxu0 %v252
  %3095 = vmatprep.subr.mxu0 %v261
  %3096 = vmatpush1.msra.mxu0 %v260
  %3097 = vmatprep.subr.mxu0 %v269
  %3098 = vmatpush1.msra.mxu0 %v268
  %3099 = vmatprep.subr.mxu0 %v277
  %3100 = vmatpush1.msra.mxu0 %v276
  %3101 = vmatprep.subr.mxu0 %v285
  %3102 = vmatpush1.msra.mxu0 %v284
  %3103 = vmatprep.subr.mxu0 %v293
  %3104 = vmatpush1.msra.mxu0 %v292
  %3105 = vmatprep.mubr.f32.mxu0 %v2875
  %3106 = vmatmul.mubr.f32.gmra.mrb[0].mxu0 %v2874
  %v3107 = vpop.f32.mrb[0].mxu0
  %v3108 = vadd.f32 0.0, %v3107
  %v3109 = vpop.f32.mrb[0].mxu0
  %v3110 = vadd.f32 0.0, %v3109
  %3111 = vdwg.mxu0
  %3112 = vmatprep.subr.mxu0 %v47
  %3113 = vmatpush1.msra.mxu0 %v46
  %3114 = vmatprep.subr.mxu0 %v55
  %3115 = vmatpush1.msra.mxu0 %v54
  %3116 = vmatprep.subr.mxu0 %v63
  %3117 = vmatpush1.msra.mxu0 %v62
  %3118 = vmatprep.subr.mxu0 %v71
  %3119 = vmatpush1.msra.mxu0 %v70
  %3120 = vmatprep.subr.mxu0 %v79
  %3121 = vmatpush1.msra.mxu0 %v78
  %3122 = vmatprep.subr.mxu0 %v87
  %3123 = vmatpush1.msra.mxu0 %v86
  %3124 = vmatprep.subr.mxu0 %v95
  %3125 = vmatpush1.msra.mxu0 %v94
  %3126 = vmatprep.subr.mxu0 %v103
  %3127 = vmatpush1.msra.mxu0 %v102
  %3128 = vmatprep.subr.mxu0 %v111
  %3129 = vmatpush1.msra.mxu0 %v110
  %3130 = vmatprep.subr.mxu0 %v119
  %3131 = vmatpush1.msra.mxu0 %v118
  %3132 = vmatprep.subr.mxu0 %v127
  %3133 = vmatpush1.msra.mxu0 %v126
  %3134 = vmatprep.subr.mxu0 %v135
  %3135 = vmatpush1.msra.mxu0 %v134
  %3136 = vmatprep.subr.mxu0 %v143
  %3137 = vmatpush1.msra.mxu0 %v142
  %3138 = vmatprep.subr.mxu0 %v151
  %3139 = vmatpush1.msra.mxu0 %v150
  %3140 = vmatprep.subr.mxu0 %v159
  %3141 = vmatpush1.msra.mxu0 %v158
  %3142 = vmatprep.subr.mxu0 %v167
  %3143 = vmatpush1.msra.mxu0 %v166
  %3144 = vmatprep.subr.mxu0 %v175
  %3145 = vmatpush1.msra.mxu0 %v174
  %3146 = vmatprep.subr.mxu0 %v183
  %3147 = vmatpush1.msra.mxu0 %v182
  %3148 = vmatprep.subr.mxu0 %v191
  %3149 = vmatpush1.msra.mxu0 %v190
  %3150 = vmatprep.subr.mxu0 %v199
  %3151 = vmatpush1.msra.mxu0 %v198
  %3152 = vmatprep.subr.mxu0 %v207
  %3153 = vmatpush1.msra.mxu0 %v206
  %3154 = vmatprep.subr.mxu0 %v215
  %3155 = vmatpush1.msra.mxu0 %v214
  %3156 = vmatprep.subr.mxu0 %v223
  %3157 = vmatpush1.msra.mxu0 %v222
  %3158 = vmatprep.subr.mxu0 %v231
  %3159 = vmatpush1.msra.mxu0 %v230
  %3160 = vmatprep.subr.mxu0 %v239
  %3161 = vmatpush1.msra.mxu0 %v238
  %3162 = vmatprep.subr.mxu0 %v247
  %3163 = vmatpush1.msra.mxu0 %v246
  %3164 = vmatprep.subr.mxu0 %v255
  %3165 = vmatpush1.msra.mxu0 %v254
  %3166 = vmatprep.subr.mxu0 %v263
  %3167 = vmatpush1.msra.mxu0 %v262
  %3168 = vmatprep.subr.mxu0 %v271
  %3169 = vmatpush1.msra.mxu0 %v270
  %3170 = vmatprep.subr.mxu0 %v279
  %3171 = vmatpush1.msra.mxu0 %v278
  %3172 = vmatprep.subr.mxu0 %v287
  %3173 = vmatpush1.msra.mxu0 %v286
  %3174 = vmatprep.subr.mxu0 %v295
  %3175 = vmatpush1.msra.mxu0 %v294
  %3176 = vmatprep.mubr.f32.mxu0 %v2875
  %3177 = vmatmul.mubr.f32.gmra.mrb[0].mxu0 %v2874
  %v3178 = vpop.f32.mrb[0].mxu0
  %v3179 = vadd.f32 0.0, %v3178
  %v3180 = vpop.f32.mrb[0].mxu0
  %v3181 = vadd.f32 0.0, %v3180
  %3182 = vdwg.mxu0
  %v3183 = vadd.f32 %v2891, %v2966
  %v3184 = vadd.f32 %v2892, %v2968
  %v3185 = vadd.f32 %v2893, %v3037
  %v3186 = vadd.f32 %v2894, %v3039
  %v3187 = vadd.f32 %v2895, %v3108
  %v3188 = vadd.f32 %v2896, %v3110
  %v3189 = vadd.f32 %v2897, %v3179
  %v3190 = vadd.f32 %v2898, %v3181
  %v3191 = vsub.f32 0.0, %v3183
  %v3192 = vsub.f32 0.0, %v3184
  %v3193 = vmul.f32 %v3191, 1.442695
  %v3194 = vpow.pop %v3193
  %v3195 = vmul.f32 %v3192, 1.442695
  %v3196 = vpow.pop %v3195
  %v3197 = vadd.f32 %v3194, 1.0
  %v3198 = vadd.f32 %v3196, 1.0
  %v3199 = vrcp.pop %v3197
  %v3200 = vrcp.pop %v3198
  %v3201 = vsub.f32 0.0, %v3185
  %v3202 = vsub.f32 0.0, %v3186
  %v3203 = vmul.f32 %v3201, 1.442695
  %v3204 = vpow.pop %v3203
  %v3205 = vmul.f32 %v3202, 1.442695
  %v3206 = vpow.pop %v3205
  %v3207 = vadd.f32 %v3204, 1.0
  %v3208 = vadd.f32 %v3206, 1.0
  %v3209 = vrcp.pop %v3207
  %v3210 = vrcp.pop %v3208
  %v3211 = vtanh.pop %v3187
  %v3212 = vtanh.pop %v3188
  %v3213 = vsub.f32 0.0, %v3189
  %v3214 = vsub.f32 0.0, %v3190
  %v3215 = vmul.f32 %v3213, 1.442695
  %v3216 = vpow.pop %v3215
  %v3217 = vmul.f32 %v3214, 1.442695
  %v3218 = vpow.pop %v3217
  %v3219 = vadd.f32 %v3216, 1.0
  %v3220 = vadd.f32 %v3218, 1.0
  %v3221 = vrcp.pop %v3219
  %v3222 = vrcp.pop %v3220
  %v3223 = vmul.f32 %v3209, %v2870
  %v3224 = vmul.f32 %v3210, %v2871
  %v3225 = vmul.f32 %v3199, %v3211
  %v3226 = vmul.f32 %v3200, %v3212
  %v3227 = vadd.f32 %v3223, %v3225
  %v3228 = vadd.f32 %v3224, %v3226
  %v3229 = vtanh.pop %v3227
  %v3230 = vtanh.pop %v3228
  %v3231 = vmul.f32 %v3221, %v3229
  %v3232 = vmul.f32 %v3222, %v3230
  %v3233 = vld [vmem:[%s4] sm:$0x3]
  %v3235 = vlaneseq
  %v3236 = vshrl.u32 %v3235, 7
  %v3237 = vsub.s32 0, %v3236
  %v3238 = vrot.slane %v3233, %v3237
  %v3239 = vlaneseq
  %v3240 = vshrl.u32 %v3239, 7
  %v3241 = vsub.s32 1, %v3240
  %v3242 = vrot.slane %v3233, %v3241
  %v3245 = vmul.f32 %v3231, %v3238
  %v3246 = vmul.f32 %v3232, %v3242
  %v3247 = vadd.f32 %v3245, %v3246
  %3248 = vadd.xlane.f32.xlu0 %v3247
  %v3249 = vpop.xlane.xlu0 %3248
  %v3250 = vld [vmem:[#allocation4] sm:$0x1]
  %v3252 = vlaneseq
  %v3253 = vshrl.u32 %v3252, 7
  %v3254 = vsub.s32 0, %v3253
  %v3255 = vrot.slane %v3250, %v3254
  %v3257 = vadd.f32 %v3249, %v3255
  %vm3258 = vcmask 7168
  %3259 = vst.msk [vmem:[%s6] sm:$0xff] %vm3258, %v3257
  // Predicated region
  $region26: #{net_forward.1} parent=0 // pred_check
    _
  $region27: #{net_forward.1} parent=0 // pred_check_branch
    %3261 = sbr.rel (0) target = $region29
  $region28: #{net_forward.1} parent=0 // pred_region
    _
  $region29: #{net_forward.1} parent=0 // pred_fallthru
    _
  // Predicated region
  $region30: #{net_forward.1} parent=0 // pred_check
    _
  $region31: #{net_forward.1} parent=0 // pred_check_branch
    %3263 = sbr.rel (0) target = $region33
  $region32: #{net_forward.1} parent=0 // pred_region
    _
  $region33: #{net_forward.1} parent=0 // pred_fallthru
    _
  %3264 = vsyncmov [#allocation3]
  %s3265 = vpop.sfrf %3264
  %p3266 = scmp.eq.s32.totalorder %s3265, 0
  %p3267 = pneg %p3266
  %3269 = shalt.err (%p3267)

</llo_original>
